<compile_context>
chip_gen: v7x
topology: tpu7x:2x2x1
jax: 0.10.0
libtpu: 0.0.40
codegen_flags: <defaults>
</compile_context>

<pallas_src>
import functools
import math

import jax
import jax.numpy as jnp
from jax.experimental import pallas as pl
from jax.experimental.pallas import tpu as pltpu


# ----------------------------- kernels ------------------------------------ #

def _make_attn_ln_kernel(nhead, has_mask):
    """Fused:  LayerNorm(x + OutProj(MHA(x + qpos, kv + kvpos)))  per batch."""

    def kernel(x_ref, qpos_ref, kv_ref, kvpos_ref,
               wq_ref, bq_ref, wkv_ref, bkv_ref,
               wo_ref, bo_ref, g_ref, b_ref, *rest):
        if has_mask:
            mask_ref, o_ref = rest
        else:
            (o_ref,) = rest

        E = x_ref.shape[-1]
        Dh = E // nhead

        x = x_ref[...].astype(jnp.float32)                      # (L, E)
        q_in = x + qpos_ref[...].astype(jnp.float32)            # with_pos_embed
        kv_in = kv_ref[...].astype(jnp.float32) + kvpos_ref[...].astype(jnp.float32)

        # In-projections (1/sqrt(Dh) scale is pre-folded into wq/bq).
        q = jnp.dot(q_in, wq_ref[...],
                    preferred_element_type=jnp.float32) + bq_ref[...]    # (L, E)
        kv = jnp.dot(kv_in, wkv_ref[...],
                     preferred_element_type=jnp.float32) + bkv_ref[...]  # (S, 2E)

        # Per-head attention, heads sliced on the lane axis (stays in VMEM).
        heads = []
        for h in range(nhead):
            qh = q[:, h * Dh:(h + 1) * Dh]                       # (L, Dh)
            kh = kv[:, h * Dh:(h + 1) * Dh]                      # (S, Dh)
            vh = kv[:, E + h * Dh:E + (h + 1) * Dh]              # (S, Dh)
            s = jax.lax.dot_general(qh, kh, (((1,), (1,)), ((), ())),
                                    preferred_element_type=jnp.float32)  # (L, S)
            if has_mask:
                s = s + mask_ref[...]
            m = jnp.max(s, axis=-1, keepdims=True)
            m = jnp.maximum(m, -1e30)                            # fully-masked-row guard
            p = jnp.exp(s - m)
            l = jnp.sum(p, axis=-1, keepdims=True)
            oh = jnp.dot(p, vh, preferred_element_type=jnp.float32)
            heads.append(oh / jnp.maximum(l, 1e-30))             # fold 1/l after PV
        attn = jnp.concatenate(heads, axis=-1)                   # (L, E)

        # Out-projection + residual + LayerNorm (eps = 1e-5).
        attn = jnp.dot(attn, wo_ref[...],
                       preferred_element_type=jnp.float32) + bo_ref[...]
        y = x + attn
        mean = jnp.mean(y, axis=-1, keepdims=True)
        c = y - mean
        var = jnp.mean(c * c, axis=-1, keepdims=True)
        o_ref[...] = (c * jax.lax.rsqrt(var + 1e-5) * g_ref[...]
                      + b_ref[...]).astype(o_ref.dtype)

    return kernel


def _ffn_ln_kernel(x_ref, w1t_ref, b1_ref, w2t_ref, b2_ref, g_ref, b_ref, o_ref):
    """Fused:  LayerNorm(x + Linear2(ReLU(Linear1(x))))."""
    x = x_ref[...].astype(jnp.float32)
    h = jnp.dot(x, w1t_ref[...], preferred_element_type=jnp.float32) + b1_ref[...]
    h = jnp.maximum(h, 0.0)                                       # ReLU
    f = jnp.dot(h, w2t_ref[...], preferred_element_type=jnp.float32) + b2_ref[...]
    y = x + f
    mean = jnp.mean(y, axis=-1, keepdims=True)
    c = y - mean
    var = jnp.mean(c * c, axis=-1, keepdims=True)
    o_ref[...] = (c * jax.lax.rsqrt(var + 1e-5) * g_ref[...]
                  + b_ref[...]).astype(o_ref.dtype)


# --------------------------- pallas wrappers ------------------------------- #

def _attn_block(x, qpos, kvsrc, kvpos, wq_t, bq, wkv_t, bkv, wo_t, bo, g, b,
                nhead, mask=None):
    """x/qpos: (B, L, E); kvsrc/kvpos: (B, S, E) -> (B, L, E)."""
    B, L, E = x.shape
    S = kvsrc.shape[1]
    has_mask = mask is not None
    kernel = _make_attn_ln_kernel(nhead, has_mask)

    in_specs = [
        pl.BlockSpec((None, L, E), lambda i: (i, 0, 0)),   # x (residual / q source)
        pl.BlockSpec((None, L, E), lambda i: (i, 0, 0)),   # qpos
        pl.BlockSpec((None, S, E), lambda i: (i, 0, 0)),   # kv source
        pl.BlockSpec((None, S, E), lambda i: (i, 0, 0)),   # kv pos
        pl.BlockSpec((E, E), lambda i: (0, 0)),            # wq_t  (scale folded in)
        pl.BlockSpec((1, E), lambda i: (0, 0)),            # bq
        pl.BlockSpec((E, 2 * E), lambda i: (0, 0)),        # wkv_t
        pl.BlockSpec((1, 2 * E), lambda i: (0, 0)),        # bkv
        pl.BlockSpec((E, E), lambda i: (0, 0)),            # wo_t
        pl.BlockSpec((1, E), lambda i: (0, 0)),            # bo
        pl.BlockSpec((1, E), lambda i: (0, 0)),            # ln gamma
        pl.BlockSpec((1, E), lambda i: (0, 0)),            # ln beta
    ]
    args = [x, qpos, kvsrc, kvpos, wq_t, bq, wkv_t, bkv, wo_t, bo, g, b]
    if has_mask:
        in_specs.append(pl.BlockSpec((L, S), lambda i: (0, 0)))
        args.append(mask.astype(jnp.float32))

    return pl.pallas_call(
        kernel,
        out_shape=jax.ShapeDtypeStruct((B, L, E), jnp.float32),
        grid_spec=pltpu.PrefetchScalarGridSpec(
            num_scalar_prefetch=0,
            grid=(B,),
            in_specs=in_specs,
            out_specs=pl.BlockSpec((None, L, E), lambda i: (i, 0, 0)),
        ),
        compiler_params=pltpu.CompilerParams(
            dimension_semantics=("parallel",)),
    )(*args)


def _pick_m_tile(M):
    # Prefer >=2 blocks (v7x has 2 TensorCores) with a sublane-aligned tile.
    for tm in (512, 256, 128):
        if M % tm == 0 and M // tm >= 2:
            return tm
    if M % 16 == 0:
        return M // 2
    return M


def _ffn_block(x2d, w1t, b1, w2t, b2, g, b):
    M, E = x2d.shape
    F = w1t.shape[1]
    tm = _pick_m_tile(M)
    return pl.pallas_call(
        _ffn_ln_kernel,
        out_shape=jax.ShapeDtypeStruct((M, E), jnp.float32),
        grid_spec=pltpu.PrefetchScalarGridSpec(
            num_scalar_prefetch=0,
            grid=(M // tm,),
            in_specs=[
                pl.BlockSpec((tm, E), lambda i: (i, 0)),
                pl.BlockSpec((E, F), lambda i: (0, 0)),
                pl.BlockSpec((1, F), lambda i: (0, 0)),
                pl.BlockSpec((F, E), lambda i: (0, 0)),
                pl.BlockSpec((1, E), lambda i: (0, 0)),
                pl.BlockSpec((1, E), lambda i: (0, 0)),
                pl.BlockSpec((1, E), lambda i: (0, 0)),
            ],
            out_specs=pl.BlockSpec((tm, E), lambda i: (i, 0)),
        ),
        compiler_params=pltpu.CompilerParams(
            dimension_semantics=("parallel",)),
    )(x2d, w1t, b1, w2t, b2, g, b)


# --------------------------- one-time param prep ---------------------------- #

def prepare_params(p, d_model, nhead):
    """Hoist transposes / reshapes / the 1/sqrt(Dh) Q scaling out of the forward."""
    E = d_model
    scale = 1.0 / math.sqrt(E // nhead)
    return dict(
        sa_wq_t=(p['sa_in_w'][:E] * scale).T,
        sa_bq=(p['sa_in_b'][:E] * scale).reshape(1, E),
        sa_wkv_t=p['sa_in_w'][E:].T,
        sa_bkv=p['sa_in_b'][E:].reshape(1, 2 * E),
        sa_wo_t=p['sa_out_w'].T,
        sa_bo=p['sa_out_b'].reshape(1, E),
        ca_wq_t=(p['ca_in_w'][:E] * scale).T,
        ca_bq=(p['ca_in_b'][:E] * scale).reshape(1, E),
        ca_wkv_t=p['ca_in_w'][E:].T,
        ca_bkv=p['ca_in_b'][E:].reshape(1, 2 * E),
        ca_wo_t=p['ca_out_w'].T,
        ca_bo=p['ca_out_b'].reshape(1, E),
        w1_t=p['w1'].T, b1=p['b1'].reshape(1, -1),
        w2_t=p['w2'].T, b2=p['b2'].reshape(1, -1),
        ln1_g=p['ln1_g'].reshape(1, E), ln1_b=p['ln1_b'].reshape(1, E),
        ln2_g=p['ln2_g'].reshape(1, E), ln2_b=p['ln2_b'].reshape(1, E),
        ln3_g=p['ln3_g'].reshape(1, E), ln3_b=p['ln3_b'].reshape(1, E),
    )


# ------------------------- decoder layer forward --------------------------- #

def transformer_decoder_layer(query, key, query_pos, key_pos, prepped, nhead,
                              attn_mask=None):
    """Pallas forward of TransformerDecoderLayer (cross_only=False, eval mode).

    query/query_pos: (L, B, E); key/key_pos: (S, B, E).  Returns (B, E, L).
    """
    L, B, E = query.shape
    p = prepped

    # Batch-first, feature dim on lanes; this transpose + the final permute are
    # the only XLA-side layout ops.
    qb = jnp.transpose(query, (1, 0, 2)).astype(jnp.float32)       # (B, L, E)
    qpb = jnp.transpose(query_pos, (1, 0, 2)).astype(jnp.float32)
    kb = jnp.transpose(key, (1, 0, 2)).astype(jnp.float32)         # (B, S, E)
    kpb = jnp.transpose(key_pos, (1, 0, 2)).astype(jnp.float32)

    # Self-attention block (in-proj + MHA + out-proj + residual + LN, fused).
    x = _attn_block(qb, qpb, qb, qpb,
                    p['sa_wq_t'], p['sa_bq'], p['sa_wkv_t'], p['sa_bkv'],
                    p['sa_wo_t'], p['sa_bo'], p['ln1_g'], p['ln1_b'],
                    nhead=nhead, mask=None)

    # Cross-attention block.
    x = _attn_block(x, qpb, kb, kpb,
                    p['ca_wq_t'], p['ca_bq'], p['ca_wkv_t'], p['ca_bkv'],
                    p['ca_wo_t'], p['ca_bo'], p['ln2_g'], p['ln2_b'],
                    nhead=nhead, mask=attn_mask)

    # FFN block (linear1 + ReLU + linear2 + residual + LN, fused).
    x2d = x.reshape(B * L, E)
    x2d = _ffn_block(x2d, p['w1_t'], p['b1'], p['w2_t'], p['b2'],
                     p['ln3_g'], p['ln3_b'])

    return jnp.transpose(x2d.reshape(B, L, E), (0, 2, 1))          # (B, E, L)


# ------------------------------ parameters --------------------------------- #

def init_params(key, d_model, nhead, dim_feedforward):
    E, F = d_model, dim_feedforward
    ks = jax.random.split(key, 18)

    def w(k, shape, fan_in):
        return jax.random.normal(k, shape, jnp.float32) / math.sqrt(fan_in)

    return dict(
        sa_in_w=w(ks[0], (3 * E, E), E),
        sa_in_b=0.02 * jax.random.normal(ks[1], (3 * E,), jnp.float32),
        sa_out_w=w(ks[2], (E, E), E),
        sa_out_b=0.02 * jax.random.normal(ks[3], (E,), jnp.float32),
        ca_in_w=w(ks[4], (3 * E, E), E),
        ca_in_b=0.02 * jax.random.normal(ks[5], (3 * E,), jnp.float32),
        ca_out_w=w(ks[6], (E, E), E),
        ca_out_b=0.02 * jax.random.normal(ks[7], (E,), jnp.float32),
        w1=w(ks[8], (F, E), E),
        b1=0.02 * jax.random.normal(ks[9], (F,), jnp.float32),
        w2=w(ks[10], (E, F), F),
        b2=0.02 * jax.random.normal(ks[11], (E,), jnp.float32),
        ln1_g=1.0 + 0.1 * jax.random.normal(ks[12], (E,), jnp.float32),
        ln1_b=0.05 * jax.random.normal(ks[13], (E,), jnp.float32),
        ln2_g=1.0 + 0.1 * jax.random.normal(ks[14], (E,), jnp.float32),
        ln2_b=0.05 * jax.random.normal(ks[15], (E,), jnp.float32),
        ln3_g=1.0 + 0.1 * jax.random.normal(ks[16], (E,), jnp.float32),
        ln3_b=0.05 * jax.random.normal(ks[17], (E,), jnp.float32),
    )


# --------------------------- pure-JAX reference ----------------------------- #

_HI = jax.lax.Precision.HIGHEST


def _ref_layernorm(x, g, b):
    mean = jnp.mean(x, axis=-1, keepdims=True)
    var = jnp.mean(jnp.square(x - mean), axis=-1, keepdims=True)
    return (x - mean) / jnp.sqrt(var + 1e-5) * g + b


def _ref_mha(q_x, k_x, v_x, in_w, in_b, out_w, out_b, H, attn_mask):
    L, B, E = q_x.shape
    S = k_x.shape[0]
    Dh = E // H
    q = jnp.einsum('lbe,fe->lbf', q_x, in_w[:E], precision=_HI) + in_b[:E]
    k = jnp.einsum('sbe,fe->sbf', k_x, in_w[E:2 * E], precision=_HI) + in_b[E:2 * E]
    v = jnp.einsum('sbe,fe->sbf', v_x, in_w[2 * E:], precision=_HI) + in_b[2 * E:]
    q = q * (Dh ** -0.5)
    qh = q.reshape(L, B * H, Dh).transpose(1, 0, 2)
    kh = k.reshape(S, B * H, Dh).transpose(1, 0, 2)
    vh = v.reshape(S, B * H, Dh).transpose(1, 0, 2)
    s = jnp.einsum('bld,bsd->bls', qh, kh, precision=_HI)
    if attn_mask is not None:
        s = s + attn_mask[None]
    wgt = jax.nn.softmax(s, axis=-1)
    o = jnp.einsum('bls,bsd->bld', wgt, vh, precision=_HI)
    o = o.transpose(1, 0, 2).reshape(L, B, E)
    return jnp.einsum('lbe,fe->lbf', o, out_w, precision=_HI) + out_b


def _reference(query, key, query_pos, key_pos, p, nhead, attn_mask=None):
    x = query
    qin = x + query_pos
    sa = _ref_mha(qin, qin, qin, p['sa_in_w'], p['sa_in_b'],
                  p['sa_out_w'], p['sa_out_b'], nhead, None)
    x = _ref_layernorm(x + sa, p['ln1_g'], p['ln1_b'])
    qin = x + query_pos
    kin = key + key_pos
    ca = _ref_mha(qin, kin, kin, p['ca_in_w'], p['ca_in_b'],
                  p['ca_out_w'], p['ca_out_b'], nhead, attn_mask)
    x = _ref_layernorm(x + ca, p['ln2_g'], p['ln2_b'])
    h = jnp.maximum(
        jnp.einsum('lbe,fe->lbf', x, p['w1'], precision=_HI) + p['b1'], 0.0)
    ffn = jnp.einsum('lbf,ef->lbe', h, p['w2'], precision=_HI) + p['b2']
    x = _ref_layernorm(x + ffn, p['ln3_g'], p['ln3_b'])
    return x.transpose(1, 2, 0)


# --------------------------------- main ------------------------------------ #

if __name__ == "__main__":
    d_model, nhead, dim_ff = 32, 4, 64
    L, S, B = 8, 16, 2            # target len, source len, batch

    root = jax.random.PRNGKey(0)
    kq, kk, kqp, kkp, kp = jax.random.split(root, 5)
    query = jax.random.normal(kq, (L, B, d_model), jnp.float32)
    key = jax.random.normal(kk, (S, B, d_model), jnp.float32)
    query_pos = jax.random.normal(kqp, (L, B, d_model), jnp.float32)
    key_pos = jax.random.normal(kkp, (S, B, d_model), jnp.float32)
    params = init_params(kp, d_model, nhead, dim_ff)

    # One-time param prep (transposes, bias reshapes, Q-scale folding).
    prepped = jax.tree_util.tree_map(
        jax.block_until_ready, prepare_params(params, d_model, nhead))

    fwd = jax.jit(transformer_decoder_layer, static_argnums=(5,))
    out = fwd(query, key, query_pos, key_pos, prepped, nhead)
    out = jax.block_until_ready(out)

    ref = _reference(query, key, query_pos, key_pos, params, nhead)
    assert out.shape == (B, d_model, L), out.shape
    max_err = float(jnp.max(jnp.abs(out - ref)))
    assert jnp.allclose(out, ref, atol=5e-4, rtol=5e-4), f"max |err| = {max_err}"

    print("KERNEL_OK")
</pallas_src>

<mosaic_0001>
module attributes {stable_mosaic.version = 11 : i64} {
  func.func @kernel(%arg0: i32, %arg1: memref<1x8x32xf32, #tpu.memory_space<vmem>>, %arg2: memref<1x8x32xf32, #tpu.memory_space<vmem>>, %arg3: memref<1x8x32xf32, #tpu.memory_space<vmem>>, %arg4: memref<1x8x32xf32, #tpu.memory_space<vmem>>, %arg5: memref<32x32xf32, #tpu.memory_space<vmem>>, %arg6: memref<1x32xf32, #tpu.memory_space<vmem>>, %arg7: memref<32x64xf32, #tpu.memory_space<vmem>>, %arg8: memref<1x64xf32, #tpu.memory_space<vmem>>, %arg9: memref<32x32xf32, #tpu.memory_space<vmem>>, %arg10: memref<1x32xf32, #tpu.memory_space<vmem>>, %arg11: memref<1x32xf32, #tpu.memory_space<vmem>>, %arg12: memref<1x32xf32, #tpu.memory_space<vmem>>, %arg13: memref<1x8x32xf32, #tpu.memory_space<vmem>>) attributes {dimension_semantics = [#tpu.dimension_semantics<parallel>], iteration_bounds = array<i64: 2>, scalar_prefetch = 0 : i64, scratch_operands = 0 : i64, tpu.core_type = #tpu.core_type<tc>, window_params = [{transform_indices = @transform_0, window_bounds = array<i64: 1, 8, 32>}, {transform_indices = @transform_1, window_bounds = array<i64: 1, 8, 32>}, {transform_indices = @transform_2, window_bounds = array<i64: 1, 8, 32>}, {transform_indices = @transform_3, window_bounds = array<i64: 1, 8, 32>}, {pipeline_mode = #tpu.pipeline_mode<synchronous>, transform_indices = @transform_4, window_bounds = array<i64: 32, 32>}, {pipeline_mode = #tpu.pipeline_mode<synchronous>, transform_indices = @transform_5, window_bounds = array<i64: 1, 32>}, {pipeline_mode = #tpu.pipeline_mode<synchronous>, transform_indices = @transform_6, window_bounds = array<i64: 32, 64>}, {pipeline_mode = #tpu.pipeline_mode<synchronous>, transform_indices = @transform_7, window_bounds = array<i64: 1, 64>}, {pipeline_mode = #tpu.pipeline_mode<synchronous>, transform_indices = @transform_8, window_bounds = array<i64: 32, 32>}, {pipeline_mode = #tpu.pipeline_mode<synchronous>, transform_indices = @transform_9, window_bounds = array<i64: 1, 32>}, {pipeline_mode = #tpu.pipeline_mode<synchronous>, transform_indices = @transform_10, window_bounds = array<i64: 1, 32>}, {pipeline_mode = #tpu.pipeline_mode<synchronous>, transform_indices = @transform_11, window_bounds = array<i64: 1, 32>}, {transform_indices = @transform_12, window_bounds = array<i64: 1, 8, 32>}]} {
    %c0 = arith.constant 0 : index
    %c0_0 = arith.constant 0 : index
    %c0_1 = arith.constant 0 : index
    %0 = vector.load %arg1[%c0, %c0_0, %c0_1] : memref<1x8x32xf32, #tpu.memory_space<vmem>>, vector<1x8x32xf32>
    %1 = vector.shape_cast %0 : vector<1x8x32xf32> to vector<8x32xf32>
    %c0_2 = arith.constant 0 : index
    %c0_3 = arith.constant 0 : index
    %c0_4 = arith.constant 0 : index
    %2 = vector.load %arg2[%c0_2, %c0_3, %c0_4] : memref<1x8x32xf32, #tpu.memory_space<vmem>>, vector<1x8x32xf32>
    %3 = vector.shape_cast %2 : vector<1x8x32xf32> to vector<8x32xf32>
    %4 = arith.addf %1, %3 : vector<8x32xf32>
    %c0_5 = arith.constant 0 : index
    %c0_6 = arith.constant 0 : index
    %c0_7 = arith.constant 0 : index
    %5 = vector.load %arg3[%c0_5, %c0_6, %c0_7] : memref<1x8x32xf32, #tpu.memory_space<vmem>>, vector<1x8x32xf32>
    %6 = vector.shape_cast %5 : vector<1x8x32xf32> to vector<8x32xf32>
    %c0_8 = arith.constant 0 : index
    %c0_9 = arith.constant 0 : index
    %c0_10 = arith.constant 0 : index
    %7 = vector.load %arg4[%c0_8, %c0_9, %c0_10] : memref<1x8x32xf32, #tpu.memory_space<vmem>>, vector<1x8x32xf32>
    %8 = vector.shape_cast %7 : vector<1x8x32xf32> to vector<8x32xf32>
    %9 = arith.addf %6, %8 : vector<8x32xf32>
    %c0_11 = arith.constant 0 : index
    %c0_12 = arith.constant 0 : index
    %10 = vector.load %arg5[%c0_11, %c0_12] : memref<32x32xf32, #tpu.memory_space<vmem>>, vector<32x32xf32>
    %cst = arith.constant dense<0.000000e+00> : vector<8x32xf32>
    %11 = tpu.matmul %4, %10, %cst {dimension_numbers = #tpu.dot_dimension_numbers<[1], [0], [0], [1], [0, 0, 1, 1], [], []>} : vector<8x32xf32>, vector<32x32xf32>, vector<8x32xf32> -> vector<8x32xf32>
    %c0_13 = arith.constant 0 : index
    %c0_14 = arith.constant 0 : index
    %12 = vector.load %arg6[%c0_13, %c0_14] : memref<1x32xf32, #tpu.memory_space<vmem>>, vector<1x32xf32>
    %13 = vector.broadcast %12 : vector<1x32xf32> to vector<8x32xf32>
    %14 = arith.addf %11, %13 : vector<8x32xf32>
    %c0_15 = arith.constant 0 : index
    %c0_16 = arith.constant 0 : index
    %15 = vector.load %arg7[%c0_15, %c0_16] : memref<32x64xf32, #tpu.memory_space<vmem>>, vector<32x64xf32>
    %cst_17 = arith.constant dense<0.000000e+00> : vector<8x64xf32>
    %16 = tpu.matmul %9, %15, %cst_17 {dimension_numbers = #tpu.dot_dimension_numbers<[1], [0], [0], [1], [0, 0, 1, 1], [], []>} : vector<8x32xf32>, vector<32x64xf32>, vector<8x64xf32> -> vector<8x64xf32>
    %c0_18 = arith.constant 0 : index
    %c0_19 = arith.constant 0 : index
    %17 = vector.load %arg8[%c0_18, %c0_19] : memref<1x64xf32, #tpu.memory_space<vmem>>, vector<1x64xf32>
    %18 = vector.broadcast %17 : vector<1x64xf32> to vector<8x64xf32>
    %19 = arith.addf %16, %18 : vector<8x64xf32>
    %20 = vector.extract_strided_slice %14 {offsets = [0, 0], sizes = [8, 8], strides = [1, 1]} : vector<8x32xf32> to vector<8x8xf32>
    %21 = vector.extract_strided_slice %19 {offsets = [0, 0], sizes = [8, 8], strides = [1, 1]} : vector<8x64xf32> to vector<8x8xf32>
    %22 = vector.extract_strided_slice %19 {offsets = [0, 32], sizes = [8, 8], strides = [1, 1]} : vector<8x64xf32> to vector<8x8xf32>
    %cst_20 = arith.constant dense<0.000000e+00> : vector<8x8xf32>
    %23 = tpu.matmul %20, %21, %cst_20 {dimension_numbers = #tpu.dot_dimension_numbers<[1], [1], [0], [0], [0, 0, 1, 0], [], []>} : vector<8x8xf32>, vector<8x8xf32>, vector<8x8xf32> -> vector<8x8xf32>
    %cst_21 = arith.constant dense<0xFF800000> : vector<8xf32>
    %24 = vector.multi_reduction <maximumf>, %23, %cst_21 [1] : vector<8x8xf32> to vector<8xf32>
    %25 = vector.shape_cast %24 : vector<8xf32> to vector<8x1xf32>
    %cst_22 = arith.constant -1.000000e+30 : f32
    %26 = vector.broadcast %cst_22 : f32 to vector<8x1xf32>
    %27 = arith.maximumf %25, %26 : vector<8x1xf32>
    %28 = vector.broadcast %27 : vector<8x1xf32> to vector<8x8xf32>
    %29 = arith.subf %23, %28 : vector<8x8xf32>
    %30 = math.exp %29 : vector<8x8xf32>
    %cst_23 = arith.constant dense<0.000000e+00> : vector<8xf32>
    %31 = vector.multi_reduction <add>, %30, %cst_23 [1] : vector<8x8xf32> to vector<8xf32>
    %32 = vector.shape_cast %31 : vector<8xf32> to vector<8x1xf32>
    %cst_24 = arith.constant dense<0.000000e+00> : vector<8x8xf32>
    %33 = tpu.matmul %30, %22, %cst_24 {dimension_numbers = #tpu.dot_dimension_numbers<[1], [0], [0], [1], [0, 0, 1, 1], [], []>} : vector<8x8xf32>, vector<8x8xf32>, vector<8x8xf32> -> vector<8x8xf32>
    %cst_25 = arith.constant 1.000000e-30 : f32
    %34 = vector.broadcast %cst_25 : f32 to vector<8x1xf32>
    %35 = arith.maximumf %32, %34 : vector<8x1xf32>
    %36 = vector.broadcast %35 : vector<8x1xf32> to vector<8x8xf32>
    %37 = arith.divf %33, %36 : vector<8x8xf32>
    %38 = vector.extract_strided_slice %14 {offsets = [0, 8], sizes = [8, 8], strides = [1, 1]} : vector<8x32xf32> to vector<8x8xf32>
    %39 = vector.extract_strided_slice %19 {offsets = [0, 8], sizes = [8, 8], strides = [1, 1]} : vector<8x64xf32> to vector<8x8xf32>
    %40 = vector.extract_strided_slice %19 {offsets = [0, 40], sizes = [8, 8], strides = [1, 1]} : vector<8x64xf32> to vector<8x8xf32>
    %cst_26 = arith.constant dense<0.000000e+00> : vector<8x8xf32>
    %41 = tpu.matmul %38, %39, %cst_26 {dimension_numbers = #tpu.dot_dimension_numbers<[1], [1], [0], [0], [0, 0, 1, 0], [], []>} : vector<8x8xf32>, vector<8x8xf32>, vector<8x8xf32> -> vector<8x8xf32>
    %cst_27 = arith.constant dense<0xFF800000> : vector<8xf32>
    %42 = vector.multi_reduction <maximumf>, %41, %cst_27 [1] : vector<8x8xf32> to vector<8xf32>
    %43 = vector.shape_cast %42 : vector<8xf32> to vector<8x1xf32>
    %cst_28 = arith.constant -1.000000e+30 : f32
    %44 = vector.broadcast %cst_28 : f32 to vector<8x1xf32>
    %45 = arith.maximumf %43, %44 : vector<8x1xf32>
    %46 = vector.broadcast %45 : vector<8x1xf32> to vector<8x8xf32>
    %47 = arith.subf %41, %46 : vector<8x8xf32>
    %48 = math.exp %47 : vector<8x8xf32>
    %cst_29 = arith.constant dense<0.000000e+00> : vector<8xf32>
    %49 = vector.multi_reduction <add>, %48, %cst_29 [1] : vector<8x8xf32> to vector<8xf32>
    %50 = vector.shape_cast %49 : vector<8xf32> to vector<8x1xf32>
    %cst_30 = arith.constant dense<0.000000e+00> : vector<8x8xf32>
    %51 = tpu.matmul %48, %40, %cst_30 {dimension_numbers = #tpu.dot_dimension_numbers<[1], [0], [0], [1], [0, 0, 1, 1], [], []>} : vector<8x8xf32>, vector<8x8xf32>, vector<8x8xf32> -> vector<8x8xf32>
    %cst_31 = arith.constant 1.000000e-30 : f32
    %52 = vector.broadcast %cst_31 : f32 to vector<8x1xf32>
    %53 = arith.maximumf %50, %52 : vector<8x1xf32>
    %54 = vector.broadcast %53 : vector<8x1xf32> to vector<8x8xf32>
    %55 = arith.divf %51, %54 : vector<8x8xf32>
    %56 = vector.extract_strided_slice %14 {offsets = [0, 16], sizes = [8, 8], strides = [1, 1]} : vector<8x32xf32> to vector<8x8xf32>
    %57 = vector.extract_strided_slice %19 {offsets = [0, 16], sizes = [8, 8], strides = [1, 1]} : vector<8x64xf32> to vector<8x8xf32>
    %58 = vector.extract_strided_slice %19 {offsets = [0, 48], sizes = [8, 8], strides = [1, 1]} : vector<8x64xf32> to vector<8x8xf32>
    %cst_32 = arith.constant dense<0.000000e+00> : vector<8x8xf32>
    %59 = tpu.matmul %56, %57, %cst_32 {dimension_numbers = #tpu.dot_dimension_numbers<[1], [1], [0], [0], [0, 0, 1, 0], [], []>} : vector<8x8xf32>, vector<8x8xf32>, vector<8x8xf32> -> vector<8x8xf32>
    %cst_33 = arith.constant dense<0xFF800000> : vector<8xf32>
    %60 = vector.multi_reduction <maximumf>, %59, %cst_33 [1] : vector<8x8xf32> to vector<8xf32>
    %61 = vector.shape_cast %60 : vector<8xf32> to vector<8x1xf32>
    %cst_34 = arith.constant -1.000000e+30 : f32
    %62 = vector.broadcast %cst_34 : f32 to vector<8x1xf32>
    %63 = arith.maximumf %61, %62 : vector<8x1xf32>
    %64 = vector.broadcast %63 : vector<8x1xf32> to vector<8x8xf32>
    %65 = arith.subf %59, %64 : vector<8x8xf32>
    %66 = math.exp %65 : vector<8x8xf32>
    %cst_35 = arith.constant dense<0.000000e+00> : vector<8xf32>
    %67 = vector.multi_reduction <add>, %66, %cst_35 [1] : vector<8x8xf32> to vector<8xf32>
    %68 = vector.shape_cast %67 : vector<8xf32> to vector<8x1xf32>
    %cst_36 = arith.constant dense<0.000000e+00> : vector<8x8xf32>
    %69 = tpu.matmul %66, %58, %cst_36 {dimension_numbers = #tpu.dot_dimension_numbers<[1], [0], [0], [1], [0, 0, 1, 1], [], []>} : vector<8x8xf32>, vector<8x8xf32>, vector<8x8xf32> -> vector<8x8xf32>
    %cst_37 = arith.constant 1.000000e-30 : f32
    %70 = vector.broadcast %cst_37 : f32 to vector<8x1xf32>
    %71 = arith.maximumf %68, %70 : vector<8x1xf32>
    %72 = vector.broadcast %71 : vector<8x1xf32> to vector<8x8xf32>
    %73 = arith.divf %69, %72 : vector<8x8xf32>
    %74 = vector.extract_strided_slice %14 {offsets = [0, 24], sizes = [8, 8], strides = [1, 1]} : vector<8x32xf32> to vector<8x8xf32>
    %75 = vector.extract_strided_slice %19 {offsets = [0, 24], sizes = [8, 8], strides = [1, 1]} : vector<8x64xf32> to vector<8x8xf32>
    %76 = vector.extract_strided_slice %19 {offsets = [0, 56], sizes = [8, 8], strides = [1, 1]} : vector<8x64xf32> to vector<8x8xf32>
    %cst_38 = arith.constant dense<0.000000e+00> : vector<8x8xf32>
    %77 = tpu.matmul %74, %75, %cst_38 {dimension_numbers = #tpu.dot_dimension_numbers<[1], [1], [0], [0], [0, 0, 1, 0], [], []>} : vector<8x8xf32>, vector<8x8xf32>, vector<8x8xf32> -> vector<8x8xf32>
    %cst_39 = arith.constant dense<0xFF800000> : vector<8xf32>
    %78 = vector.multi_reduction <maximumf>, %77, %cst_39 [1] : vector<8x8xf32> to vector<8xf32>
    %79 = vector.shape_cast %78 : vector<8xf32> to vector<8x1xf32>
    %cst_40 = arith.constant -1.000000e+30 : f32
    %80 = vector.broadcast %cst_40 : f32 to vector<8x1xf32>
    %81 = arith.maximumf %79, %80 : vector<8x1xf32>
    %82 = vector.broadcast %81 : vector<8x1xf32> to vector<8x8xf32>
    %83 = arith.subf %77, %82 : vector<8x8xf32>
    %84 = math.exp %83 : vector<8x8xf32>
    %cst_41 = arith.constant dense<0.000000e+00> : vector<8xf32>
    %85 = vector.multi_reduction <add>, %84, %cst_41 [1] : vector<8x8xf32> to vector<8xf32>
    %86 = vector.shape_cast %85 : vector<8xf32> to vector<8x1xf32>
    %cst_42 = arith.constant dense<0.000000e+00> : vector<8x8xf32>
    %87 = tpu.matmul %84, %76, %cst_42 {dimension_numbers = #tpu.dot_dimension_numbers<[1], [0], [0], [1], [0, 0, 1, 1], [], []>} : vector<8x8xf32>, vector<8x8xf32>, vector<8x8xf32> -> vector<8x8xf32>
    %cst_43 = arith.constant 1.000000e-30 : f32
    %88 = vector.broadcast %cst_43 : f32 to vector<8x1xf32>
    %89 = arith.maximumf %86, %88 : vector<8x1xf32>
    %90 = vector.broadcast %89 : vector<8x1xf32> to vector<8x8xf32>
    %91 = arith.divf %87, %90 : vector<8x8xf32>
    %92 = tpu.concatenate %37, %55, %73, %91 in 1 : vector<8x8xf32>, vector<8x8xf32>, vector<8x8xf32>, vector<8x8xf32> -> vector<8x32xf32>
    %c0_44 = arith.constant 0 : index
    %c0_45 = arith.constant 0 : index
    %93 = vector.load %arg9[%c0_44, %c0_45] : memref<32x32xf32, #tpu.memory_space<vmem>>, vector<32x32xf32>
    %cst_46 = arith.constant dense<0.000000e+00> : vector<8x32xf32>
    %94 = tpu.matmul %92, %93, %cst_46 {dimension_numbers = #tpu.dot_dimension_numbers<[1], [0], [0], [1], [0, 0, 1, 1], [], []>} : vector<8x32xf32>, vector<32x32xf32>, vector<8x32xf32> -> vector<8x32xf32>
    %c0_47 = arith.constant 0 : index
    %c0_48 = arith.constant 0 : index
    %95 = vector.load %arg10[%c0_47, %c0_48] : memref<1x32xf32, #tpu.memory_space<vmem>>, vector<1x32xf32>
    %96 = vector.broadcast %95 : vector<1x32xf32> to vector<8x32xf32>
    %97 = arith.addf %94, %96 : vector<8x32xf32>
    %98 = arith.addf %1, %97 : vector<8x32xf32>
    %cst_49 = arith.constant dense<0.000000e+00> : vector<8xf32>
    %99 = vector.multi_reduction <add>, %98, %cst_49 [1] : vector<8x32xf32> to vector<8xf32>
    %100 = vector.shape_cast %99 : vector<8xf32> to vector<8x1xf32>
    %cst_50 = arith.constant 3.200000e+01 : f32
    %101 = vector.broadcast %cst_50 : f32 to vector<8x1xf32>
    %102 = arith.divf %100, %101 : vector<8x1xf32>
    %103 = vector.broadcast %102 : vector<8x1xf32> to vector<8x32xf32>
    %104 = arith.subf %98, %103 : vector<8x32xf32>
    %105 = arith.mulf %104, %104 : vector<8x32xf32>
    %cst_51 = arith.constant dense<0.000000e+00> : vector<8xf32>
    %106 = vector.multi_reduction <add>, %105, %cst_51 [1] : vector<8x32xf32> to vector<8xf32>
    %107 = vector.shape_cast %106 : vector<8xf32> to vector<8x1xf32>
    %cst_52 = arith.constant 3.200000e+01 : f32
    %108 = vector.broadcast %cst_52 : f32 to vector<8x1xf32>
    %109 = arith.divf %107, %108 : vector<8x1xf32>
    %cst_53 = arith.constant 9.99999974E-6 : f32
    %110 = vector.broadcast %cst_53 : f32 to vector<8x1xf32>
    %111 = arith.addf %109, %110 : vector<8x1xf32>
    %112 = math.rsqrt %111 : vector<8x1xf32>
    %113 = vector.broadcast %112 : vector<8x1xf32> to vector<8x32xf32>
    %114 = arith.mulf %104, %113 : vector<8x32xf32>
    %c0_54 = arith.constant 0 : index
    %c0_55 = arith.constant 0 : index
    %115 = vector.load %arg11[%c0_54, %c0_55] : memref<1x32xf32, #tpu.memory_space<vmem>>, vector<1x32xf32>
    %116 = vector.broadcast %115 : vector<1x32xf32> to vector<8x32xf32>
    %117 = arith.mulf %114, %116 : vector<8x32xf32>
    %c0_56 = arith.constant 0 : index
    %c0_57 = arith.constant 0 : index
    %118 = vector.load %arg12[%c0_56, %c0_57] : memref<1x32xf32, #tpu.memory_space<vmem>>, vector<1x32xf32>
    %119 = vector.broadcast %118 : vector<1x32xf32> to vector<8x32xf32>
    %120 = arith.addf %117, %119 : vector<8x32xf32>
    %c0_58 = arith.constant 0 : index
    %c0_59 = arith.constant 0 : index
    %c0_60 = arith.constant 0 : index
    %121 = vector.load %arg13[%c0_58, %c0_59, %c0_60] : memref<1x8x32xf32, #tpu.memory_space<vmem>>, vector<1x8x32xf32>
    %122 = vector.shape_cast %121 : vector<1x8x32xf32> to vector<8x32xf32>
    %123 = vector.shape_cast %120 : vector<8x32xf32> to vector<1x8x32xf32>
    tpu.vector_store %arg13[%c0_58, %c0_59, %c0_60], %123 {strides = array<i32>} : memref<1x8x32xf32, #tpu.memory_space<vmem>>, vector<1x8x32xf32>,
    return
  }
  func.func @transform_0(%arg0: i32) -> (i32, i32, i32) {
    %c0_i32 = arith.constant 0 : i32
    %c0_i32_0 = arith.constant 0 : i32
    %c0_i32_1 = arith.constant 0 : i32
    return %arg0, %c0_i32, %c0_i32_0 : i32, i32, i32
  }
  func.func @transform_1(%arg0: i32) -> (i32, i32, i32) {
    %c0_i32 = arith.constant 0 : i32
    %c0_i32_0 = arith.constant 0 : i32
    %c0_i32_1 = arith.constant 0 : i32
    return %arg0, %c0_i32, %c0_i32_0 : i32, i32, i32
  }
  func.func @transform_2(%arg0: i32) -> (i32, i32, i32) {
    %c0_i32 = arith.constant 0 : i32
    %c0_i32_0 = arith.constant 0 : i32
    %c0_i32_1 = arith.constant 0 : i32
    return %arg0, %c0_i32, %c0_i32_0 : i32, i32, i32
  }
  func.func @transform_3(%arg0: i32) -> (i32, i32, i32) {
    %c0_i32 = arith.constant 0 : i32
    %c0_i32_0 = arith.constant 0 : i32
    %c0_i32_1 = arith.constant 0 : i32
    return %arg0, %c0_i32, %c0_i32_0 : i32, i32, i32
  }
  func.func @transform_4(%arg0: i32) -> (i32, i32) {
    %c0_i32 = arith.constant 0 : i32
    %c0_i32_0 = arith.constant 0 : i32
    %c0_i32_1 = arith.constant 0 : i32
    return %c0_i32, %c0_i32_0 : i32, i32
  }
  func.func @transform_5(%arg0: i32) -> (i32, i32) {
    %c0_i32 = arith.constant 0 : i32
    %c0_i32_0 = arith.constant 0 : i32
    %c0_i32_1 = arith.constant 0 : i32
    return %c0_i32, %c0_i32_0 : i32, i32
  }
  func.func @transform_6(%arg0: i32) -> (i32, i32) {
    %c0_i32 = arith.constant 0 : i32
    %c0_i32_0 = arith.constant 0 : i32
    %c0_i32_1 = arith.constant 0 : i32
    return %c0_i32, %c0_i32_0 : i32, i32
  }
  func.func @transform_7(%arg0: i32) -> (i32, i32) {
    %c0_i32 = arith.constant 0 : i32
    %c0_i32_0 = arith.constant 0 : i32
    %c0_i32_1 = arith.constant 0 : i32
    return %c0_i32, %c0_i32_0 : i32, i32
  }
  func.func @transform_8(%arg0: i32) -> (i32, i32) {
    %c0_i32 = arith.constant 0 : i32
    %c0_i32_0 = arith.constant 0 : i32
    %c0_i32_1 = arith.constant 0 : i32
    return %c0_i32, %c0_i32_0 : i32, i32
  }
  func.func @transform_9(%arg0: i32) -> (i32, i32) {
    %c0_i32 = arith.constant 0 : i32
    %c0_i32_0 = arith.constant 0 : i32
    %c0_i32_1 = arith.constant 0 : i32
    return %c0_i32, %c0_i32_0 : i32, i32
  }
  func.func @transform_10(%arg0: i32) -> (i32, i32) {
    %c0_i32 = arith.constant 0 : i32
    %c0_i32_0 = arith.constant 0 : i32
    %c0_i32_1 = arith.constant 0 : i32
    return %c0_i32, %c0_i32_0 : i32, i32
  }
  func.func @transform_11(%arg0: i32) -> (i32, i32) {
    %c0_i32 = arith.constant 0 : i32
    %c0_i32_0 = arith.constant 0 : i32
    %c0_i32_1 = arith.constant 0 : i32
    return %c0_i32, %c0_i32_0 : i32, i32
  }
  func.func @transform_12(%arg0: i32) -> (i32, i32, i32) {
    %c0_i32 = arith.constant 0 : i32
    %c0_i32_0 = arith.constant 0 : i32
    %c0_i32_1 = arith.constant 0 : i32
    return %arg0, %c0_i32, %c0_i32_0 : i32, i32, i32
  }
}

module attributes {stable_mosaic.version = 11 : i64} {
  func.func @kernel(%arg0: i32, %arg1: memref<1x8x32xf32, #tpu.memory_space<vmem>>, %arg2: memref<1x8x32xf32, #tpu.memory_space<vmem>>, %arg3: memref<1x16x32xf32, #tpu.memory_space<vmem>>, %arg4: memref<1x16x32xf32, #tpu.memory_space<vmem>>, %arg5: memref<32x32xf32, #tpu.memory_space<vmem>>, %arg6: memref<1x32xf32, #tpu.memory_space<vmem>>, %arg7: memref<32x64xf32, #tpu.memory_space<vmem>>, %arg8: memref<1x64xf32, #tpu.memory_space<vmem>>, %arg9: memref<32x32xf32, #tpu.memory_space<vmem>>, %arg10: memref<1x32xf32, #tpu.memory_space<vmem>>, %arg11: memref<1x32xf32, #tpu.memory_space<vmem>>, %arg12: memref<1x32xf32, #tpu.memory_space<vmem>>, %arg13: memref<1x8x32xf32, #tpu.memory_space<vmem>>) attributes {dimension_semantics = [#tpu.dimension_semantics<parallel>], iteration_bounds = array<i64: 2>, scalar_prefetch = 0 : i64, scratch_operands = 0 : i64, tpu.core_type = #tpu.core_type<tc>, window_params = [{transform_indices = @transform_0, window_bounds = array<i64: 1, 8, 32>}, {transform_indices = @transform_1, window_bounds = array<i64: 1, 8, 32>}, {transform_indices = @transform_2, window_bounds = array<i64: 1, 16, 32>}, {transform_indices = @transform_3, window_bounds = array<i64: 1, 16, 32>}, {pipeline_mode = #tpu.pipeline_mode<synchronous>, transform_indices = @transform_4, window_bounds = array<i64: 32, 32>}, {pipeline_mode = #tpu.pipeline_mode<synchronous>, transform_indices = @transform_5, window_bounds = array<i64: 1, 32>}, {pipeline_mode = #tpu.pipeline_mode<synchronous>, transform_indices = @transform_6, window_bounds = array<i64: 32, 64>}, {pipeline_mode = #tpu.pipeline_mode<synchronous>, transform_indices = @transform_7, window_bounds = array<i64: 1, 64>}, {pipeline_mode = #tpu.pipeline_mode<synchronous>, transform_indices = @transform_8, window_bounds = array<i64: 32, 32>}, {pipeline_mode = #tpu.pipeline_mode<synchronous>, transform_indices = @transform_9, window_bounds = array<i64: 1, 32>}, {pipeline_mode = #tpu.pipeline_mode<synchronous>, transform_indices = @transform_10, window_bounds = array<i64: 1, 32>}, {pipeline_mode = #tpu.pipeline_mode<synchronous>, transform_indices = @transform_11, window_bounds = array<i64: 1, 32>}, {transform_indices = @transform_12, window_bounds = array<i64: 1, 8, 32>}]} {
    %c0 = arith.constant 0 : index
    %c0_0 = arith.constant 0 : index
    %c0_1 = arith.constant 0 : index
    %0 = vector.load %arg1[%c0, %c0_0, %c0_1] : memref<1x8x32xf32, #tpu.memory_space<vmem>>, vector<1x8x32xf32>
    %1 = vector.shape_cast %0 : vector<1x8x32xf32> to vector<8x32xf32>
    %c0_2 = arith.constant 0 : index
    %c0_3 = arith.constant 0 : index
    %c0_4 = arith.constant 0 : index
    %2 = vector.load %arg2[%c0_2, %c0_3, %c0_4] : memref<1x8x32xf32, #tpu.memory_space<vmem>>, vector<1x8x32xf32>
    %3 = vector.shape_cast %2 : vector<1x8x32xf32> to vector<8x32xf32>
    %4 = arith.addf %1, %3 : vector<8x32xf32>
    %c0_5 = arith.constant 0 : index
    %c0_6 = arith.constant 0 : index
    %c0_7 = arith.constant 0 : index
    %5 = vector.load %arg3[%c0_5, %c0_6, %c0_7] : memref<1x16x32xf32, #tpu.memory_space<vmem>>, vector<1x16x32xf32>
    %6 = vector.shape_cast %5 : vector<1x16x32xf32> to vector<16x32xf32>
    %c0_8 = arith.constant 0 : index
    %c0_9 = arith.constant 0 : index
    %c0_10 = arith.constant 0 : index
    %7 = vector.load %arg4[%c0_8, %c0_9, %c0_10] : memref<1x16x32xf32, #tpu.memory_space<vmem>>, vector<1x16x32xf32>
    %8 = vector.shape_cast %7 : vector<1x16x32xf32> to vector<16x32xf32>
    %9 = arith.addf %6, %8 : vector<16x32xf32>
    %c0_11 = arith.constant 0 : index
    %c0_12 = arith.constant 0 : index
    %10 = vector.load %arg5[%c0_11, %c0_12] : memref<32x32xf32, #tpu.memory_space<vmem>>, vector<32x32xf32>
    %cst = arith.constant dense<0.000000e+00> : vector<8x32xf32>
    %11 = tpu.matmul %4, %10, %cst {dimension_numbers = #tpu.dot_dimension_numbers<[1], [0], [0], [1], [0, 0, 1, 1], [], []>} : vector<8x32xf32>, vector<32x32xf32>, vector<8x32xf32> -> vector<8x32xf32>
    %c0_13 = arith.constant 0 : index
    %c0_14 = arith.constant 0 : index
    %12 = vector.load %arg6[%c0_13, %c0_14] : memref<1x32xf32, #tpu.memory_space<vmem>>, vector<1x32xf32>
    %13 = vector.broadcast %12 : vector<1x32xf32> to vector<8x32xf32>
    %14 = arith.addf %11, %13 : vector<8x32xf32>
    %c0_15 = arith.constant 0 : index
    %c0_16 = arith.constant 0 : index
    %15 = vector.load %arg7[%c0_15, %c0_16] : memref<32x64xf32, #tpu.memory_space<vmem>>, vector<32x64xf32>
    %cst_17 = arith.constant dense<0.000000e+00> : vector<16x64xf32>
    %16 = tpu.matmul %9, %15, %cst_17 {dimension_numbers = #tpu.dot_dimension_numbers<[1], [0], [0], [1], [0, 0, 1, 1], [], []>} : vector<16x32xf32>, vector<32x64xf32>, vector<16x64xf32> -> vector<16x64xf32>
    %c0_18 = arith.constant 0 : index
    %c0_19 = arith.constant 0 : index
    %17 = vector.load %arg8[%c0_18, %c0_19] : memref<1x64xf32, #tpu.memory_space<vmem>>, vector<1x64xf32>
    %18 = vector.broadcast %17 : vector<1x64xf32> to vector<16x64xf32>
    %19 = arith.addf %16, %18 : vector<16x64xf32>
    %20 = vector.extract_strided_slice %14 {offsets = [0, 0], sizes = [8, 8], strides = [1, 1]} : vector<8x32xf32> to vector<8x8xf32>
    %21 = vector.extract_strided_slice %19 {offsets = [0, 0], sizes = [16, 8], strides = [1, 1]} : vector<16x64xf32> to vector<16x8xf32>
    %22 = vector.extract_strided_slice %19 {offsets = [0, 32], sizes = [16, 8], strides = [1, 1]} : vector<16x64xf32> to vector<16x8xf32>
    %cst_20 = arith.constant dense<0.000000e+00> : vector<8x16xf32>
    %23 = tpu.matmul %20, %21, %cst_20 {dimension_numbers = #tpu.dot_dimension_numbers<[1], [1], [0], [0], [0, 0, 1, 0], [], []>} : vector<8x8xf32>, vector<16x8xf32>, vector<8x16xf32> -> vector<8x16xf32>
    %cst_21 = arith.constant dense<0xFF800000> : vector<8xf32>
    %24 = vector.multi_reduction <maximumf>, %23, %cst_21 [1] : vector<8x16xf32> to vector<8xf32>
    %25 = vector.shape_cast %24 : vector<8xf32> to vector<8x1xf32>
    %cst_22 = arith.constant -1.000000e+30 : f32
    %26 = vector.broadcast %cst_22 : f32 to vector<8x1xf32>
    %27 = arith.maximumf %25, %26 : vector<8x1xf32>
    %28 = vector.broadcast %27 : vector<8x1xf32> to vector<8x16xf32>
    %29 = arith.subf %23, %28 : vector<8x16xf32>
    %30 = math.exp %29 : vector<8x16xf32>
    %cst_23 = arith.constant dense<0.000000e+00> : vector<8xf32>
    %31 = vector.multi_reduction <add>, %30, %cst_23 [1] : vector<8x16xf32> to vector<8xf32>
    %32 = vector.shape_cast %31 : vector<8xf32> to vector<8x1xf32>
    %cst_24 = arith.constant dense<0.000000e+00> : vector<8x8xf32>
    %33 = tpu.matmul %30, %22, %cst_24 {dimension_numbers = #tpu.dot_dimension_numbers<[1], [0], [0], [1], [0, 0, 1, 1], [], []>} : vector<8x16xf32>, vector<16x8xf32>, vector<8x8xf32> -> vector<8x8xf32>
    %cst_25 = arith.constant 1.000000e-30 : f32
    %34 = vector.broadcast %cst_25 : f32 to vector<8x1xf32>
    %35 = arith.maximumf %32, %34 : vector<8x1xf32>
    %36 = vector.broadcast %35 : vector<8x1xf32> to vector<8x8xf32>
    %37 = arith.divf %33, %36 : vector<8x8xf32>
    %38 = vector.extract_strided_slice %14 {offsets = [0, 8], sizes = [8, 8], strides = [1, 1]} : vector<8x32xf32> to vector<8x8xf32>
    %39 = vector.extract_strided_slice %19 {offsets = [0, 8], sizes = [16, 8], strides = [1, 1]} : vector<16x64xf32> to vector<16x8xf32>
    %40 = vector.extract_strided_slice %19 {offsets = [0, 40], sizes = [16, 8], strides = [1, 1]} : vector<16x64xf32> to vector<16x8xf32>
    %cst_26 = arith.constant dense<0.000000e+00> : vector<8x16xf32>
    %41 = tpu.matmul %38, %39, %cst_26 {dimension_numbers = #tpu.dot_dimension_numbers<[1], [1], [0], [0], [0, 0, 1, 0], [], []>} : vector<8x8xf32>, vector<16x8xf32>, vector<8x16xf32> -> vector<8x16xf32>
    %cst_27 = arith.constant dense<0xFF800000> : vector<8xf32>
    %42 = vector.multi_reduction <maximumf>, %41, %cst_27 [1] : vector<8x16xf32> to vector<8xf32>
    %43 = vector.shape_cast %42 : vector<8xf32> to vector<8x1xf32>
    %cst_28 = arith.constant -1.000000e+30 : f32
    %44 = vector.broadcast %cst_28 : f32 to vector<8x1xf32>
    %45 = arith.maximumf %43, %44 : vector<8x1xf32>
    %46 = vector.broadcast %45 : vector<8x1xf32> to vector<8x16xf32>
    %47 = arith.subf %41, %46 : vector<8x16xf32>
    %48 = math.exp %47 : vector<8x16xf32>
    %cst_29 = arith.constant dense<0.000000e+00> : vector<8xf32>
    %49 = vector.multi_reduction <add>, %48, %cst_29 [1] : vector<8x16xf32> to vector<8xf32>
    %50 = vector.shape_cast %49 : vector<8xf32> to vector<8x1xf32>
    %cst_30 = arith.constant dense<0.000000e+00> : vector<8x8xf32>
    %51 = tpu.matmul %48, %40, %cst_30 {dimension_numbers = #tpu.dot_dimension_numbers<[1], [0], [0], [1], [0, 0, 1, 1], [], []>} : vector<8x16xf32>, vector<16x8xf32>, vector<8x8xf32> -> vector<8x8xf32>
    %cst_31 = arith.constant 1.000000e-30 : f32
    %52 = vector.broadcast %cst_31 : f32 to vector<8x1xf32>
    %53 = arith.maximumf %50, %52 : vector<8x1xf32>
    %54 = vector.broadcast %53 : vector<8x1xf32> to vector<8x8xf32>
    %55 = arith.divf %51, %54 : vector<8x8xf32>
    %56 = vector.extract_strided_slice %14 {offsets = [0, 16], sizes = [8, 8], strides = [1, 1]} : vector<8x32xf32> to vector<8x8xf32>
    %57 = vector.extract_strided_slice %19 {offsets = [0, 16], sizes = [16, 8], strides = [1, 1]} : vector<16x64xf32> to vector<16x8xf32>
    %58 = vector.extract_strided_slice %19 {offsets = [0, 48], sizes = [16, 8], strides = [1, 1]} : vector<16x64xf32> to vector<16x8xf32>
    %cst_32 = arith.constant dense<0.000000e+00> : vector<8x16xf32>
    %59 = tpu.matmul %56, %57, %cst_32 {dimension_numbers = #tpu.dot_dimension_numbers<[1], [1], [0], [0], [0, 0, 1, 0], [], []>} : vector<8x8xf32>, vector<16x8xf32>, vector<8x16xf32> -> vector<8x16xf32>
    %cst_33 = arith.constant dense<0xFF800000> : vector<8xf32>
    %60 = vector.multi_reduction <maximumf>, %59, %cst_33 [1] : vector<8x16xf32> to vector<8xf32>
    %61 = vector.shape_cast %60 : vector<8xf32> to vector<8x1xf32>
    %cst_34 = arith.constant -1.000000e+30 : f32
    %62 = vector.broadcast %cst_34 : f32 to vector<8x1xf32>
    %63 = arith.maximumf %61, %62 : vector<8x1xf32>
    %64 = vector.broadcast %63 : vector<8x1xf32> to vector<8x16xf32>
    %65 = arith.subf %59, %64 : vector<8x16xf32>
    %66 = math.exp %65 : vector<8x16xf32>
    %cst_35 = arith.constant dense<0.000000e+00> : vector<8xf32>
    %67 = vector.multi_reduction <add>, %66, %cst_35 [1] : vector<8x16xf32> to vector<8xf32>
    %68 = vector.shape_cast %67 : vector<8xf32> to vector<8x1xf32>
    %cst_36 = arith.constant dense<0.000000e+00> : vector<8x8xf32>
    %69 = tpu.matmul %66, %58, %cst_36 {dimension_numbers = #tpu.dot_dimension_numbers<[1], [0], [0], [1], [0, 0, 1, 1], [], []>} : vector<8x16xf32>, vector<16x8xf32>, vector<8x8xf32> -> vector<8x8xf32>
    %cst_37 = arith.constant 1.000000e-30 : f32
    %70 = vector.broadcast %cst_37 : f32 to vector<8x1xf32>
    %71 = arith.maximumf %68, %70 : vector<8x1xf32>
    %72 = vector.broadcast %71 : vector<8x1xf32> to vector<8x8xf32>
    %73 = arith.divf %69, %72 : vector<8x8xf32>
    %74 = vector.extract_strided_slice %14 {offsets = [0, 24], sizes = [8, 8], strides = [1, 1]} : vector<8x32xf32> to vector<8x8xf32>
    %75 = vector.extract_strided_slice %19 {offsets = [0, 24], sizes = [16, 8], strides = [1, 1]} : vector<16x64xf32> to vector<16x8xf32>
    %76 = vector.extract_strided_slice %19 {offsets = [0, 56], sizes = [16, 8], strides = [1, 1]} : vector<16x64xf32> to vector<16x8xf32>
    %cst_38 = arith.constant dense<0.000000e+00> : vector<8x16xf32>
    %77 = tpu.matmul %74, %75, %cst_38 {dimension_numbers = #tpu.dot_dimension_numbers<[1], [1], [0], [0], [0, 0, 1, 0], [], []>} : vector<8x8xf32>, vector<16x8xf32>, vector<8x16xf32> -> vector<8x16xf32>
    %cst_39 = arith.constant dense<0xFF800000> : vector<8xf32>
    %78 = vector.multi_reduction <maximumf>, %77, %cst_39 [1] : vector<8x16xf32> to vector<8xf32>
    %79 = vector.shape_cast %78 : vector<8xf32> to vector<8x1xf32>
    %cst_40 = arith.constant -1.000000e+30 : f32
    %80 = vector.broadcast %cst_40 : f32 to vector<8x1xf32>
    %81 = arith.maximumf %79, %80 : vector<8x1xf32>
    %82 = vector.broadcast %81 : vector<8x1xf32> to vector<8x16xf32>
    %83 = arith.subf %77, %82 : vector<8x16xf32>
    %84 = math.exp %83 : vector<8x16xf32>
    %cst_41 = arith.constant dense<0.000000e+00> : vector<8xf32>
    %85 = vector.multi_reduction <add>, %84, %cst_41 [1] : vector<8x16xf32> to vector<8xf32>
    %86 = vector.shape_cast %85 : vector<8xf32> to vector<8x1xf32>
    %cst_42 = arith.constant dense<0.000000e+00> : vector<8x8xf32>
    %87 = tpu.matmul %84, %76, %cst_42 {dimension_numbers = #tpu.dot_dimension_numbers<[1], [0], [0], [1], [0, 0, 1, 1], [], []>} : vector<8x16xf32>, vector<16x8xf32>, vector<8x8xf32> -> vector<8x8xf32>
    %cst_43 = arith.constant 1.000000e-30 : f32
    %88 = vector.broadcast %cst_43 : f32 to vector<8x1xf32>
    %89 = arith.maximumf %86, %88 : vector<8x1xf32>
    %90 = vector.broadcast %89 : vector<8x1xf32> to vector<8x8xf32>
    %91 = arith.divf %87, %90 : vector<8x8xf32>
    %92 = tpu.concatenate %37, %55, %73, %91 in 1 : vector<8x8xf32>, vector<8x8xf32>, vector<8x8xf32>, vector<8x8xf32> -> vector<8x32xf32>
    %c0_44 = arith.constant 0 : index
    %c0_45 = arith.constant 0 : index
    %93 = vector.load %arg9[%c0_44, %c0_45] : memref<32x32xf32, #tpu.memory_space<vmem>>, vector<32x32xf32>
    %cst_46 = arith.constant dense<0.000000e+00> : vector<8x32xf32>
    %94 = tpu.matmul %92, %93, %cst_46 {dimension_numbers = #tpu.dot_dimension_numbers<[1], [0], [0], [1], [0, 0, 1, 1], [], []>} : vector<8x32xf32>, vector<32x32xf32>, vector<8x32xf32> -> vector<8x32xf32>
    %c0_47 = arith.constant 0 : index
    %c0_48 = arith.constant 0 : index
    %95 = vector.load %arg10[%c0_47, %c0_48] : memref<1x32xf32, #tpu.memory_space<vmem>>, vector<1x32xf32>
    %96 = vector.broadcast %95 : vector<1x32xf32> to vector<8x32xf32>
    %97 = arith.addf %94, %96 : vector<8x32xf32>
    %98 = arith.addf %1, %97 : vector<8x32xf32>
    %cst_49 = arith.constant dense<0.000000e+00> : vector<8xf32>
    %99 = vector.multi_reduction <add>, %98, %cst_49 [1] : vector<8x32xf32> to vector<8xf32>
    %100 = vector.shape_cast %99 : vector<8xf32> to vector<8x1xf32>
    %cst_50 = arith.constant 3.200000e+01 : f32
    %101 = vector.broadcast %cst_50 : f32 to vector<8x1xf32>
    %102 = arith.divf %100, %101 : vector<8x1xf32>
    %103 = vector.broadcast %102 : vector<8x1xf32> to vector<8x32xf32>
    %104 = arith.subf %98, %103 : vector<8x32xf32>
    %105 = arith.mulf %104, %104 : vector<8x32xf32>
    %cst_51 = arith.constant dense<0.000000e+00> : vector<8xf32>
    %106 = vector.multi_reduction <add>, %105, %cst_51 [1] : vector<8x32xf32> to vector<8xf32>
    %107 = vector.shape_cast %106 : vector<8xf32> to vector<8x1xf32>
    %cst_52 = arith.constant 3.200000e+01 : f32
    %108 = vector.broadcast %cst_52 : f32 to vector<8x1xf32>
    %109 = arith.divf %107, %108 : vector<8x1xf32>
    %cst_53 = arith.constant 9.99999974E-6 : f32
    %110 = vector.broadcast %cst_53 : f32 to vector<8x1xf32>
    %111 = arith.addf %109, %110 : vector<8x1xf32>
    %112 = math.rsqrt %111 : vector<8x1xf32>
    %113 = vector.broadcast %112 : vector<8x1xf32> to vector<8x32xf32>
    %114 = arith.mulf %104, %113 : vector<8x32xf32>
    %c0_54 = arith.constant 0 : index
    %c0_55 = arith.constant 0 : index
    %115 = vector.load %arg11[%c0_54, %c0_55] : memref<1x32xf32, #tpu.memory_space<vmem>>, vector<1x32xf32>
    %116 = vector.broadcast %115 : vector<1x32xf32> to vector<8x32xf32>
    %117 = arith.mulf %114, %116 : vector<8x32xf32>
    %c0_56 = arith.constant 0 : index
    %c0_57 = arith.constant 0 : index
    %118 = vector.load %arg12[%c0_56, %c0_57] : memref<1x32xf32, #tpu.memory_space<vmem>>, vector<1x32xf32>
    %119 = vector.broadcast %118 : vector<1x32xf32> to vector<8x32xf32>
    %120 = arith.addf %117, %119 : vector<8x32xf32>
    %c0_58 = arith.constant 0 : index
    %c0_59 = arith.constant 0 : index
    %c0_60 = arith.constant 0 : index
    %121 = vector.load %arg13[%c0_58, %c0_59, %c0_60] : memref<1x8x32xf32, #tpu.memory_space<vmem>>, vector<1x8x32xf32>
    %122 = vector.shape_cast %121 : vector<1x8x32xf32> to vector<8x32xf32>
    %123 = vector.shape_cast %120 : vector<8x32xf32> to vector<1x8x32xf32>
    tpu.vector_store %arg13[%c0_58, %c0_59, %c0_60], %123 {strides = array<i32>} : memref<1x8x32xf32, #tpu.memory_space<vmem>>, vector<1x8x32xf32>,
    return
  }
  func.func @transform_0(%arg0: i32) -> (i32, i32, i32) {
    %c0_i32 = arith.constant 0 : i32
    %c0_i32_0 = arith.constant 0 : i32
    %c0_i32_1 = arith.constant 0 : i32
    return %arg0, %c0_i32, %c0_i32_0 : i32, i32, i32
  }
  func.func @transform_1(%arg0: i32) -> (i32, i32, i32) {
    %c0_i32 = arith.constant 0 : i32
    %c0_i32_0 = arith.constant 0 : i32
    %c0_i32_1 = arith.constant 0 : i32
    return %arg0, %c0_i32, %c0_i32_0 : i32, i32, i32
  }
  func.func @transform_2(%arg0: i32) -> (i32, i32, i32) {
    %c0_i32 = arith.constant 0 : i32
    %c0_i32_0 = arith.constant 0 : i32
    %c0_i32_1 = arith.constant 0 : i32
    return %arg0, %c0_i32, %c0_i32_0 : i32, i32, i32
  }
  func.func @transform_3(%arg0: i32) -> (i32, i32, i32) {
    %c0_i32 = arith.constant 0 : i32
    %c0_i32_0 = arith.constant 0 : i32
    %c0_i32_1 = arith.constant 0 : i32
    return %arg0, %c0_i32, %c0_i32_0 : i32, i32, i32
  }
  func.func @transform_4(%arg0: i32) -> (i32, i32) {
    %c0_i32 = arith.constant 0 : i32
    %c0_i32_0 = arith.constant 0 : i32
    %c0_i32_1 = arith.constant 0 : i32
    return %c0_i32, %c0_i32_0 : i32, i32
  }
  func.func @transform_5(%arg0: i32) -> (i32, i32) {
    %c0_i32 = arith.constant 0 : i32
    %c0_i32_0 = arith.constant 0 : i32
    %c0_i32_1 = arith.constant 0 : i32
    return %c0_i32, %c0_i32_0 : i32, i32
  }
  func.func @transform_6(%arg0: i32) -> (i32, i32) {
    %c0_i32 = arith.constant 0 : i32
    %c0_i32_0 = arith.constant 0 : i32
    %c0_i32_1 = arith.constant 0 : i32
    return %c0_i32, %c0_i32_0 : i32, i32
  }
  func.func @transform_7(%arg0: i32) -> (i32, i32) {
    %c0_i32 = arith.constant 0 : i32
    %c0_i32_0 = arith.constant 0 : i32
    %c0_i32_1 = arith.constant 0 : i32
    return %c0_i32, %c0_i32_0 : i32, i32
  }
  func.func @transform_8(%arg0: i32) -> (i32, i32) {
    %c0_i32 = arith.constant 0 : i32
    %c0_i32_0 = arith.constant 0 : i32
    %c0_i32_1 = arith.constant 0 : i32
    return %c0_i32, %c0_i32_0 : i32, i32
  }
  func.func @transform_9(%arg0: i32) -> (i32, i32) {
    %c0_i32 = arith.constant 0 : i32
    %c0_i32_0 = arith.constant 0 : i32
    %c0_i32_1 = arith.constant 0 : i32
    return %c0_i32, %c0_i32_0 : i32, i32
  }
  func.func @transform_10(%arg0: i32) -> (i32, i32) {
    %c0_i32 = arith.constant 0 : i32
    %c0_i32_0 = arith.constant 0 : i32
    %c0_i32_1 = arith.constant 0 : i32
    return %c0_i32, %c0_i32_0 : i32, i32
  }
  func.func @transform_11(%arg0: i32) -> (i32, i32) {
    %c0_i32 = arith.constant 0 : i32
    %c0_i32_0 = arith.constant 0 : i32
    %c0_i32_1 = arith.constant 0 : i32
    return %c0_i32, %c0_i32_0 : i32, i32
  }
  func.func @transform_12(%arg0: i32) -> (i32, i32, i32) {
    %c0_i32 = arith.constant 0 : i32
    %c0_i32_0 = arith.constant 0 : i32
    %c0_i32_1 = arith.constant 0 : i32
    return %arg0, %c0_i32, %c0_i32_0 : i32, i32, i32
  }
}

module attributes {stable_mosaic.version = 11 : i64} {
  func.func @_ffn_ln_kernel(%arg0: i32, %arg1: memref<8x32xf32, #tpu.memory_space<vmem>>, %arg2: memref<32x64xf32, #tpu.memory_space<vmem>>, %arg3: memref<1x64xf32, #tpu.memory_space<vmem>>, %arg4: memref<64x32xf32, #tpu.memory_space<vmem>>, %arg5: memref<1x32xf32, #tpu.memory_space<vmem>>, %arg6: memref<1x32xf32, #tpu.memory_space<vmem>>, %arg7: memref<1x32xf32, #tpu.memory_space<vmem>>, %arg8: memref<8x32xf32, #tpu.memory_space<vmem>>) attributes {dimension_semantics = [#tpu.dimension_semantics<parallel>], iteration_bounds = array<i64: 2>, scalar_prefetch = 0 : i64, scratch_operands = 0 : i64, tpu.core_type = #tpu.core_type<tc>, window_params = [{transform_indices = @transform_0, window_bounds = array<i64: 8, 32>}, {pipeline_mode = #tpu.pipeline_mode<synchronous>, transform_indices = @transform_1, window_bounds = array<i64: 32, 64>}, {pipeline_mode = #tpu.pipeline_mode<synchronous>, transform_indices = @transform_2, window_bounds = array<i64: 1, 64>}, {pipeline_mode = #tpu.pipeline_mode<synchronous>, transform_indices = @transform_3, window_bounds = array<i64: 64, 32>}, {pipeline_mode = #tpu.pipeline_mode<synchronous>, transform_indices = @transform_4, window_bounds = array<i64: 1, 32>}, {pipeline_mode = #tpu.pipeline_mode<synchronous>, transform_indices = @transform_5, window_bounds = array<i64: 1, 32>}, {pipeline_mode = #tpu.pipeline_mode<synchronous>, transform_indices = @transform_6, window_bounds = array<i64: 1, 32>}, {transform_indices = @transform_7, window_bounds = array<i64: 8, 32>}]} {
    %c0 = arith.constant 0 : index
    %c0_0 = arith.constant 0 : index
    %0 = vector.load %arg1[%c0, %c0_0] : memref<8x32xf32, #tpu.memory_space<vmem>>, vector<8x32xf32>
    %c0_1 = arith.constant 0 : index
    %c0_2 = arith.constant 0 : index
    %1 = vector.load %arg2[%c0_1, %c0_2] : memref<32x64xf32, #tpu.memory_space<vmem>>, vector<32x64xf32>
    %cst = arith.constant dense<0.000000e+00> : vector<8x64xf32>
    %2 = tpu.matmul %0, %1, %cst {dimension_numbers = #tpu.dot_dimension_numbers<[1], [0], [0], [1], [0, 0, 1, 1], [], []>} : vector<8x32xf32>, vector<32x64xf32>, vector<8x64xf32> -> vector<8x64xf32>
    %c0_3 = arith.constant 0 : index
    %c0_4 = arith.constant 0 : index
    %3 = vector.load %arg3[%c0_3, %c0_4] : memref<1x64xf32, #tpu.memory_space<vmem>>, vector<1x64xf32>
    %4 = vector.broadcast %3 : vector<1x64xf32> to vector<8x64xf32>
    %5 = arith.addf %2, %4 : vector<8x64xf32>
    %cst_5 = arith.constant 0.000000e+00 : f32
    %6 = vector.broadcast %cst_5 : f32 to vector<8x64xf32>
    %7 = arith.maximumf %5, %6 : vector<8x64xf32>
    %c0_6 = arith.constant 0 : index
    %c0_7 = arith.constant 0 : index
    %8 = vector.load %arg4[%c0_6, %c0_7] : memref<64x32xf32, #tpu.memory_space<vmem>>, vector<64x32xf32>
    %cst_8 = arith.constant dense<0.000000e+00> : vector<8x32xf32>
    %9 = tpu.matmul %7, %8, %cst_8 {dimension_numbers = #tpu.dot_dimension_numbers<[1], [0], [0], [1], [0, 0, 1, 1], [], []>} : vector<8x64xf32>, vector<64x32xf32>, vector<8x32xf32> -> vector<8x32xf32>
    %c0_9 = arith.constant 0 : index
    %c0_10 = arith.constant 0 : index
    %10 = vector.load %arg5[%c0_9, %c0_10] : memref<1x32xf32, #tpu.memory_space<vmem>>, vector<1x32xf32>
    %11 = vector.broadcast %10 : vector<1x32xf32> to vector<8x32xf32>
    %12 = arith.addf %9, %11 : vector<8x32xf32>
    %13 = arith.addf %0, %12 : vector<8x32xf32>
    %cst_11 = arith.constant dense<0.000000e+00> : vector<8xf32>
    %14 = vector.multi_reduction <add>, %13, %cst_11 [1] : vector<8x32xf32> to vector<8xf32>
    %15 = vector.shape_cast %14 : vector<8xf32> to vector<8x1xf32>
    %cst_12 = arith.constant 3.200000e+01 : f32
    %16 = vector.broadcast %cst_12 : f32 to vector<8x1xf32>
    %17 = arith.divf %15, %16 : vector<8x1xf32>
    %18 = vector.broadcast %17 : vector<8x1xf32> to vector<8x32xf32>
    %19 = arith.subf %13, %18 : vector<8x32xf32>
    %20 = arith.mulf %19, %19 : vector<8x32xf32>
    %cst_13 = arith.constant dense<0.000000e+00> : vector<8xf32>
    %21 = vector.multi_reduction <add>, %20, %cst_13 [1] : vector<8x32xf32> to vector<8xf32>
    %22 = vector.shape_cast %21 : vector<8xf32> to vector<8x1xf32>
    %cst_14 = arith.constant 3.200000e+01 : f32
    %23 = vector.broadcast %cst_14 : f32 to vector<8x1xf32>
    %24 = arith.divf %22, %23 : vector<8x1xf32>
    %cst_15 = arith.constant 9.99999974E-6 : f32
    %25 = vector.broadcast %cst_15 : f32 to vector<8x1xf32>
    %26 = arith.addf %24, %25 : vector<8x1xf32>
    %27 = math.rsqrt %26 : vector<8x1xf32>
    %28 = vector.broadcast %27 : vector<8x1xf32> to vector<8x32xf32>
    %29 = arith.mulf %19, %28 : vector<8x32xf32>
    %c0_16 = arith.constant 0 : index
    %c0_17 = arith.constant 0 : index
    %30 = vector.load %arg6[%c0_16, %c0_17] : memref<1x32xf32, #tpu.memory_space<vmem>>, vector<1x32xf32>
    %31 = vector.broadcast %30 : vector<1x32xf32> to vector<8x32xf32>
    %32 = arith.mulf %29, %31 : vector<8x32xf32>
    %c0_18 = arith.constant 0 : index
    %c0_19 = arith.constant 0 : index
    %33 = vector.load %arg7[%c0_18, %c0_19] : memref<1x32xf32, #tpu.memory_space<vmem>>, vector<1x32xf32>
    %34 = vector.broadcast %33 : vector<1x32xf32> to vector<8x32xf32>
    %35 = arith.addf %32, %34 : vector<8x32xf32>
    %c0_20 = arith.constant 0 : index
    %c0_21 = arith.constant 0 : index
    %36 = vector.load %arg8[%c0_20, %c0_21] : memref<8x32xf32, #tpu.memory_space<vmem>>, vector<8x32xf32>
    tpu.vector_store %arg8[%c0_20, %c0_21], %35 {strides = array<i32>} : memref<8x32xf32, #tpu.memory_space<vmem>>, vector<8x32xf32>,
    return
  }
  func.func @transform_0(%arg0: i32) -> (i32, i32) {
    %c0_i32 = arith.constant 0 : i32
    %c0_i32_0 = arith.constant 0 : i32
    return %arg0, %c0_i32 : i32, i32
  }
  func.func @transform_1(%arg0: i32) -> (i32, i32) {
    %c0_i32 = arith.constant 0 : i32
    %c0_i32_0 = arith.constant 0 : i32
    %c0_i32_1 = arith.constant 0 : i32
    return %c0_i32, %c0_i32_0 : i32, i32
  }
  func.func @transform_2(%arg0: i32) -> (i32, i32) {
    %c0_i32 = arith.constant 0 : i32
    %c0_i32_0 = arith.constant 0 : i32
    %c0_i32_1 = arith.constant 0 : i32
    return %c0_i32, %c0_i32_0 : i32, i32
  }
  func.func @transform_3(%arg0: i32) -> (i32, i32) {
    %c0_i32 = arith.constant 0 : i32
    %c0_i32_0 = arith.constant 0 : i32
    %c0_i32_1 = arith.constant 0 : i32
    return %c0_i32, %c0_i32_0 : i32, i32
  }
  func.func @transform_4(%arg0: i32) -> (i32, i32) {
    %c0_i32 = arith.constant 0 : i32
    %c0_i32_0 = arith.constant 0 : i32
    %c0_i32_1 = arith.constant 0 : i32
    return %c0_i32, %c0_i32_0 : i32, i32
  }
  func.func @transform_5(%arg0: i32) -> (i32, i32) {
    %c0_i32 = arith.constant 0 : i32
    %c0_i32_0 = arith.constant 0 : i32
    %c0_i32_1 = arith.constant 0 : i32
    return %c0_i32, %c0_i32_0 : i32, i32
  }
  func.func @transform_6(%arg0: i32) -> (i32, i32) {
    %c0_i32 = arith.constant 0 : i32
    %c0_i32_0 = arith.constant 0 : i32
    %c0_i32_1 = arith.constant 0 : i32
    return %c0_i32, %c0_i32_0 : i32, i32
  }
  func.func @transform_7(%arg0: i32) -> (i32, i32) {
    %c0_i32 = arith.constant 0 : i32
    %c0_i32_0 = arith.constant 0 : i32
    return %arg0, %c0_i32 : i32, i32
  }
}

</mosaic_0001>

<llo_original>
// kernel: transformer_decoder_layer.5
$region0: #{transformer_decoder_layer.5}
  #allocation0 [shape = 'u32[]', space=smem, size = 0x4, offset = 0x4, fixed_abs, tag = 'smem constant byte address 0x4 - core index']
  #allocation1 [shape = 'u32[144,128]{1,0:T(1,128)}', space=vmem, size = 0x12000, scoped, tag = 'internal scratch']
  %s0 = inlined_call_operand.vmem [shape: f32[16,32], index: 0, kind: input, shape index: {}]
  %s1 = inlined_call_operand.vmem [shape: f32[32,64], index: 1, kind: input, shape index: {}]
  %s2 = inlined_call_operand.vmem [shape: f32[1,64], index: 2, kind: input, shape index: {}]
  %s3 = inlined_call_operand.vmem [shape: f32[64,32], index: 3, kind: input, shape index: {}]
  %s4 = inlined_call_operand.vmem [shape: f32[1,32], index: 4, kind: input, shape index: {}]
  %s5 = inlined_call_operand.vmem [shape: f32[1,32], index: 5, kind: input, shape index: {}]
  %s6 = inlined_call_operand.vmem [shape: f32[1,32], index: 6, kind: input, shape index: {}]
  %s7 = inlined_call_operand.hbm [shape: f32[16,32], index: 7, kind: output, shape index: {}]
  %s8 = sld [smem:[#allocation0]]
  $region61: #{transformer_decoder_layer.5} parent=0
    _
  %s10 = ssub.s32 1, %s8
  %s11 = scalar_select 0, %s10, %s8
  $region1: #{transformer_decoder_layer.5} parent=0
    #allocation2 [shape = 'u8[8192]{0}', space=vmem, size = 0x2000, scoped, tag = 'output window, operand 0']
    #allocation3 [shape = 's32[2]{0}', space=sflag, size = 0x8, scoped, tag = 'scoped memory for transformer_decoder_layer.5']
    %12 = vsyncpa [#allocation3], 0
    %s13 = scalar_lea.sflag [#allocation3], 1
    %14 = vsyncpa %s13, 0
    loop: start=0, step=1, limit=4
    $region2: #{transformer_decoder_layer.5} parent=1 // loop_pre_header
      _
    $region3: #{transformer_decoder_layer.5} parent=1 // loop_header
      %s16 = sphi 0, %s20
      %p17 = scmp.ge.s32.totalorder %s16, 4
      %s26 = sphi 0, %s28
      %s29 = sphi 0, %s26
      %s30 = sphi 0, %s29
      %s46 = sphi 0, %s30
      %s50 = sphi 0, %s50
      %s52 = sphi 0, %s50
      %s53 = sphi 0, %s52
      %s67 = sphi 0, %s53
      %s71 = sphi 0, %s71
      %s73 = sphi 0, %s71
      %s74 = sphi 0, %s73
      %s88 = sphi 0, %s74
      %s92 = sphi 0, %s92
      %s94 = sphi 0, %s92
      %s95 = sphi 0, %s94
      %s109 = sphi 0, %s95
      %s113 = sphi 0, %s113
      %s115 = sphi 0, %s113
      %s116 = sphi 0, %s115
      %s130 = sphi 0, %s116
      %s134 = sphi 0, %s134
      %s136 = sphi 0, %s134
      %s137 = sphi 0, %s136
      %s151 = sphi 0, %s137
      %s155 = sphi 0, %s155
      %s157 = sphi 0, %s155
      %s158 = sphi 0, %s157
      %s172 = sphi 0, %s158
      %s178 = sphi 0, %s180
      %s181 = sphi 0, %s178
      %s182 = sphi 0, %s181
      %s198 = sphi 0, %s182
    $region4: #{transformer_decoder_layer.5} parent=1 // loop_header_branch
      %19 = sbr.rel (%p17) target = $region8
    $region5: #{transformer_decoder_layer.5} parent=1 // loop_body
      %s21 = ssub.s32 %s16, 1
      %s22 = ssub.s32 %s16, 2
      %s23 = sadd.s32 %s16, 1
      %s24 = ssub.s32 %s16, %s23
      %p25 = scmp.eq.s32.totalorder %s24, 0
      %s27 = sadd.s32 %s26, 1
      %s28 = scalar_select %p25, %s26, %s27
      %p31 = pneg %p25
      %p32 = scmp.eq.s32.totalorder %s16, 1
      %p33 = por %p31, %p32
      %p34 = scmp.ne.s32.totalorder %s26, %s29
      %p35 = scmp.eq.s32.totalorder %s16, 0
      %p36 = por %p34, %p35
      %p37 = scmp.ne.s32.totalorder %s26, %s29
      %p38 = scmp.eq.s32.totalorder %s21, 1
      %p39 = por %p37, %p38
      %p40 = scmp.ne.s32.totalorder %s29, %s30
      %p41 = scmp.eq.s32.totalorder %s21, 0
      %p42 = por %p40, %p41
      %p43 = scmp.ne.s32.totalorder %s29, %s30
      %p44 = scmp.eq.s32.totalorder %s22, 1
      %p45 = por %p43, %p44
      %p47 = scmp.ne.s32.totalorder %s30, %s46
      %p48 = scmp.eq.s32.totalorder %s22, 0
      %p49 = por %p47, %p48
      %s51 = sadd.s32 %s50, 1
      %p54 = scmp.eq.s32.totalorder %s16, 1
      %p55 = scmp.ne.s32.totalorder %s50, %s52
      %p56 = scmp.eq.s32.totalorder %s16, 0
      %p57 = por %p55, %p56
      %p58 = scmp.ne.s32.totalorder %s50, %s52
      %p59 = scmp.eq.s32.totalorder %s21, 1
      %p60 = por %p58, %p59
      %p61 = scmp.ne.s32.totalorder %s52, %s53
      %p62 = scmp.eq.s32.totalorder %s21, 0
      %p63 = por %p61, %p62
      %p64 = scmp.ne.s32.totalorder %s52, %s53
      %p65 = scmp.eq.s32.totalorder %s22, 1
      %p66 = por %p64, %p65
      %p68 = scmp.ne.s32.totalorder %s53, %s67
      %p69 = scmp.eq.s32.totalorder %s22, 0
      %p70 = por %p68, %p69
      %s72 = sadd.s32 %s71, 1
      %p75 = scmp.eq.s32.totalorder %s16, 1
      %p76 = scmp.ne.s32.totalorder %s71, %s73
      %p77 = scmp.eq.s32.totalorder %s16, 0
      %p78 = por %p76, %p77
      %p79 = scmp.ne.s32.totalorder %s71, %s73
      %p80 = scmp.eq.s32.totalorder %s21, 1
      %p81 = por %p79, %p80
      %p82 = scmp.ne.s32.totalorder %s73, %s74
      %p83 = scmp.eq.s32.totalorder %s21, 0
      %p84 = por %p82, %p83
      %p85 = scmp.ne.s32.totalorder %s73, %s74
      %p86 = scmp.eq.s32.totalorder %s22, 1
      %p87 = por %p85, %p86
      %p89 = scmp.ne.s32.totalorder %s74, %s88
      %p90 = scmp.eq.s32.totalorder %s22, 0
      %p91 = por %p89, %p90
      %s93 = sadd.s32 %s92, 1
      %p96 = scmp.eq.s32.totalorder %s16, 1
      %p97 = scmp.ne.s32.totalorder %s92, %s94
      %p98 = scmp.eq.s32.totalorder %s16, 0
      %p99 = por %p97, %p98
      %p100 = scmp.ne.s32.totalorder %s92, %s94
      %p101 = scmp.eq.s32.totalorder %s21, 1
      %p102 = por %p100, %p101
      %p103 = scmp.ne.s32.totalorder %s94, %s95
      %p104 = scmp.eq.s32.totalorder %s21, 0
      %p105 = por %p103, %p104
      %p106 = scmp.ne.s32.totalorder %s94, %s95
      %p107 = scmp.eq.s32.totalorder %s22, 1
      %p108 = por %p106, %p107
      %p110 = scmp.ne.s32.totalorder %s95, %s109
      %p111 = scmp.eq.s32.totalorder %s22, 0
      %p112 = por %p110, %p111
      %s114 = sadd.s32 %s113, 1
      %p117 = scmp.eq.s32.totalorder %s16, 1
      %p118 = scmp.ne.s32.totalorder %s113, %s115
      %p119 = scmp.eq.s32.totalorder %s16, 0
      %p120 = por %p118, %p119
      %p121 = scmp.ne.s32.totalorder %s113, %s115
      %p122 = scmp.eq.s32.totalorder %s21, 1
      %p123 = por %p121, %p122
      %p124 = scmp.ne.s32.totalorder %s115, %s116
      %p125 = scmp.eq.s32.totalorder %s21, 0
      %p126 = por %p124, %p125
      %p127 = scmp.ne.s32.totalorder %s115, %s116
      %p128 = scmp.eq.s32.totalorder %s22, 1
      %p129 = por %p127, %p128
      %p131 = scmp.ne.s32.totalorder %s116, %s130
      %p132 = scmp.eq.s32.totalorder %s22, 0
      %p133 = por %p131, %p132
      %s135 = sadd.s32 %s134, 1
      %p138 = scmp.eq.s32.totalorder %s16, 1
      %p139 = scmp.ne.s32.totalorder %s134, %s136
      %p140 = scmp.eq.s32.totalorder %s16, 0
      %p141 = por %p139, %p140
      %p142 = scmp.ne.s32.totalorder %s134, %s136
      %p143 = scmp.eq.s32.totalorder %s21, 1
      %p144 = por %p142, %p143
      %p145 = scmp.ne.s32.totalorder %s136, %s137
      %p146 = scmp.eq.s32.totalorder %s21, 0
      %p147 = por %p145, %p146
      %p148 = scmp.ne.s32.totalorder %s136, %s137
      %p149 = scmp.eq.s32.totalorder %s22, 1
      %p150 = por %p148, %p149
      %p152 = scmp.ne.s32.totalorder %s137, %s151
      %p153 = scmp.eq.s32.totalorder %s22, 0
      %p154 = por %p152, %p153
      %s156 = sadd.s32 %s155, 1
      %p159 = scmp.eq.s32.totalorder %s16, 1
      %p160 = scmp.ne.s32.totalorder %s155, %s157
      %p161 = scmp.eq.s32.totalorder %s16, 0
      %p162 = por %p160, %p161
      %p163 = scmp.ne.s32.totalorder %s155, %s157
      %p164 = scmp.eq.s32.totalorder %s21, 1
      %p165 = por %p163, %p164
      %p166 = scmp.ne.s32.totalorder %s157, %s158
      %p167 = scmp.eq.s32.totalorder %s21, 0
      %p168 = por %p166, %p167
      %p169 = scmp.ne.s32.totalorder %s157, %s158
      %p170 = scmp.eq.s32.totalorder %s22, 1
      %p171 = por %p169, %p170
      %p173 = scmp.ne.s32.totalorder %s158, %s172
      %p174 = scmp.eq.s32.totalorder %s22, 0
      %p175 = por %p173, %p174
      %s176 = ssub.s32 %s16, %s23
      %p177 = scmp.eq.s32.totalorder %s176, 0
      %s179 = sadd.s32 %s178, 1
      %s180 = scalar_select %p177, %s178, %s179
      %p183 = pneg %p177
      %p184 = scmp.eq.s32.totalorder %s16, 1
      %p185 = por %p183, %p184
      %p186 = scmp.ne.s32.totalorder %s178, %s181
      %p187 = scmp.eq.s32.totalorder %s16, 0
      %p188 = por %p186, %p187
      %p189 = scmp.ne.s32.totalorder %s178, %s181
      %p190 = scmp.eq.s32.totalorder %s21, 1
      %p191 = por %p189, %p190
      %p192 = scmp.ne.s32.totalorder %s181, %s182
      %p193 = scmp.eq.s32.totalorder %s21, 0
      %p194 = por %p192, %p193
      %p195 = scmp.ne.s32.totalorder %s181, %s182
      %p196 = scmp.eq.s32.totalorder %s22, 1
      %p197 = por %p195, %p196
      %p199 = scmp.ne.s32.totalorder %s182, %s198
      %p200 = scmp.eq.s32.totalorder %s22, 0
      %p201 = por %p199, %p200
      %p202 = scmp.le.s32.totalorder 1, %s16
      %p203 = scmp.lt.s32.totalorder %s16, 3
      %p204 = pnand %p202, %p203
      %p205 = pneg %p204
      // Predicated region
      $region9: #{transformer_decoder_layer.5} parent=5 // pred_check
        _
      $region10: #{transformer_decoder_layer.5} parent=5 // pred_check_branch
        %207 = sbr.rel (%p204) target = $region12
      $region11: #{transformer_decoder_layer.5} parent=5 // pred_region
        %s208 = ssub.s32 %s16, 1
        // Predicated region
        $region13: #{transformer_decoder_layer.5} parent=11 // pred_check
          %p209 = pneg %p63
        $region14: #{transformer_decoder_layer.5} parent=11 // pred_check_branch
          %211 = sbr.rel (%p209) target = $region16
        $region15: #{transformer_decoder_layer.5} parent=11 // pred_region
          _
        $region16: #{transformer_decoder_layer.5} parent=11 // pred_fallthru
          _
        // Predicated region
        $region17: #{transformer_decoder_layer.5} parent=11 // pred_check
          %p212 = pneg %p84
        $region18: #{transformer_decoder_layer.5} parent=11 // pred_check_branch
          %214 = sbr.rel (%p212) target = $region20
        $region19: #{transformer_decoder_layer.5} parent=11 // pred_region
          _
        $region20: #{transformer_decoder_layer.5} parent=11 // pred_fallthru
          _
        // Predicated region
        $region21: #{transformer_decoder_layer.5} parent=11 // pred_check
          %p215 = pneg %p105
        $region22: #{transformer_decoder_layer.5} parent=11 // pred_check_branch
          %217 = sbr.rel (%p215) target = $region24
        $region23: #{transformer_decoder_layer.5} parent=11 // pred_region
          _
        $region24: #{transformer_decoder_layer.5} parent=11 // pred_fallthru
          _
        // Predicated region
        $region25: #{transformer_decoder_layer.5} parent=11 // pred_check
          %p218 = pneg %p126
        $region26: #{transformer_decoder_layer.5} parent=11 // pred_check_branch
          %220 = sbr.rel (%p218) target = $region28
        $region27: #{transformer_decoder_layer.5} parent=11 // pred_region
          _
        $region28: #{transformer_decoder_layer.5} parent=11 // pred_fallthru
          _
        // Predicated region
        $region29: #{transformer_decoder_layer.5} parent=11 // pred_check
          %p221 = pneg %p147
        $region30: #{transformer_decoder_layer.5} parent=11 // pred_check_branch
          %223 = sbr.rel (%p221) target = $region32
        $region31: #{transformer_decoder_layer.5} parent=11 // pred_region
          _
        $region32: #{transformer_decoder_layer.5} parent=11 // pred_fallthru
          _
        // Predicated region
        $region33: #{transformer_decoder_layer.5} parent=11 // pred_check
          %p224 = pneg %p168
        $region34: #{transformer_decoder_layer.5} parent=11 // pred_check_branch
          %226 = sbr.rel (%p224) target = $region36
        $region35: #{transformer_decoder_layer.5} parent=11 // pred_region
          _
        $region36: #{transformer_decoder_layer.5} parent=11 // pred_fallthru
          _
      $region12: #{transformer_decoder_layer.5} parent=5 // pred_fallthru
        _
      %p227 = scmp.lt.s32.totalorder %s16, 2
      // Predicated region
      $region37: #{transformer_decoder_layer.5} parent=5 // pred_check
        %p228 = pneg %p227
      $region38: #{transformer_decoder_layer.5} parent=5 // pred_check_branch
        %230 = sbr.rel (%p228) target = $region40
      $region39: #{transformer_decoder_layer.5} parent=5 // pred_region
        // Predicated region
        $region41: #{transformer_decoder_layer.5} parent=39 // pred_check
          %p231 = pneg %p36
        $region42: #{transformer_decoder_layer.5} parent=39 // pred_check_branch
          %233 = sbr.rel (%p231) target = $region44
        $region43: #{transformer_decoder_layer.5} parent=39 // pred_region
          %p234 = scmp.lt.s32.totalorder %s16, 1
          %s235 = scalar_select %p234, %s16, 1
          %s236 = smul.addr %s235, 8
          %s237 = scalar_lea.vmem %s0, %s236
        $region44: #{transformer_decoder_layer.5} parent=39 // pred_fallthru
          _
      $region40: #{transformer_decoder_layer.5} parent=5 // pred_fallthru
        _
      %p238 = scmp.le.s32.totalorder 1, %s16
      %p239 = scmp.lt.s32.totalorder %s16, 3
      %p240 = pnand %p238, %p239
      %p241 = pneg %p240
      // Predicated region
      $region45: #{transformer_decoder_layer.5} parent=5 // pred_check
        _
      $region46: #{transformer_decoder_layer.5} parent=5 // pred_check_branch
        %243 = sbr.rel (%p240) target = $region48
      $region47: #{transformer_decoder_layer.5} parent=5 // pred_region
        %s244 = ssub.s32 %s16, 1
        %p245 = scmp.lt.s32.totalorder %s21, 1
        %s246 = scalar_select %p245, %s21, 1
        %s247 = smul.addr %s246, 8
        %s248 = scalar_lea.vmem %s0, %s247
        %p249 = pneg %p42
        %p250 = pneg %p39
        %p251 = pneg %p63
        %p252 = pneg %p60
        %p253 = pneg %p84
        %p254 = pneg %p81
        %p255 = pneg %p105
        %p256 = pneg %p102
        %p257 = pneg %p126
        %p258 = pneg %p123
        %p259 = pneg %p147
        %p260 = pneg %p144
        %p261 = pneg %p168
        %p262 = pneg %p165
        %p263 = pneg %p194
        %p264 = pneg %p191
        %s265 = sand.u32 %s181, 1
        %s266 = scalar_lea.sflag [#allocation3], %s265
        %s267 = sand.u32 %s181, 1
        %s268 = smul.addr %s267, 8
        %s269 = scalar_lea.vmem [#allocation2], %s268
        %p270 = scmp.lt.s32.totalorder %s21, 1
        %s271 = scalar_select %p270, %s21, 1
        %s272 = smul.addr %s271, 8
        %s273 = scalar_lea.vmem %s0, %s272
        %v274 = vld [vmem:[%s273] sm:$0xff]
        %v275 = vld [vmem:[%s1] sm:$0xff]
        %v276 = vld [vmem:[%s1 + $0x8] sm:$0xff]
        %v277 = vld [vmem:[%s1 + $0x10] sm:$0xff]
        %v278 = vld [vmem:[%s1 + $0x18] sm:$0xff]
        %v279 = vld [vmem:[%s2] sm:$0x1]
        %v281 = vlaneseq
        %v282 = vshrl.u32 %v281, 7
        %v283 = vsub.s32 0, %v282
        %v284 = vrot.slane %v279, %v283
        %vm286 = vcmask 261120
        %v288 = vsel %vm286, %v274, 0
        %290 = vmatprep.subr.mxu0 0.0
        %291 = vmatpush1.msra.mxu0 %v275
        %292 = vmatprep.subr.mxu0 0.0
        %293 = vmatpush1.msra.mxu0 %v276
        %294 = vmatprep.subr.mxu0 0.0
        %295 = vmatpush1.msra.mxu0 %v277
        %296 = vmatprep.subr.mxu0 0.0
        %297 = vmatpush1.msra.mxu0 %v278
        %298 = vmatprep.subr.mxu0 0.0
        %299 = vmatpush1.msra.mxu0 0.0
        %300 = vmatprep.subr.mxu0 0.0
        %301 = vmatpush1.msra.mxu0 0.0
        %302 = vmatprep.subr.mxu0 0.0
        %303 = vmatpush1.msra.mxu0 0.0
        %304 = vmatprep.subr.mxu0 0.0
        %305 = vmatpush1.msra.mxu0 0.0
        %306 = vmatprep.subr.mxu0 0.0
        %307 = vmatpush1.msra.mxu0 0.0
        %308 = vmatprep.subr.mxu0 0.0
        %309 = vmatpush1.msra.mxu0 0.0
        %310 = vmatprep.subr.mxu0 0.0
        %311 = vmatpush1.msra.mxu0 0.0
        %312 = vmatprep.subr.mxu0 0.0
        %313 = vmatpush1.msra.mxu0 0.0
        %314 = vmatprep.subr.mxu0 0.0
        %315 = vmatpush1.msra.mxu0 0.0
        %316 = vmatprep.subr.mxu0 0.0
        %317 = vmatpush1.msra.mxu0 0.0
        %318 = vmatprep.subr.mxu0 0.0
        %319 = vmatpush1.msra.mxu0 0.0
        %320 = vmatprep.subr.mxu0 0.0
        %321 = vmatpush1.msra.mxu0 0.0
        %322 = vmatprep.subr.mxu0 0.0
        %323 = vmatpush1.msra.mxu0 0.0
        %324 = vmatprep.subr.mxu0 0.0
        %325 = vmatpush1.msra.mxu0 0.0
        %326 = vmatprep.subr.mxu0 0.0
        %327 = vmatpush1.msra.mxu0 0.0
        %328 = vmatprep.subr.mxu0 0.0
        %329 = vmatpush1.msra.mxu0 0.0
        %330 = vmatprep.subr.mxu0 0.0
        %331 = vmatpush1.msra.mxu0 0.0
        %332 = vmatprep.subr.mxu0 0.0
        %333 = vmatpush1.msra.mxu0 0.0
        %334 = vmatprep.subr.mxu0 0.0
        %335 = vmatpush1.msra.mxu0 0.0
        %336 = vmatprep.subr.mxu0 0.0
        %337 = vmatpush1.msra.mxu0 0.0
        %338 = vmatprep.subr.mxu0 0.0
        %339 = vmatpush1.msra.mxu0 0.0
        %340 = vmatprep.subr.mxu0 0.0
        %341 = vmatpush1.msra.mxu0 0.0
        %342 = vmatprep.subr.mxu0 0.0
        %343 = vmatpush1.msra.mxu0 0.0
        %344 = vmatprep.subr.mxu0 0.0
        %345 = vmatpush1.msra.mxu0 0.0
        %346 = vmatprep.subr.mxu0 0.0
        %347 = vmatpush1.msra.mxu0 0.0
        %348 = vmatprep.subr.mxu0 0.0
        %349 = vmatpush1.msra.mxu0 0.0
        %350 = vmatprep.subr.mxu0 0.0
        %351 = vmatpush1.msra.mxu0 0.0
        %352 = vmatprep.subr.mxu0 0.0
        %353 = vmatpush1.msra.mxu0 0.0
        %354 = vmatprep.mubr.f32.mxu0 0.0
        %355 = vmatmul.mubr.f32.gmra.mrb[0].mxu0 %v288
        %v356 = vpop.f32.mrb[0].mxu0
        %v357 = vadd.f32 %v284, %v356
        %v358 = vpop.f32.mrb[0].mxu0
        %359 = vdwg.mxu0
        %v360 = vmax.f32 %v357, 0.0
        %v361 = vld [vmem:[%s3] sm:$0xff]
        %v362 = vld [vmem:[%s3 + $0x8] sm:$0xff]
        %v363 = vld [vmem:[%s3 + $0x10] sm:$0xff]
        %v364 = vld [vmem:[%s3 + $0x18] sm:$0xff]
        %v365 = vld [vmem:[%s3 + $0x20] sm:$0xff]
        %v366 = vld [vmem:[%s3 + $0x28] sm:$0xff]
        %v367 = vld [vmem:[%s3 + $0x30] sm:$0xff]
        %v368 = vld [vmem:[%s3 + $0x38] sm:$0xff]
        %v369 = vld [vmem:[%s4] sm:$0x1]
        %v371 = vlaneseq
        %v372 = vshrl.u32 %v371, 7
        %v373 = vsub.s32 0, %v372
        %v374 = vrot.slane %v369, %v373
        %vm376 = vcmask 523264
        %v378 = vsel %vm376, %v360, 0
        %380 = vmatprep.subr.mxu0 0.0
        %381 = vmatpush1.msra.mxu0 %v361
        %382 = vmatprep.subr.mxu0 0.0
        %383 = vmatpush1.msra.mxu0 %v362
        %384 = vmatprep.subr.mxu0 0.0
        %385 = vmatpush1.msra.mxu0 %v363
        %386 = vmatprep.subr.mxu0 0.0
        %387 = vmatpush1.msra.mxu0 %v364
        %388 = vmatprep.subr.mxu0 0.0
        %389 = vmatpush1.msra.mxu0 %v365
        %390 = vmatprep.subr.mxu0 0.0
        %391 = vmatpush1.msra.mxu0 %v366
        %392 = vmatprep.subr.mxu0 0.0
        %393 = vmatpush1.msra.mxu0 %v367
        %394 = vmatprep.subr.mxu0 0.0
        %395 = vmatpush1.msra.mxu0 %v368
        %396 = vmatprep.subr.mxu0 0.0
        %397 = vmatpush1.msra.mxu0 0.0
        %398 = vmatprep.subr.mxu0 0.0
        %399 = vmatpush1.msra.mxu0 0.0
        %400 = vmatprep.subr.mxu0 0.0
        %401 = vmatpush1.msra.mxu0 0.0
        %402 = vmatprep.subr.mxu0 0.0
        %403 = vmatpush1.msra.mxu0 0.0
        %404 = vmatprep.subr.mxu0 0.0
        %405 = vmatpush1.msra.mxu0 0.0
        %406 = vmatprep.subr.mxu0 0.0
        %407 = vmatpush1.msra.mxu0 0.0
        %408 = vmatprep.subr.mxu0 0.0
        %409 = vmatpush1.msra.mxu0 0.0
        %410 = vmatprep.subr.mxu0 0.0
        %411 = vmatpush1.msra.mxu0 0.0
        %412 = vmatprep.subr.mxu0 0.0
        %413 = vmatpush1.msra.mxu0 0.0
        %414 = vmatprep.subr.mxu0 0.0
        %415 = vmatpush1.msra.mxu0 0.0
        %416 = vmatprep.subr.mxu0 0.0
        %417 = vmatpush1.msra.mxu0 0.0
        %418 = vmatprep.subr.mxu0 0.0
        %419 = vmatpush1.msra.mxu0 0.0
        %420 = vmatprep.subr.mxu0 0.0
        %421 = vmatpush1.msra.mxu0 0.0
        %422 = vmatprep.subr.mxu0 0.0
        %423 = vmatpush1.msra.mxu0 0.0
        %424 = vmatprep.subr.mxu0 0.0
        %425 = vmatpush1.msra.mxu0 0.0
        %426 = vmatprep.subr.mxu0 0.0
        %427 = vmatpush1.msra.mxu0 0.0
        %428 = vmatprep.subr.mxu0 0.0
        %429 = vmatpush1.msra.mxu0 0.0
        %430 = vmatprep.subr.mxu0 0.0
        %431 = vmatpush1.msra.mxu0 0.0
        %432 = vmatprep.subr.mxu0 0.0
        %433 = vmatpush1.msra.mxu0 0.0
        %434 = vmatprep.subr.mxu0 0.0
        %435 = vmatpush1.msra.mxu0 0.0
        %436 = vmatprep.subr.mxu0 0.0
        %437 = vmatpush1.msra.mxu0 0.0
        %438 = vmatprep.subr.mxu0 0.0
        %439 = vmatpush1.msra.mxu0 0.0
        %440 = vmatprep.subr.mxu0 0.0
        %441 = vmatpush1.msra.mxu0 0.0
        %442 = vmatprep.subr.mxu0 0.0
        %443 = vmatpush1.msra.mxu0 0.0
        %444 = vmatprep.mubr.f32.mxu0 0.0
        %445 = vmatmul.mubr.f32.gmra.mrb[0].mxu0 %v378
        %v446 = vpop.f32.mrb[0].mxu0
        %v447 = vadd.f32 %v374, %v446
        %v448 = vpop.f32.mrb[0].mxu0
        %449 = vdwg.mxu0
        %v450 = vadd.f32 %v274, %v447
        %v451 = vsel %vm286, %v450, 0.0
        %452 = vadd.xlane.f32.xlu0 %v451
        %v453 = vpop.xlane.xlu0 %452
        %v454 = vrcp.pop 32.0
        %v455 = vmul.f32 %v453, %v454
        %v456 = vsub.f32 %v450, %v455
        %v457 = vmul.f32 %v456, %v456
        %v458 = vsel %vm286, %v457, 0.0
        %459 = vadd.xlane.f32.xlu0 %v458
        %v460 = vpop.xlane.xlu0 %459
        %v461 = vmul.f32 %v460, %v454
        %v462 = vadd.f32 %v461, 1e-05
        %v463 = vrsqrt.pop %v462
        %v464 = vmul.f32 %v456, %v463
        %v465 = vld [vmem:[%s5] sm:$0x1]
        %v467 = vlaneseq
        %v468 = vshrl.u32 %v467, 7
        %v469 = vsub.s32 0, %v468
        %v470 = vrot.slane %v465, %v469
        %v472 = vmul.f32 %v464, %v470
        %v473 = vld [vmem:[%s6] sm:$0x1]
        %v475 = vlaneseq
        %v476 = vshrl.u32 %v475, 7
        %v477 = vsub.s32 0, %v476
        %v478 = vrot.slane %v473, %v477
        %v480 = vadd.f32 %v472, %v478
        %481 = vst.msk [vmem:[%s269] sm:$0xff] %vm286, %v480
        %s482 = sand.u32 %s181, 1
        %s483 = scalar_lea.sflag [#allocation3], %s482
        %s484 = sand.u32 %s181, 1
        %s485 = smul.addr %s484, 8
        %s486 = scalar_lea.vmem [#allocation2], %s485
        // Predicated region
        $region49: #{transformer_decoder_layer.5} parent=47 // pred_check
          %p487 = pneg %p191
        $region50: #{transformer_decoder_layer.5} parent=47 // pred_check_branch
          %489 = sbr.rel (%p487) target = $region52
        $region51: #{transformer_decoder_layer.5} parent=47 // pred_region
          %s491 = ssub.s32 128, 128
          %492 = vsyncadd %s483, %s491
          %s493 = smul.addr %s21, 128
          %s494 = scalar_lea.hbm %s7, %s493
          %s496 = sshll.u32 %s486, 4
          %s497 = int_to_ptr.vmem [resolvable:$true] %s496
          %499 = dma.vmem_to_hbm [thread:$0]  %s497, 128, %s494, %s483
        $region52: #{transformer_decoder_layer.5} parent=47 // pred_fallthru
          _
      $region48: #{transformer_decoder_layer.5} parent=5 // pred_fallthru
        _
      %p500 = scmp.le.s32.totalorder 2, %s16
      // Predicated region
      $region53: #{transformer_decoder_layer.5} parent=5 // pred_check
        %p501 = pneg %p500
      $region54: #{transformer_decoder_layer.5} parent=5 // pred_check_branch
        %503 = sbr.rel (%p501) target = $region56
      $region55: #{transformer_decoder_layer.5} parent=5 // pred_region
        %s504 = ssub.s32 %s16, 2
        // Predicated region
        $region57: #{transformer_decoder_layer.5} parent=55 // pred_check
          %p505 = pneg %p197
        $region58: #{transformer_decoder_layer.5} parent=55 // pred_check_branch
          %507 = sbr.rel (%p505) target = $region60
        $region59: #{transformer_decoder_layer.5} parent=55 // pred_region
          %s508 = sand.u32 %s182, 1
          %s509 = scalar_lea.sflag [#allocation3], %s508
          %s510 = sand.u32 %s182, 1
          %s511 = smul.addr %s510, 8
          %s512 = scalar_lea.vmem [#allocation2], %s511
          %513 = dma.done %s509, 128
        $region60: #{transformer_decoder_layer.5} parent=55 // pred_fallthru
          _
      $region56: #{transformer_decoder_layer.5} parent=5 // pred_fallthru
        _
    $region6: #{transformer_decoder_layer.5} parent=1 // loop_footer
      %s20 = sadd.s32 1, %s16
    $region7: #{transformer_decoder_layer.5} parent=1 // loop_footer_branch
      %15 = sbr.rel target = $region3
    $region8: #{transformer_decoder_layer.5} parent=1 // loop_exit
      _
    %514 = vsyncpa [#allocation3], 1
    %s515 = scalar_lea.sflag [#allocation3], 1
    %516 = vsyncpa %s515, 1

// kernel: transformer_decoder_layer.3
$region0: #{transformer_decoder_layer.3}
  #allocation0 [shape = 'u32[]', space=smem, size = 0x4, offset = 0x4, fixed_abs, tag = 'smem constant byte address 0x4 - core index']
  #allocation1 [shape = 'u32[144,128]{1,0:T(1,128)}', space=vmem, size = 0x12000, scoped, tag = 'internal scratch']
  %s0 = inlined_call_operand.vmem [shape: f32[2,8,32], index: 0, kind: input, shape index: {}, may-alias: {0,2}]
  %s1 = inlined_call_operand.vmem [shape: f32[2,8,32], index: 1, kind: input, shape index: {}, may-alias: {1,3}]
  %s2 = inlined_call_operand.vmem [shape: f32[2,8,32], index: 2, kind: input, shape index: {}, may-alias: {0,2}]
  %s3 = inlined_call_operand.vmem [shape: f32[2,8,32], index: 3, kind: input, shape index: {}, may-alias: {1,3}]
  %s4 = inlined_call_operand.vmem [shape: f32[32,32], index: 4, kind: input, shape index: {}]
  %s5 = inlined_call_operand.vmem [shape: f32[1,32], index: 5, kind: input, shape index: {}]
  %s6 = inlined_call_operand.vmem [shape: f32[32,64], index: 6, kind: input, shape index: {}]
  %s7 = inlined_call_operand.vmem [shape: f32[1,64], index: 7, kind: input, shape index: {}]
  %s8 = inlined_call_operand.vmem [shape: f32[32,32], index: 8, kind: input, shape index: {}]
  %s9 = inlined_call_operand.vmem [shape: f32[1,32], index: 9, kind: input, shape index: {}]
  %s10 = inlined_call_operand.vmem [shape: f32[1,32], index: 10, kind: input, shape index: {}]
  %s11 = inlined_call_operand.vmem [shape: f32[1,32], index: 11, kind: input, shape index: {}]
  %s12 = inlined_call_operand.vmem [shape: f32[2,8,32], index: 12, kind: output, shape index: {}]
  %s13 = sld [smem:[#allocation0]]
  $region81: #{transformer_decoder_layer.3} parent=0
    _
  %s15 = ssub.s32 1, %s13
  %s16 = scalar_select 0, %s15, %s13
  loop: start=0, step=1, limit=4
  $region2: #{transformer_decoder_layer.3} parent=0 // loop_pre_header
    _
  $region3: #{transformer_decoder_layer.3} parent=0 // loop_header
    %s18 = sphi 0, %s22
    %p19 = scmp.ge.s32.totalorder %s18, 4
    %s28 = sphi 0, %s30
    %s31 = sphi 0, %s28
    %s32 = sphi 0, %s31
    %s48 = sphi 0, %s32
    %s54 = sphi 0, %s56
    %s57 = sphi 0, %s54
    %s58 = sphi 0, %s57
    %s74 = sphi 0, %s58
    %s80 = sphi 0, %s82
    %s83 = sphi 0, %s80
    %s84 = sphi 0, %s83
    %s100 = sphi 0, %s84
    %s106 = sphi 0, %s108
    %s109 = sphi 0, %s106
    %s110 = sphi 0, %s109
    %s126 = sphi 0, %s110
    %s130 = sphi 0, %s130
    %s132 = sphi 0, %s130
    %s133 = sphi 0, %s132
    %s147 = sphi 0, %s133
    %s151 = sphi 0, %s151
    %s153 = sphi 0, %s151
    %s154 = sphi 0, %s153
    %s168 = sphi 0, %s154
    %s172 = sphi 0, %s172
    %s174 = sphi 0, %s172
    %s175 = sphi 0, %s174
    %s189 = sphi 0, %s175
    %s193 = sphi 0, %s193
    %s195 = sphi 0, %s193
    %s196 = sphi 0, %s195
    %s210 = sphi 0, %s196
    %s214 = sphi 0, %s214
    %s216 = sphi 0, %s214
    %s217 = sphi 0, %s216
    %s231 = sphi 0, %s217
    %s235 = sphi 0, %s235
    %s237 = sphi 0, %s235
    %s238 = sphi 0, %s237
    %s252 = sphi 0, %s238
    %s256 = sphi 0, %s256
    %s258 = sphi 0, %s256
    %s259 = sphi 0, %s258
    %s273 = sphi 0, %s259
    %s277 = sphi 0, %s277
    %s279 = sphi 0, %s277
    %s280 = sphi 0, %s279
    %s294 = sphi 0, %s280
    %s300 = sphi 0, %s302
    %s303 = sphi 0, %s300
    %s304 = sphi 0, %s303
    %s320 = sphi 0, %s304
  $region4: #{transformer_decoder_layer.3} parent=0 // loop_header_branch
    %21 = sbr.rel (%p19) target = $region8
  $region5: #{transformer_decoder_layer.3} parent=0 // loop_body
    %s23 = ssub.s32 %s18, 1
    %s24 = ssub.s32 %s18, 2
    %s25 = sadd.s32 %s18, 1
    %s26 = ssub.s32 %s18, %s25
    %p27 = scmp.eq.s32.totalorder %s26, 0
    %s29 = sadd.s32 %s28, 1
    %s30 = scalar_select %p27, %s28, %s29
    %p33 = pneg %p27
    %p34 = scmp.eq.s32.totalorder %s18, 1
    %p35 = por %p33, %p34
    %p36 = scmp.ne.s32.totalorder %s28, %s31
    %p37 = scmp.eq.s32.totalorder %s18, 0
    %p38 = por %p36, %p37
    %p39 = scmp.ne.s32.totalorder %s28, %s31
    %p40 = scmp.eq.s32.totalorder %s23, 1
    %p41 = por %p39, %p40
    %p42 = scmp.ne.s32.totalorder %s31, %s32
    %p43 = scmp.eq.s32.totalorder %s23, 0
    %p44 = por %p42, %p43
    %p45 = scmp.ne.s32.totalorder %s31, %s32
    %p46 = scmp.eq.s32.totalorder %s24, 1
    %p47 = por %p45, %p46
    %p49 = scmp.ne.s32.totalorder %s32, %s48
    %p50 = scmp.eq.s32.totalorder %s24, 0
    %p51 = por %p49, %p50
    %s52 = ssub.s32 %s18, %s25
    %p53 = scmp.eq.s32.totalorder %s52, 0
    %s55 = sadd.s32 %s54, 1
    %s56 = scalar_select %p53, %s54, %s55
    %p59 = pneg %p53
    %p60 = scmp.eq.s32.totalorder %s18, 1
    %p61 = por %p59, %p60
    %p62 = scmp.ne.s32.totalorder %s54, %s57
    %p63 = scmp.eq.s32.totalorder %s18, 0
    %p64 = por %p62, %p63
    %p65 = scmp.ne.s32.totalorder %s54, %s57
    %p66 = scmp.eq.s32.totalorder %s23, 1
    %p67 = por %p65, %p66
    %p68 = scmp.ne.s32.totalorder %s57, %s58
    %p69 = scmp.eq.s32.totalorder %s23, 0
    %p70 = por %p68, %p69
    %p71 = scmp.ne.s32.totalorder %s57, %s58
    %p72 = scmp.eq.s32.totalorder %s24, 1
    %p73 = por %p71, %p72
    %p75 = scmp.ne.s32.totalorder %s58, %s74
    %p76 = scmp.eq.s32.totalorder %s24, 0
    %p77 = por %p75, %p76
    %s78 = ssub.s32 %s18, %s25
    %p79 = scmp.eq.s32.totalorder %s78, 0
    %s81 = sadd.s32 %s80, 1
    %s82 = scalar_select %p79, %s80, %s81
    %p85 = pneg %p79
    %p86 = scmp.eq.s32.totalorder %s18, 1
    %p87 = por %p85, %p86
    %p88 = scmp.ne.s32.totalorder %s80, %s83
    %p89 = scmp.eq.s32.totalorder %s18, 0
    %p90 = por %p88, %p89
    %p91 = scmp.ne.s32.totalorder %s80, %s83
    %p92 = scmp.eq.s32.totalorder %s23, 1
    %p93 = por %p91, %p92
    %p94 = scmp.ne.s32.totalorder %s83, %s84
    %p95 = scmp.eq.s32.totalorder %s23, 0
    %p96 = por %p94, %p95
    %p97 = scmp.ne.s32.totalorder %s83, %s84
    %p98 = scmp.eq.s32.totalorder %s24, 1
    %p99 = por %p97, %p98
    %p101 = scmp.ne.s32.totalorder %s84, %s100
    %p102 = scmp.eq.s32.totalorder %s24, 0
    %p103 = por %p101, %p102
    %s104 = ssub.s32 %s18, %s25
    %p105 = scmp.eq.s32.totalorder %s104, 0
    %s107 = sadd.s32 %s106, 1
    %s108 = scalar_select %p105, %s106, %s107
    %p111 = pneg %p105
    %p112 = scmp.eq.s32.totalorder %s18, 1
    %p113 = por %p111, %p112
    %p114 = scmp.ne.s32.totalorder %s106, %s109
    %p115 = scmp.eq.s32.totalorder %s18, 0
    %p116 = por %p114, %p115
    %p117 = scmp.ne.s32.totalorder %s106, %s109
    %p118 = scmp.eq.s32.totalorder %s23, 1
    %p119 = por %p117, %p118
    %p120 = scmp.ne.s32.totalorder %s109, %s110
    %p121 = scmp.eq.s32.totalorder %s23, 0
    %p122 = por %p120, %p121
    %p123 = scmp.ne.s32.totalorder %s109, %s110
    %p124 = scmp.eq.s32.totalorder %s24, 1
    %p125 = por %p123, %p124
    %p127 = scmp.ne.s32.totalorder %s110, %s126
    %p128 = scmp.eq.s32.totalorder %s24, 0
    %p129 = por %p127, %p128
    %s131 = sadd.s32 %s130, 1
    %p134 = scmp.eq.s32.totalorder %s18, 1
    %p135 = scmp.ne.s32.totalorder %s130, %s132
    %p136 = scmp.eq.s32.totalorder %s18, 0
    %p137 = por %p135, %p136
    %p138 = scmp.ne.s32.totalorder %s130, %s132
    %p139 = scmp.eq.s32.totalorder %s23, 1
    %p140 = por %p138, %p139
    %p141 = scmp.ne.s32.totalorder %s132, %s133
    %p142 = scmp.eq.s32.totalorder %s23, 0
    %p143 = por %p141, %p142
    %p144 = scmp.ne.s32.totalorder %s132, %s133
    %p145 = scmp.eq.s32.totalorder %s24, 1
    %p146 = por %p144, %p145
    %p148 = scmp.ne.s32.totalorder %s133, %s147
    %p149 = scmp.eq.s32.totalorder %s24, 0
    %p150 = por %p148, %p149
    %s152 = sadd.s32 %s151, 1
    %p155 = scmp.eq.s32.totalorder %s18, 1
    %p156 = scmp.ne.s32.totalorder %s151, %s153
    %p157 = scmp.eq.s32.totalorder %s18, 0
    %p158 = por %p156, %p157
    %p159 = scmp.ne.s32.totalorder %s151, %s153
    %p160 = scmp.eq.s32.totalorder %s23, 1
    %p161 = por %p159, %p160
    %p162 = scmp.ne.s32.totalorder %s153, %s154
    %p163 = scmp.eq.s32.totalorder %s23, 0
    %p164 = por %p162, %p163
    %p165 = scmp.ne.s32.totalorder %s153, %s154
    %p166 = scmp.eq.s32.totalorder %s24, 1
    %p167 = por %p165, %p166
    %p169 = scmp.ne.s32.totalorder %s154, %s168
    %p170 = scmp.eq.s32.totalorder %s24, 0
    %p171 = por %p169, %p170
    %s173 = sadd.s32 %s172, 1
    %p176 = scmp.eq.s32.totalorder %s18, 1
    %p177 = scmp.ne.s32.totalorder %s172, %s174
    %p178 = scmp.eq.s32.totalorder %s18, 0
    %p179 = por %p177, %p178
    %p180 = scmp.ne.s32.totalorder %s172, %s174
    %p181 = scmp.eq.s32.totalorder %s23, 1
    %p182 = por %p180, %p181
    %p183 = scmp.ne.s32.totalorder %s174, %s175
    %p184 = scmp.eq.s32.totalorder %s23, 0
    %p185 = por %p183, %p184
    %p186 = scmp.ne.s32.totalorder %s174, %s175
    %p187 = scmp.eq.s32.totalorder %s24, 1
    %p188 = por %p186, %p187
    %p190 = scmp.ne.s32.totalorder %s175, %s189
    %p191 = scmp.eq.s32.totalorder %s24, 0
    %p192 = por %p190, %p191
    %s194 = sadd.s32 %s193, 1
    %p197 = scmp.eq.s32.totalorder %s18, 1
    %p198 = scmp.ne.s32.totalorder %s193, %s195
    %p199 = scmp.eq.s32.totalorder %s18, 0
    %p200 = por %p198, %p199
    %p201 = scmp.ne.s32.totalorder %s193, %s195
    %p202 = scmp.eq.s32.totalorder %s23, 1
    %p203 = por %p201, %p202
    %p204 = scmp.ne.s32.totalorder %s195, %s196
    %p205 = scmp.eq.s32.totalorder %s23, 0
    %p206 = por %p204, %p205
    %p207 = scmp.ne.s32.totalorder %s195, %s196
    %p208 = scmp.eq.s32.totalorder %s24, 1
    %p209 = por %p207, %p208
    %p211 = scmp.ne.s32.totalorder %s196, %s210
    %p212 = scmp.eq.s32.totalorder %s24, 0
    %p213 = por %p211, %p212
    %s215 = sadd.s32 %s214, 1
    %p218 = scmp.eq.s32.totalorder %s18, 1
    %p219 = scmp.ne.s32.totalorder %s214, %s216
    %p220 = scmp.eq.s32.totalorder %s18, 0
    %p221 = por %p219, %p220
    %p222 = scmp.ne.s32.totalorder %s214, %s216
    %p223 = scmp.eq.s32.totalorder %s23, 1
    %p224 = por %p222, %p223
    %p225 = scmp.ne.s32.totalorder %s216, %s217
    %p226 = scmp.eq.s32.totalorder %s23, 0
    %p227 = por %p225, %p226
    %p228 = scmp.ne.s32.totalorder %s216, %s217
    %p229 = scmp.eq.s32.totalorder %s24, 1
    %p230 = por %p228, %p229
    %p232 = scmp.ne.s32.totalorder %s217, %s231
    %p233 = scmp.eq.s32.totalorder %s24, 0
    %p234 = por %p232, %p233
    %s236 = sadd.s32 %s235, 1
    %p239 = scmp.eq.s32.totalorder %s18, 1
    %p240 = scmp.ne.s32.totalorder %s235, %s237
    %p241 = scmp.eq.s32.totalorder %s18, 0
    %p242 = por %p240, %p241
    %p243 = scmp.ne.s32.totalorder %s235, %s237
    %p244 = scmp.eq.s32.totalorder %s23, 1
    %p245 = por %p243, %p244
    %p246 = scmp.ne.s32.totalorder %s237, %s238
    %p247 = scmp.eq.s32.totalorder %s23, 0
    %p248 = por %p246, %p247
    %p249 = scmp.ne.s32.totalorder %s237, %s238
    %p250 = scmp.eq.s32.totalorder %s24, 1
    %p251 = por %p249, %p250
    %p253 = scmp.ne.s32.totalorder %s238, %s252
    %p254 = scmp.eq.s32.totalorder %s24, 0
    %p255 = por %p253, %p254
    %s257 = sadd.s32 %s256, 1
    %p260 = scmp.eq.s32.totalorder %s18, 1
    %p261 = scmp.ne.s32.totalorder %s256, %s258
    %p262 = scmp.eq.s32.totalorder %s18, 0
    %p263 = por %p261, %p262
    %p264 = scmp.ne.s32.totalorder %s256, %s258
    %p265 = scmp.eq.s32.totalorder %s23, 1
    %p266 = por %p264, %p265
    %p267 = scmp.ne.s32.totalorder %s258, %s259
    %p268 = scmp.eq.s32.totalorder %s23, 0
    %p269 = por %p267, %p268
    %p270 = scmp.ne.s32.totalorder %s258, %s259
    %p271 = scmp.eq.s32.totalorder %s24, 1
    %p272 = por %p270, %p271
    %p274 = scmp.ne.s32.totalorder %s259, %s273
    %p275 = scmp.eq.s32.totalorder %s24, 0
    %p276 = por %p274, %p275
    %s278 = sadd.s32 %s277, 1
    %p281 = scmp.eq.s32.totalorder %s18, 1
    %p282 = scmp.ne.s32.totalorder %s277, %s279
    %p283 = scmp.eq.s32.totalorder %s18, 0
    %p284 = por %p282, %p283
    %p285 = scmp.ne.s32.totalorder %s277, %s279
    %p286 = scmp.eq.s32.totalorder %s23, 1
    %p287 = por %p285, %p286
    %p288 = scmp.ne.s32.totalorder %s279, %s280
    %p289 = scmp.eq.s32.totalorder %s23, 0
    %p290 = por %p288, %p289
    %p291 = scmp.ne.s32.totalorder %s279, %s280
    %p292 = scmp.eq.s32.totalorder %s24, 1
    %p293 = por %p291, %p292
    %p295 = scmp.ne.s32.totalorder %s280, %s294
    %p296 = scmp.eq.s32.totalorder %s24, 0
    %p297 = por %p295, %p296
    %s298 = ssub.s32 %s18, %s25
    %p299 = scmp.eq.s32.totalorder %s298, 0
    %s301 = sadd.s32 %s300, 1
    %s302 = scalar_select %p299, %s300, %s301
    %p305 = pneg %p299
    %p306 = scmp.eq.s32.totalorder %s18, 1
    %p307 = por %p305, %p306
    %p308 = scmp.ne.s32.totalorder %s300, %s303
    %p309 = scmp.eq.s32.totalorder %s18, 0
    %p310 = por %p308, %p309
    %p311 = scmp.ne.s32.totalorder %s300, %s303
    %p312 = scmp.eq.s32.totalorder %s23, 1
    %p313 = por %p311, %p312
    %p314 = scmp.ne.s32.totalorder %s303, %s304
    %p315 = scmp.eq.s32.totalorder %s23, 0
    %p316 = por %p314, %p315
    %p317 = scmp.ne.s32.totalorder %s303, %s304
    %p318 = scmp.eq.s32.totalorder %s24, 1
    %p319 = por %p317, %p318
    %p321 = scmp.ne.s32.totalorder %s304, %s320
    %p322 = scmp.eq.s32.totalorder %s24, 0
    %p323 = por %p321, %p322
    %p324 = scmp.le.s32.totalorder 1, %s18
    %p325 = scmp.lt.s32.totalorder %s18, 3
    %p326 = pnand %p324, %p325
    %p327 = pneg %p326
    // Predicated region
    $region9: #{transformer_decoder_layer.3} parent=5 // pred_check
      _
    $region10: #{transformer_decoder_layer.3} parent=5 // pred_check_branch
      %329 = sbr.rel (%p326) target = $region12
    $region11: #{transformer_decoder_layer.3} parent=5 // pred_region
      %s330 = ssub.s32 %s18, 1
      // Predicated region
      $region13: #{transformer_decoder_layer.3} parent=11 // pred_check
        %p331 = pneg %p143
      $region14: #{transformer_decoder_layer.3} parent=11 // pred_check_branch
        %333 = sbr.rel (%p331) target = $region16
      $region15: #{transformer_decoder_layer.3} parent=11 // pred_region
        _
      $region16: #{transformer_decoder_layer.3} parent=11 // pred_fallthru
        _
      // Predicated region
      $region17: #{transformer_decoder_layer.3} parent=11 // pred_check
        %p334 = pneg %p164
      $region18: #{transformer_decoder_layer.3} parent=11 // pred_check_branch
        %336 = sbr.rel (%p334) target = $region20
      $region19: #{transformer_decoder_layer.3} parent=11 // pred_region
        _
      $region20: #{transformer_decoder_layer.3} parent=11 // pred_fallthru
        _
      // Predicated region
      $region21: #{transformer_decoder_layer.3} parent=11 // pred_check
        %p337 = pneg %p185
      $region22: #{transformer_decoder_layer.3} parent=11 // pred_check_branch
        %339 = sbr.rel (%p337) target = $region24
      $region23: #{transformer_decoder_layer.3} parent=11 // pred_region
        _
      $region24: #{transformer_decoder_layer.3} parent=11 // pred_fallthru
        _
      // Predicated region
      $region25: #{transformer_decoder_layer.3} parent=11 // pred_check
        %p340 = pneg %p206
      $region26: #{transformer_decoder_layer.3} parent=11 // pred_check_branch
        %342 = sbr.rel (%p340) target = $region28
      $region27: #{transformer_decoder_layer.3} parent=11 // pred_region
        _
      $region28: #{transformer_decoder_layer.3} parent=11 // pred_fallthru
        _
      // Predicated region
      $region29: #{transformer_decoder_layer.3} parent=11 // pred_check
        %p343 = pneg %p227
      $region30: #{transformer_decoder_layer.3} parent=11 // pred_check_branch
        %345 = sbr.rel (%p343) target = $region32
      $region31: #{transformer_decoder_layer.3} parent=11 // pred_region
        _
      $region32: #{transformer_decoder_layer.3} parent=11 // pred_fallthru
        _
      // Predicated region
      $region33: #{transformer_decoder_layer.3} parent=11 // pred_check
        %p346 = pneg %p248
      $region34: #{transformer_decoder_layer.3} parent=11 // pred_check_branch
        %348 = sbr.rel (%p346) target = $region36
      $region35: #{transformer_decoder_layer.3} parent=11 // pred_region
        _
      $region36: #{transformer_decoder_layer.3} parent=11 // pred_fallthru
        _
      // Predicated region
      $region37: #{transformer_decoder_layer.3} parent=11 // pred_check
        %p349 = pneg %p269
      $region38: #{transformer_decoder_layer.3} parent=11 // pred_check_branch
        %351 = sbr.rel (%p349) target = $region40
      $region39: #{transformer_decoder_layer.3} parent=11 // pred_region
        _
      $region40: #{transformer_decoder_layer.3} parent=11 // pred_fallthru
        _
      // Predicated region
      $region41: #{transformer_decoder_layer.3} parent=11 // pred_check
        %p352 = pneg %p290
      $region42: #{transformer_decoder_layer.3} parent=11 // pred_check_branch
        %354 = sbr.rel (%p352) target = $region44
      $region43: #{transformer_decoder_layer.3} parent=11 // pred_region
        _
      $region44: #{transformer_decoder_layer.3} parent=11 // pred_fallthru
        _
    $region12: #{transformer_decoder_layer.3} parent=5 // pred_fallthru
      _
    %p355 = scmp.lt.s32.totalorder %s18, 2
    // Predicated region
    $region45: #{transformer_decoder_layer.3} parent=5 // pred_check
      %p356 = pneg %p355
    $region46: #{transformer_decoder_layer.3} parent=5 // pred_check_branch
      %358 = sbr.rel (%p356) target = $region48
    $region47: #{transformer_decoder_layer.3} parent=5 // pred_region
      // Predicated region
      $region49: #{transformer_decoder_layer.3} parent=47 // pred_check
        %p359 = pneg %p38
      $region50: #{transformer_decoder_layer.3} parent=47 // pred_check_branch
        %361 = sbr.rel (%p359) target = $region52
      $region51: #{transformer_decoder_layer.3} parent=47 // pred_region
        %p362 = scmp.lt.s32.totalorder %s18, 1
        %s363 = scalar_select %p362, %s18, 1
        %s364 = smul.addr %s363, 8
        %s365 = scalar_lea.vmem %s0, %s364
      $region52: #{transformer_decoder_layer.3} parent=47 // pred_fallthru
        _
      // Predicated region
      $region53: #{transformer_decoder_layer.3} parent=47 // pred_check
        %p366 = pneg %p64
      $region54: #{transformer_decoder_layer.3} parent=47 // pred_check_branch
        %368 = sbr.rel (%p366) target = $region56
      $region55: #{transformer_decoder_layer.3} parent=47 // pred_region
        %p369 = scmp.lt.s32.totalorder %s18, 1
        %s370 = scalar_select %p369, %s18, 1
        %s371 = smul.addr %s370, 8
        %s372 = scalar_lea.vmem %s1, %s371
      $region56: #{transformer_decoder_layer.3} parent=47 // pred_fallthru
        _
      // Predicated region
      $region57: #{transformer_decoder_layer.3} parent=47 // pred_check
        %p373 = pneg %p90
      $region58: #{transformer_decoder_layer.3} parent=47 // pred_check_branch
        %375 = sbr.rel (%p373) target = $region60
      $region59: #{transformer_decoder_layer.3} parent=47 // pred_region
        %p376 = scmp.lt.s32.totalorder %s18, 1
        %s377 = scalar_select %p376, %s18, 1
        %s378 = smul.addr %s377, 8
        %s379 = scalar_lea.vmem %s2, %s378
      $region60: #{transformer_decoder_layer.3} parent=47 // pred_fallthru
        _
      // Predicated region
      $region61: #{transformer_decoder_layer.3} parent=47 // pred_check
        %p380 = pneg %p116
      $region62: #{transformer_decoder_layer.3} parent=47 // pred_check_branch
        %382 = sbr.rel (%p380) target = $region64
      $region63: #{transformer_decoder_layer.3} parent=47 // pred_region
        %p383 = scmp.lt.s32.totalorder %s18, 1
        %s384 = scalar_select %p383, %s18, 1
        %s385 = smul.addr %s384, 8
        %s386 = scalar_lea.vmem %s3, %s385
      $region64: #{transformer_decoder_layer.3} parent=47 // pred_fallthru
        _
    $region48: #{transformer_decoder_layer.3} parent=5 // pred_fallthru
      _
    %p387 = scmp.le.s32.totalorder 1, %s18
    %p388 = scmp.lt.s32.totalorder %s18, 3
    %p389 = pnand %p387, %p388
    %p390 = pneg %p389
    // Predicated region
    $region65: #{transformer_decoder_layer.3} parent=5 // pred_check
      _
    $region66: #{transformer_decoder_layer.3} parent=5 // pred_check_branch
      %392 = sbr.rel (%p389) target = $region68
    $region67: #{transformer_decoder_layer.3} parent=5 // pred_region
      %s393 = ssub.s32 %s18, 1
      %p394 = scmp.lt.s32.totalorder %s23, 1
      %s395 = scalar_select %p394, %s23, 1
      %s396 = smul.addr %s395, 8
      %s397 = scalar_lea.vmem %s0, %s396
      %p398 = pneg %p44
      %p399 = pneg %p41
      %p400 = scmp.lt.s32.totalorder %s23, 1
      %s401 = scalar_select %p400, %s23, 1
      %s402 = smul.addr %s401, 8
      %s403 = scalar_lea.vmem %s1, %s402
      %p404 = pneg %p70
      %p405 = pneg %p67
      %p406 = scmp.lt.s32.totalorder %s23, 1
      %s407 = scalar_select %p406, %s23, 1
      %s408 = smul.addr %s407, 8
      %s409 = scalar_lea.vmem %s2, %s408
      %p410 = pneg %p96
      %p411 = pneg %p93
      %p412 = scmp.lt.s32.totalorder %s23, 1
      %s413 = scalar_select %p412, %s23, 1
      %s414 = smul.addr %s413, 8
      %s415 = scalar_lea.vmem %s3, %s414
      %p416 = pneg %p122
      %p417 = pneg %p119
      %p418 = pneg %p143
      %p419 = pneg %p140
      %p420 = pneg %p164
      %p421 = pneg %p161
      %p422 = pneg %p185
      %p423 = pneg %p182
      %p424 = pneg %p206
      %p425 = pneg %p203
      %p426 = pneg %p227
      %p427 = pneg %p224
      %p428 = pneg %p248
      %p429 = pneg %p245
      %p430 = pneg %p269
      %p431 = pneg %p266
      %p432 = pneg %p290
      %p433 = pneg %p287
      %p434 = pneg %p316
      %p435 = pneg %p313
      %p436 = scmp.lt.s32.totalorder %s23, 1
      %s437 = scalar_select %p436, %s23, 1
      %s438 = smul.addr %s437, 8
      %s439 = scalar_lea.vmem %s12, %s438
      %p440 = scmp.lt.s32.totalorder %s23, 1
      %s441 = scalar_select %p440, %s23, 1
      %s442 = smul.addr %s441, 8
      %s443 = scalar_lea.vmem %s0, %s442
      %p444 = scmp.lt.s32.totalorder %s23, 1
      %s445 = scalar_select %p444, %s23, 1
      %s446 = smul.addr %s445, 8
      %s447 = scalar_lea.vmem %s1, %s446
      %p448 = scmp.lt.s32.totalorder %s23, 1
      %s449 = scalar_select %p448, %s23, 1
      %s450 = smul.addr %s449, 8
      %s451 = scalar_lea.vmem %s2, %s450
      %p452 = scmp.lt.s32.totalorder %s23, 1
      %s453 = scalar_select %p452, %s23, 1
      %s454 = smul.addr %s453, 8
      %s455 = scalar_lea.vmem %s3, %s454
      %p456 = scmp.lt.s32.totalorder %s23, 1
      %s457 = scalar_select %p456, %s23, 1
      %s458 = smul.addr %s457, 8
      %s459 = scalar_lea.vmem %s12, %s458
      %v460 = vld [vmem:[%s443] sm:$0xff]
      %v461 = vld [vmem:[%s447] sm:$0xff]
      %v462 = vadd.f32 %v460, %v461
      %v463 = vld [vmem:[%s451] sm:$0xff]
      %v464 = vld [vmem:[%s455] sm:$0xff]
      %v465 = vadd.f32 %v463, %v464
      %v466 = vld [vmem:[%s4] sm:$0xff]
      %v467 = vld [vmem:[%s4 + $0x8] sm:$0xff]
      %v468 = vld [vmem:[%s4 + $0x10] sm:$0xff]
      %v469 = vld [vmem:[%s4 + $0x18] sm:$0xff]
      %v470 = vld [vmem:[%s5] sm:$0x1]
      %v472 = vlaneseq
      %v473 = vshrl.u32 %v472, 7
      %v474 = vsub.s32 0, %v473
      %v475 = vrot.slane %v470, %v474
      %vm477 = vcmask 261120
      %v479 = vsel %vm477, %v462, 0
      %481 = vmatprep.subr.mxu0 0.0
      %482 = vmatpush1.msra.mxu0 %v466
      %483 = vmatprep.subr.mxu0 0.0
      %484 = vmatpush1.msra.mxu0 %v467
      %485 = vmatprep.subr.mxu0 0.0
      %486 = vmatpush1.msra.mxu0 %v468
      %487 = vmatprep.subr.mxu0 0.0
      %488 = vmatpush1.msra.mxu0 %v469
      %489 = vmatprep.subr.mxu0 0.0
      %490 = vmatpush1.msra.mxu0 0.0
      %491 = vmatprep.subr.mxu0 0.0
      %492 = vmatpush1.msra.mxu0 0.0
      %493 = vmatprep.subr.mxu0 0.0
      %494 = vmatpush1.msra.mxu0 0.0
      %495 = vmatprep.subr.mxu0 0.0
      %496 = vmatpush1.msra.mxu0 0.0
      %497 = vmatprep.subr.mxu0 0.0
      %498 = vmatpush1.msra.mxu0 0.0
      %499 = vmatprep.subr.mxu0 0.0
      %500 = vmatpush1.msra.mxu0 0.0
      %501 = vmatprep.subr.mxu0 0.0
      %502 = vmatpush1.msra.mxu0 0.0
      %503 = vmatprep.subr.mxu0 0.0
      %504 = vmatpush1.msra.mxu0 0.0
      %505 = vmatprep.subr.mxu0 0.0
      %506 = vmatpush1.msra.mxu0 0.0
      %507 = vmatprep.subr.mxu0 0.0
      %508 = vmatpush1.msra.mxu0 0.0
      %509 = vmatprep.subr.mxu0 0.0
      %510 = vmatpush1.msra.mxu0 0.0
      %511 = vmatprep.subr.mxu0 0.0
      %512 = vmatpush1.msra.mxu0 0.0
      %513 = vmatprep.subr.mxu0 0.0
      %514 = vmatpush1.msra.mxu0 0.0
      %515 = vmatprep.subr.mxu0 0.0
      %516 = vmatpush1.msra.mxu0 0.0
      %517 = vmatprep.subr.mxu0 0.0
      %518 = vmatpush1.msra.mxu0 0.0
      %519 = vmatprep.subr.mxu0 0.0
      %520 = vmatpush1.msra.mxu0 0.0
      %521 = vmatprep.subr.mxu0 0.0
      %522 = vmatpush1.msra.mxu0 0.0
      %523 = vmatprep.subr.mxu0 0.0
      %524 = vmatpush1.msra.mxu0 0.0
      %525 = vmatprep.subr.mxu0 0.0
      %526 = vmatpush1.msra.mxu0 0.0
      %527 = vmatprep.subr.mxu0 0.0
      %528 = vmatpush1.msra.mxu0 0.0
      %529 = vmatprep.subr.mxu0 0.0
      %530 = vmatpush1.msra.mxu0 0.0
      %531 = vmatprep.subr.mxu0 0.0
      %532 = vmatpush1.msra.mxu0 0.0
      %533 = vmatprep.subr.mxu0 0.0
      %534 = vmatpush1.msra.mxu0 0.0
      %535 = vmatprep.subr.mxu0 0.0
      %536 = vmatpush1.msra.mxu0 0.0
      %537 = vmatprep.subr.mxu0 0.0
      %538 = vmatpush1.msra.mxu0 0.0
      %539 = vmatprep.subr.mxu0 0.0
      %540 = vmatpush1.msra.mxu0 0.0
      %541 = vmatprep.subr.mxu0 0.0
      %542 = vmatpush1.msra.mxu0 0.0
      %543 = vmatprep.subr.mxu0 0.0
      %544 = vmatpush1.msra.mxu0 0.0
      %545 = vmatprep.mubr.f32.mxu0 0.0
      %546 = vmatmul.mubr.f32.gmra.mrb[0].mxu0 %v479
      %v547 = vpop.f32.mrb[0].mxu0
      %v548 = vadd.f32 %v475, %v547
      %v549 = vpop.f32.mrb[0].mxu0
      %550 = vdwg.mxu0
      %v551 = vld [vmem:[%s6] sm:$0xff]
      %v552 = vld [vmem:[%s6 + $0x8] sm:$0xff]
      %v553 = vld [vmem:[%s6 + $0x10] sm:$0xff]
      %v554 = vld [vmem:[%s6 + $0x18] sm:$0xff]
      %v555 = vld [vmem:[%s7] sm:$0x1]
      %v557 = vlaneseq
      %v558 = vshrl.u32 %v557, 7
      %v559 = vsub.s32 0, %v558
      %v560 = vrot.slane %v555, %v559
      %v563 = vsel %vm477, %v465, 0
      %565 = vmatprep.subr.mxu0 0.0
      %566 = vmatpush1.msra.mxu0 %v551
      %567 = vmatprep.subr.mxu0 0.0
      %568 = vmatpush1.msra.mxu0 %v552
      %569 = vmatprep.subr.mxu0 0.0
      %570 = vmatpush1.msra.mxu0 %v553
      %571 = vmatprep.subr.mxu0 0.0
      %572 = vmatpush1.msra.mxu0 %v554
      %573 = vmatprep.subr.mxu0 0.0
      %574 = vmatpush1.msra.mxu0 0.0
      %575 = vmatprep.subr.mxu0 0.0
      %576 = vmatpush1.msra.mxu0 0.0
      %577 = vmatprep.subr.mxu0 0.0
      %578 = vmatpush1.msra.mxu0 0.0
      %579 = vmatprep.subr.mxu0 0.0
      %580 = vmatpush1.msra.mxu0 0.0
      %581 = vmatprep.subr.mxu0 0.0
      %582 = vmatpush1.msra.mxu0 0.0
      %583 = vmatprep.subr.mxu0 0.0
      %584 = vmatpush1.msra.mxu0 0.0
      %585 = vmatprep.subr.mxu0 0.0
      %586 = vmatpush1.msra.mxu0 0.0
      %587 = vmatprep.subr.mxu0 0.0
      %588 = vmatpush1.msra.mxu0 0.0
      %589 = vmatprep.subr.mxu0 0.0
      %590 = vmatpush1.msra.mxu0 0.0
      %591 = vmatprep.subr.mxu0 0.0
      %592 = vmatpush1.msra.mxu0 0.0
      %593 = vmatprep.subr.mxu0 0.0
      %594 = vmatpush1.msra.mxu0 0.0
      %595 = vmatprep.subr.mxu0 0.0
      %596 = vmatpush1.msra.mxu0 0.0
      %597 = vmatprep.subr.mxu0 0.0
      %598 = vmatpush1.msra.mxu0 0.0
      %599 = vmatprep.subr.mxu0 0.0
      %600 = vmatpush1.msra.mxu0 0.0
      %601 = vmatprep.subr.mxu0 0.0
      %602 = vmatpush1.msra.mxu0 0.0
      %603 = vmatprep.subr.mxu0 0.0
      %604 = vmatpush1.msra.mxu0 0.0
      %605 = vmatprep.subr.mxu0 0.0
      %606 = vmatpush1.msra.mxu0 0.0
      %607 = vmatprep.subr.mxu0 0.0
      %608 = vmatpush1.msra.mxu0 0.0
      %609 = vmatprep.subr.mxu0 0.0
      %610 = vmatpush1.msra.mxu0 0.0
      %611 = vmatprep.subr.mxu0 0.0
      %612 = vmatpush1.msra.mxu0 0.0
      %613 = vmatprep.subr.mxu0 0.0
      %614 = vmatpush1.msra.mxu0 0.0
      %615 = vmatprep.subr.mxu0 0.0
      %616 = vmatpush1.msra.mxu0 0.0
      %617 = vmatprep.subr.mxu0 0.0
      %618 = vmatpush1.msra.mxu0 0.0
      %619 = vmatprep.subr.mxu0 0.0
      %620 = vmatpush1.msra.mxu0 0.0
      %621 = vmatprep.subr.mxu0 0.0
      %622 = vmatpush1.msra.mxu0 0.0
      %623 = vmatprep.subr.mxu0 0.0
      %624 = vmatpush1.msra.mxu0 0.0
      %625 = vmatprep.subr.mxu0 0.0
      %626 = vmatpush1.msra.mxu0 0.0
      %627 = vmatprep.subr.mxu0 0.0
      %628 = vmatpush1.msra.mxu0 0.0
      %629 = vmatprep.mubr.f32.mxu0 0.0
      %630 = vmatmul.mubr.f32.gmra.mrb[0].mxu0 %v563
      %v631 = vpop.f32.mrb[0].mxu0
      %v632 = vadd.f32 %v560, %v631
      %v633 = vpop.f32.mrb[0].mxu0
      %634 = vdwg.mxu0
      %vm635 = vcmask 64512
      %v637 = vsel %vm635, %v548, 0
      %v640 = vsel %vm635, %v632, 0
      %642 = vmatprep.subr.mxu0 0.0
      %643 = vmatpush1.xpose.msra.mxu0 %v640
      %644 = vmatprep.subr.mxu0 0.0
      %645 = vmatpush1.xpose.msra.mxu0 0.0
      %646 = vmatprep.subr.mxu0 0.0
      %647 = vmatpush1.xpose.msra.mxu0 0.0
      %648 = vmatprep.subr.mxu0 0.0
      %649 = vmatpush1.xpose.msra.mxu0 0.0
      %650 = vmatprep.subr.mxu0 0.0
      %651 = vmatpush1.xpose.msra.mxu0 0.0
      %652 = vmatprep.subr.mxu0 0.0
      %653 = vmatpush1.xpose.msra.mxu0 0.0
      %654 = vmatprep.subr.mxu0 0.0
      %655 = vmatpush1.xpose.msra.mxu0 0.0
      %656 = vmatprep.subr.mxu0 0.0
      %657 = vmatpush1.xpose.msra.mxu0 0.0
      %658 = vmatprep.subr.mxu0 0.0
      %659 = vmatpush1.xpose.msra.mxu0 0.0
      %660 = vmatprep.subr.mxu0 0.0
      %661 = vmatpush1.xpose.msra.mxu0 0.0
      %662 = vmatprep.subr.mxu0 0.0
      %663 = vmatpush1.xpose.msra.mxu0 0.0
      %664 = vmatprep.subr.mxu0 0.0
      %665 = vmatpush1.xpose.msra.mxu0 0.0
      %666 = vmatprep.subr.mxu0 0.0
      %667 = vmatpush1.xpose.msra.mxu0 0.0
      %668 = vmatprep.subr.mxu0 0.0
      %669 = vmatpush1.xpose.msra.mxu0 0.0
      %670 = vmatprep.subr.mxu0 0.0
      %671 = vmatpush1.xpose.msra.mxu0 0.0
      %672 = vmatprep.subr.mxu0 0.0
      %673 = vmatpush1.xpose.msra.mxu0 0.0
      %674 = vmatprep.subr.mxu0 0.0
      %675 = vmatpush1.xpose.msra.mxu0 0.0
      %676 = vmatprep.subr.mxu0 0.0
      %677 = vmatpush1.xpose.msra.mxu0 0.0
      %678 = vmatprep.subr.mxu0 0.0
      %679 = vmatpush1.xpose.msra.mxu0 0.0
      %680 = vmatprep.subr.mxu0 0.0
      %681 = vmatpush1.xpose.msra.mxu0 0.0
      %682 = vmatprep.subr.mxu0 0.0
      %683 = vmatpush1.xpose.msra.mxu0 0.0
      %684 = vmatprep.subr.mxu0 0.0
      %685 = vmatpush1.xpose.msra.mxu0 0.0
      %686 = vmatprep.subr.mxu0 0.0
      %687 = vmatpush1.xpose.msra.mxu0 0.0
      %688 = vmatprep.subr.mxu0 0.0
      %689 = vmatpush1.xpose.msra.mxu0 0.0
      %690 = vmatprep.subr.mxu0 0.0
      %691 = vmatpush1.xpose.msra.mxu0 0.0
      %692 = vmatprep.subr.mxu0 0.0
      %693 = vmatpush1.xpose.msra.mxu0 0.0
      %694 = vmatprep.subr.mxu0 0.0
      %695 = vmatpush1.xpose.msra.mxu0 0.0
      %696 = vmatprep.subr.mxu0 0.0
      %697 = vmatpush1.xpose.msra.mxu0 0.0
      %698 = vmatprep.subr.mxu0 0.0
      %699 = vmatpush1.xpose.msra.mxu0 0.0
      %700 = vmatprep.subr.mxu0 0.0
      %701 = vmatpush1.xpose.msra.mxu0 0.0
      %702 = vmatprep.subr.mxu0 0.0
      %703 = vmatpush1.xpose.msra.mxu0 0.0
      %704 = vmatprep.subr.mxu0 0.0
      %705 = vmatpush1.xpose.msra.mxu0 0.0
      %706 = vmatprep.mubr.f32.mxu0 0.0
      %707 = vmatmul.mubr.f32.gmra.mrb[0].mxu0 %v637
      %v708 = vpop.f32.mrb[0].mxu0
      %v709 = vadd.f32 0.0, %v708
      %v710 = vpop.f32.mrb[0].mxu0
      %711 = vdwg.mxu0
      %v712 = vsel %vm635, %v709, -inf
      %713 = vmax.xlane.f32.xlu0 %v712
      %v714 = vpop.xlane.xlu0 %713
      %v715 = vmax.f32 %v714, -1e+30
      %v716 = vsub.f32 %v709, %v715
      %v717 = vmul.f32 %v716, 1.442695
      %v718 = vpow.pop %v717
      %v719 = vsel %vm635, %v718, 0.0
      %720 = vadd.xlane.f32.xlu0 %v719
      %v721 = vpop.xlane.xlu0 %720
      %722 = vrot.lane.b32.xlu0 %v632, 96
      %v723 = vpop.permute.xlu0 %722
      %v726 = vsel %vm635, %v718, 0
      %728 = vmatprep.subr.mxu0 0.0
      %729 = vmatpush1.msra.mxu0 %v723
      %730 = vmatprep.subr.mxu0 0.0
      %731 = vmatpush1.msra.mxu0 0.0
      %732 = vmatprep.subr.mxu0 0.0
      %733 = vmatpush1.msra.mxu0 0.0
      %734 = vmatprep.subr.mxu0 0.0
      %735 = vmatpush1.msra.mxu0 0.0
      %736 = vmatprep.subr.mxu0 0.0
      %737 = vmatpush1.msra.mxu0 0.0
      %738 = vmatprep.subr.mxu0 0.0
      %739 = vmatpush1.msra.mxu0 0.0
      %740 = vmatprep.subr.mxu0 0.0
      %741 = vmatpush1.msra.mxu0 0.0
      %742 = vmatprep.subr.mxu0 0.0
      %743 = vmatpush1.msra.mxu0 0.0
      %744 = vmatprep.subr.mxu0 0.0
      %745 = vmatpush1.msra.mxu0 0.0
      %746 = vmatprep.subr.mxu0 0.0
      %747 = vmatpush1.msra.mxu0 0.0
      %748 = vmatprep.subr.mxu0 0.0
      %749 = vmatpush1.msra.mxu0 0.0
      %750 = vmatprep.subr.mxu0 0.0
      %751 = vmatpush1.msra.mxu0 0.0
      %752 = vmatprep.subr.mxu0 0.0
      %753 = vmatpush1.msra.mxu0 0.0
      %754 = vmatprep.subr.mxu0 0.0
      %755 = vmatpush1.msra.mxu0 0.0
      %756 = vmatprep.subr.mxu0 0.0
      %757 = vmatpush1.msra.mxu0 0.0
      %758 = vmatprep.subr.mxu0 0.0
      %759 = vmatpush1.msra.mxu0 0.0
      %760 = vmatprep.subr.mxu0 0.0
      %761 = vmatpush1.msra.mxu0 0.0
      %762 = vmatprep.subr.mxu0 0.0
      %763 = vmatpush1.msra.mxu0 0.0
      %764 = vmatprep.subr.mxu0 0.0
      %765 = vmatpush1.msra.mxu0 0.0
      %766 = vmatprep.subr.mxu0 0.0
      %767 = vmatpush1.msra.mxu0 0.0
      %768 = vmatprep.subr.mxu0 0.0
      %769 = vmatpush1.msra.mxu0 0.0
      %770 = vmatprep.subr.mxu0 0.0
      %771 = vmatpush1.msra.mxu0 0.0
      %772 = vmatprep.subr.mxu0 0.0
      %773 = vmatpush1.msra.mxu0 0.0
      %774 = vmatprep.subr.mxu0 0.0
      %775 = vmatpush1.msra.mxu0 0.0
      %776 = vmatprep.subr.mxu0 0.0
      %777 = vmatpush1.msra.mxu0 0.0
      %778 = vmatprep.subr.mxu0 0.0
      %779 = vmatpush1.msra.mxu0 0.0
      %780 = vmatprep.subr.mxu0 0.0
      %781 = vmatpush1.msra.mxu0 0.0
      %782 = vmatprep.subr.mxu0 0.0
      %783 = vmatpush1.msra.mxu0 0.0
      %784 = vmatprep.subr.mxu0 0.0
      %785 = vmatpush1.msra.mxu0 0.0
      %786 = vmatprep.subr.mxu0 0.0
      %787 = vmatpush1.msra.mxu0 0.0
      %788 = vmatprep.subr.mxu0 0.0
      %789 = vmatpush1.msra.mxu0 0.0
      %790 = vmatprep.subr.mxu0 0.0
      %791 = vmatpush1.msra.mxu0 0.0
      %792 = vmatprep.mubr.f32.mxu0 0.0
      %793 = vmatmul.mubr.f32.gmra.mrb[0].mxu0 %v726
      %v794 = vpop.f32.mrb[0].mxu0
      %v795 = vadd.f32 0.0, %v794
      %v796 = vpop.f32.mrb[0].mxu0
      %797 = vdwg.mxu0
      %v798 = vmax.f32 %v721, 1e-30
      %v799 = vrcp.pop %v798
      %v800 = vmul.f32 %v795, %v799
      %801 = vrot.lane.b32.xlu0 %v548, 120
      %v802 = vpop.permute.xlu0 %801
      %803 = vrot.lane.b32.xlu0 %v632, 120
      %v804 = vpop.permute.xlu0 %803
      %v805 = vsel %vm635, %v802, 0
      %v807 = vsel %vm635, %v804, 0
      %809 = vmatprep.subr.mxu0 0.0
      %810 = vmatpush1.xpose.msra.mxu0 %v807
      %811 = vmatprep.subr.mxu0 0.0
      %812 = vmatpush1.xpose.msra.mxu0 0.0
      %813 = vmatprep.subr.mxu0 0.0
      %814 = vmatpush1.xpose.msra.mxu0 0.0
      %815 = vmatprep.subr.mxu0 0.0
      %816 = vmatpush1.xpose.msra.mxu0 0.0
      %817 = vmatprep.subr.mxu0 0.0
      %818 = vmatpush1.xpose.msra.mxu0 0.0
      %819 = vmatprep.subr.mxu0 0.0
      %820 = vmatpush1.xpose.msra.mxu0 0.0
      %821 = vmatprep.subr.mxu0 0.0
      %822 = vmatpush1.xpose.msra.mxu0 0.0
      %823 = vmatprep.subr.mxu0 0.0
      %824 = vmatpush1.xpose.msra.mxu0 0.0
      %825 = vmatprep.subr.mxu0 0.0
      %826 = vmatpush1.xpose.msra.mxu0 0.0
      %827 = vmatprep.subr.mxu0 0.0
      %828 = vmatpush1.xpose.msra.mxu0 0.0
      %829 = vmatprep.subr.mxu0 0.0
      %830 = vmatpush1.xpose.msra.mxu0 0.0
      %831 = vmatprep.subr.mxu0 0.0
      %832 = vmatpush1.xpose.msra.mxu0 0.0
      %833 = vmatprep.subr.mxu0 0.0
      %834 = vmatpush1.xpose.msra.mxu0 0.0
      %835 = vmatprep.subr.mxu0 0.0
      %836 = vmatpush1.xpose.msra.mxu0 0.0
      %837 = vmatprep.subr.mxu0 0.0
      %838 = vmatpush1.xpose.msra.mxu0 0.0
      %839 = vmatprep.subr.mxu0 0.0
      %840 = vmatpush1.xpose.msra.mxu0 0.0
      %841 = vmatprep.subr.mxu0 0.0
      %842 = vmatpush1.xpose.msra.mxu0 0.0
      %843 = vmatprep.subr.mxu0 0.0
      %844 = vmatpush1.xpose.msra.mxu0 0.0
      %845 = vmatprep.subr.mxu0 0.0
      %846 = vmatpush1.xpose.msra.mxu0 0.0
      %847 = vmatprep.subr.mxu0 0.0
      %848 = vmatpush1.xpose.msra.mxu0 0.0
      %849 = vmatprep.subr.mxu0 0.0
      %850 = vmatpush1.xpose.msra.mxu0 0.0
      %851 = vmatprep.subr.mxu0 0.0
      %852 = vmatpush1.xpose.msra.mxu0 0.0
      %853 = vmatprep.subr.mxu0 0.0
      %854 = vmatpush1.xpose.msra.mxu0 0.0
      %855 = vmatprep.subr.mxu0 0.0
      %856 = vmatpush1.xpose.msra.mxu0 0.0
      %857 = vmatprep.subr.mxu0 0.0
      %858 = vmatpush1.xpose.msra.mxu0 0.0
      %859 = vmatprep.subr.mxu0 0.0
      %860 = vmatpush1.xpose.msra.mxu0 0.0
      %861 = vmatprep.subr.mxu0 0.0
      %862 = vmatpush1.xpose.msra.mxu0 0.0
      %863 = vmatprep.subr.mxu0 0.0
      %864 = vmatpush1.xpose.msra.mxu0 0.0
      %865 = vmatprep.subr.mxu0 0.0
      %866 = vmatpush1.xpose.msra.mxu0 0.0
      %867 = vmatprep.subr.mxu0 0.0
      %868 = vmatpush1.xpose.msra.mxu0 0.0
      %869 = vmatprep.subr.mxu0 0.0
      %870 = vmatpush1.xpose.msra.mxu0 0.0
      %871 = vmatprep.subr.mxu0 0.0
      %872 = vmatpush1.xpose.msra.mxu0 0.0
      %873 = vmatprep.mubr.f32.mxu0 0.0
      %874 = vmatmul.mubr.f32.gmra.mrb[0].mxu0 %v805
      %v875 = vpop.f32.mrb[0].mxu0
      %v876 = vadd.f32 0.0, %v875
      %v877 = vpop.f32.mrb[0].mxu0
      %878 = vdwg.mxu0
      %v879 = vsel %vm635, %v876, -inf
      %880 = vmax.xlane.f32.xlu0 %v879
      %v881 = vpop.xlane.xlu0 %880
      %v882 = vmax.f32 %v881, -1e+30
      %v883 = vsub.f32 %v876, %v882
      %v884 = vmul.f32 %v883, 1.442695
      %v885 = vpow.pop %v884
      %v886 = vsel %vm635, %v885, 0.0
      %887 = vadd.xlane.f32.xlu0 %v886
      %v888 = vpop.xlane.xlu0 %887
      %889 = vrot.lane.b32.xlu0 %v632, 88
      %v890 = vpop.permute.xlu0 %889
      %v893 = vsel %vm635, %v885, 0
      %895 = vmatprep.subr.mxu0 0.0
      %896 = vmatpush1.msra.mxu0 %v890
      %897 = vmatprep.subr.mxu0 0.0
      %898 = vmatpush1.msra.mxu0 0.0
      %899 = vmatprep.subr.mxu0 0.0
      %900 = vmatpush1.msra.mxu0 0.0
      %901 = vmatprep.subr.mxu0 0.0
      %902 = vmatpush1.msra.mxu0 0.0
      %903 = vmatprep.subr.mxu0 0.0
      %904 = vmatpush1.msra.mxu0 0.0
      %905 = vmatprep.subr.mxu0 0.0
      %906 = vmatpush1.msra.mxu0 0.0
      %907 = vmatprep.subr.mxu0 0.0
      %908 = vmatpush1.msra.mxu0 0.0
      %909 = vmatprep.subr.mxu0 0.0
      %910 = vmatpush1.msra.mxu0 0.0
      %911 = vmatprep.subr.mxu0 0.0
      %912 = vmatpush1.msra.mxu0 0.0
      %913 = vmatprep.subr.mxu0 0.0
      %914 = vmatpush1.msra.mxu0 0.0
      %915 = vmatprep.subr.mxu0 0.0
      %916 = vmatpush1.msra.mxu0 0.0
      %917 = vmatprep.subr.mxu0 0.0
      %918 = vmatpush1.msra.mxu0 0.0
      %919 = vmatprep.subr.mxu0 0.0
      %920 = vmatpush1.msra.mxu0 0.0
      %921 = vmatprep.subr.mxu0 0.0
      %922 = vmatpush1.msra.mxu0 0.0
      %923 = vmatprep.subr.mxu0 0.0
      %924 = vmatpush1.msra.mxu0 0.0
      %925 = vmatprep.subr.mxu0 0.0
      %926 = vmatpush1.msra.mxu0 0.0
      %927 = vmatprep.subr.mxu0 0.0
      %928 = vmatpush1.msra.mxu0 0.0
      %929 = vmatprep.subr.mxu0 0.0
      %930 = vmatpush1.msra.mxu0 0.0
      %931 = vmatprep.subr.mxu0 0.0
      %932 = vmatpush1.msra.mxu0 0.0
      %933 = vmatprep.subr.mxu0 0.0
      %934 = vmatpush1.msra.mxu0 0.0
      %935 = vmatprep.subr.mxu0 0.0
      %936 = vmatpush1.msra.mxu0 0.0
      %937 = vmatprep.subr.mxu0 0.0
      %938 = vmatpush1.msra.mxu0 0.0
      %939 = vmatprep.subr.mxu0 0.0
      %940 = vmatpush1.msra.mxu0 0.0
      %941 = vmatprep.subr.mxu0 0.0
      %942 = vmatpush1.msra.mxu0 0.0
      %943 = vmatprep.subr.mxu0 0.0
      %944 = vmatpush1.msra.mxu0 0.0
      %945 = vmatprep.subr.mxu0 0.0
      %946 = vmatpush1.msra.mxu0 0.0
      %947 = vmatprep.subr.mxu0 0.0
      %948 = vmatpush1.msra.mxu0 0.0
      %949 = vmatprep.subr.mxu0 0.0
      %950 = vmatpush1.msra.mxu0 0.0
      %951 = vmatprep.subr.mxu0 0.0
      %952 = vmatpush1.msra.mxu0 0.0
      %953 = vmatprep.subr.mxu0 0.0
      %954 = vmatpush1.msra.mxu0 0.0
      %955 = vmatprep.subr.mxu0 0.0
      %956 = vmatpush1.msra.mxu0 0.0
      %957 = vmatprep.subr.mxu0 0.0
      %958 = vmatpush1.msra.mxu0 0.0
      %959 = vmatprep.mubr.f32.mxu0 0.0
      %960 = vmatmul.mubr.f32.gmra.mrb[0].mxu0 %v893
      %v961 = vpop.f32.mrb[0].mxu0
      %v962 = vadd.f32 0.0, %v961
      %v963 = vpop.f32.mrb[0].mxu0
      %964 = vdwg.mxu0
      %v965 = vmax.f32 %v888, 1e-30
      %v966 = vrcp.pop %v965
      %v967 = vmul.f32 %v962, %v966
      %968 = vrot.lane.b32.xlu0 %v548, 112
      %v969 = vpop.permute.xlu0 %968
      %970 = vrot.lane.b32.xlu0 %v632, 112
      %v971 = vpop.permute.xlu0 %970
      %v972 = vsel %vm635, %v969, 0
      %v974 = vsel %vm635, %v971, 0
      %976 = vmatprep.subr.mxu0 0.0
      %977 = vmatpush1.xpose.msra.mxu0 %v974
      %978 = vmatprep.subr.mxu0 0.0
      %979 = vmatpush1.xpose.msra.mxu0 0.0
      %980 = vmatprep.subr.mxu0 0.0
      %981 = vmatpush1.xpose.msra.mxu0 0.0
      %982 = vmatprep.subr.mxu0 0.0
      %983 = vmatpush1.xpose.msra.mxu0 0.0
      %984 = vmatprep.subr.mxu0 0.0
      %985 = vmatpush1.xpose.msra.mxu0 0.0
      %986 = vmatprep.subr.mxu0 0.0
      %987 = vmatpush1.xpose.msra.mxu0 0.0
      %988 = vmatprep.subr.mxu0 0.0
      %989 = vmatpush1.xpose.msra.mxu0 0.0
      %990 = vmatprep.subr.mxu0 0.0
      %991 = vmatpush1.xpose.msra.mxu0 0.0
      %992 = vmatprep.subr.mxu0 0.0
      %993 = vmatpush1.xpose.msra.mxu0 0.0
      %994 = vmatprep.subr.mxu0 0.0
      %995 = vmatpush1.xpose.msra.mxu0 0.0
      %996 = vmatprep.subr.mxu0 0.0
      %997 = vmatpush1.xpose.msra.mxu0 0.0
      %998 = vmatprep.subr.mxu0 0.0
      %999 = vmatpush1.xpose.msra.mxu0 0.0
      %1000 = vmatprep.subr.mxu0 0.0
      %1001 = vmatpush1.xpose.msra.mxu0 0.0
      %1002 = vmatprep.subr.mxu0 0.0
      %1003 = vmatpush1.xpose.msra.mxu0 0.0
      %1004 = vmatprep.subr.mxu0 0.0
      %1005 = vmatpush1.xpose.msra.mxu0 0.0
      %1006 = vmatprep.subr.mxu0 0.0
      %1007 = vmatpush1.xpose.msra.mxu0 0.0
      %1008 = vmatprep.subr.mxu0 0.0
      %1009 = vmatpush1.xpose.msra.mxu0 0.0
      %1010 = vmatprep.subr.mxu0 0.0
      %1011 = vmatpush1.xpose.msra.mxu0 0.0
      %1012 = vmatprep.subr.mxu0 0.0
      %1013 = vmatpush1.xpose.msra.mxu0 0.0
      %1014 = vmatprep.subr.mxu0 0.0
      %1015 = vmatpush1.xpose.msra.mxu0 0.0
      %1016 = vmatprep.subr.mxu0 0.0
      %1017 = vmatpush1.xpose.msra.mxu0 0.0
      %1018 = vmatprep.subr.mxu0 0.0
      %1019 = vmatpush1.xpose.msra.mxu0 0.0
      %1020 = vmatprep.subr.mxu0 0.0
      %1021 = vmatpush1.xpose.msra.mxu0 0.0
      %1022 = vmatprep.subr.mxu0 0.0
      %1023 = vmatpush1.xpose.msra.mxu0 0.0
      %1024 = vmatprep.subr.mxu0 0.0
      %1025 = vmatpush1.xpose.msra.mxu0 0.0
      %1026 = vmatprep.subr.mxu0 0.0
      %1027 = vmatpush1.xpose.msra.mxu0 0.0
      %1028 = vmatprep.subr.mxu0 0.0
      %1029 = vmatpush1.xpose.msra.mxu0 0.0
      %1030 = vmatprep.subr.mxu0 0.0
      %1031 = vmatpush1.xpose.msra.mxu0 0.0
      %1032 = vmatprep.subr.mxu0 0.0
      %1033 = vmatpush1.xpose.msra.mxu0 0.0
      %1034 = vmatprep.subr.mxu0 0.0
      %1035 = vmatpush1.xpose.msra.mxu0 0.0
      %1036 = vmatprep.subr.mxu0 0.0
      %1037 = vmatpush1.xpose.msra.mxu0 0.0
      %1038 = vmatprep.subr.mxu0 0.0
      %1039 = vmatpush1.xpose.msra.mxu0 0.0
      %1040 = vmatprep.mubr.f32.mxu0 0.0
      %1041 = vmatmul.mubr.f32.gmra.mrb[0].mxu0 %v972
      %v1042 = vpop.f32.mrb[0].mxu0
      %v1043 = vadd.f32 0.0, %v1042
      %v1044 = vpop.f32.mrb[0].mxu0
      %1045 = vdwg.mxu0
      %v1046 = vsel %vm635, %v1043, -inf
      %1047 = vmax.xlane.f32.xlu0 %v1046
      %v1048 = vpop.xlane.xlu0 %1047
      %v1049 = vmax.f32 %v1048, -1e+30
      %v1050 = vsub.f32 %v1043, %v1049
      %v1051 = vmul.f32 %v1050, 1.442695
      %v1052 = vpow.pop %v1051
      %v1053 = vsel %vm635, %v1052, 0.0
      %1054 = vadd.xlane.f32.xlu0 %v1053
      %v1055 = vpop.xlane.xlu0 %1054
      %1056 = vrot.lane.b32.xlu0 %v632, 80
      %v1057 = vpop.permute.xlu0 %1056
      %v1060 = vsel %vm635, %v1052, 0
      %1062 = vmatprep.subr.mxu0 0.0
      %1063 = vmatpush1.msra.mxu0 %v1057
      %1064 = vmatprep.subr.mxu0 0.0
      %1065 = vmatpush1.msra.mxu0 0.0
      %1066 = vmatprep.subr.mxu0 0.0
      %1067 = vmatpush1.msra.mxu0 0.0
      %1068 = vmatprep.subr.mxu0 0.0
      %1069 = vmatpush1.msra.mxu0 0.0
      %1070 = vmatprep.subr.mxu0 0.0
      %1071 = vmatpush1.msra.mxu0 0.0
      %1072 = vmatprep.subr.mxu0 0.0
      %1073 = vmatpush1.msra.mxu0 0.0
      %1074 = vmatprep.subr.mxu0 0.0
      %1075 = vmatpush1.msra.mxu0 0.0
      %1076 = vmatprep.subr.mxu0 0.0
      %1077 = vmatpush1.msra.mxu0 0.0
      %1078 = vmatprep.subr.mxu0 0.0
      %1079 = vmatpush1.msra.mxu0 0.0
      %1080 = vmatprep.subr.mxu0 0.0
      %1081 = vmatpush1.msra.mxu0 0.0
      %1082 = vmatprep.subr.mxu0 0.0
      %1083 = vmatpush1.msra.mxu0 0.0
      %1084 = vmatprep.subr.mxu0 0.0
      %1085 = vmatpush1.msra.mxu0 0.0
      %1086 = vmatprep.subr.mxu0 0.0
      %1087 = vmatpush1.msra.mxu0 0.0
      %1088 = vmatprep.subr.mxu0 0.0
      %1089 = vmatpush1.msra.mxu0 0.0
      %1090 = vmatprep.subr.mxu0 0.0
      %1091 = vmatpush1.msra.mxu0 0.0
      %1092 = vmatprep.subr.mxu0 0.0
      %1093 = vmatpush1.msra.mxu0 0.0
      %1094 = vmatprep.subr.mxu0 0.0
      %1095 = vmatpush1.msra.mxu0 0.0
      %1096 = vmatprep.subr.mxu0 0.0
      %1097 = vmatpush1.msra.mxu0 0.0
      %1098 = vmatprep.subr.mxu0 0.0
      %1099 = vmatpush1.msra.mxu0 0.0
      %1100 = vmatprep.subr.mxu0 0.0
      %1101 = vmatpush1.msra.mxu0 0.0
      %1102 = vmatprep.subr.mxu0 0.0
      %1103 = vmatpush1.msra.mxu0 0.0
      %1104 = vmatprep.subr.mxu0 0.0
      %1105 = vmatpush1.msra.mxu0 0.0
      %1106 = vmatprep.subr.mxu0 0.0
      %1107 = vmatpush1.msra.mxu0 0.0
      %1108 = vmatprep.subr.mxu0 0.0
      %1109 = vmatpush1.msra.mxu0 0.0
      %1110 = vmatprep.subr.mxu0 0.0
      %1111 = vmatpush1.msra.mxu0 0.0
      %1112 = vmatprep.subr.mxu0 0.0
      %1113 = vmatpush1.msra.mxu0 0.0
      %1114 = vmatprep.subr.mxu0 0.0
      %1115 = vmatpush1.msra.mxu0 0.0
      %1116 = vmatprep.subr.mxu0 0.0
      %1117 = vmatpush1.msra.mxu0 0.0
      %1118 = vmatprep.subr.mxu0 0.0
      %1119 = vmatpush1.msra.mxu0 0.0
      %1120 = vmatprep.subr.mxu0 0.0
      %1121 = vmatpush1.msra.mxu0 0.0
      %1122 = vmatprep.subr.mxu0 0.0
      %1123 = vmatpush1.msra.mxu0 0.0
      %1124 = vmatprep.subr.mxu0 0.0
      %1125 = vmatpush1.msra.mxu0 0.0
      %1126 = vmatprep.mubr.f32.mxu0 0.0
      %1127 = vmatmul.mubr.f32.gmra.mrb[0].mxu0 %v1060
      %v1128 = vpop.f32.mrb[0].mxu0
      %v1129 = vadd.f32 0.0, %v1128
      %v1130 = vpop.f32.mrb[0].mxu0
      %1131 = vdwg.mxu0
      %v1132 = vmax.f32 %v1055, 1e-30
      %v1133 = vrcp.pop %v1132
      %v1134 = vmul.f32 %v1129, %v1133
      %1135 = vrot.lane.b32.xlu0 %v548, 104
      %v1136 = vpop.permute.xlu0 %1135
      %1137 = vrot.lane.b32.xlu0 %v632, 104
      %v1138 = vpop.permute.xlu0 %1137
      %v1139 = vsel %vm635, %v1136, 0
      %v1141 = vsel %vm635, %v1138, 0
      %1143 = vmatprep.subr.mxu0 0.0
      %1144 = vmatpush1.xpose.msra.mxu0 %v1141
      %1145 = vmatprep.subr.mxu0 0.0
      %1146 = vmatpush1.xpose.msra.mxu0 0.0
      %1147 = vmatprep.subr.mxu0 0.0
      %1148 = vmatpush1.xpose.msra.mxu0 0.0
      %1149 = vmatprep.subr.mxu0 0.0
      %1150 = vmatpush1.xpose.msra.mxu0 0.0
      %1151 = vmatprep.subr.mxu0 0.0
      %1152 = vmatpush1.xpose.msra.mxu0 0.0
      %1153 = vmatprep.subr.mxu0 0.0
      %1154 = vmatpush1.xpose.msra.mxu0 0.0
      %1155 = vmatprep.subr.mxu0 0.0
      %1156 = vmatpush1.xpose.msra.mxu0 0.0
      %1157 = vmatprep.subr.mxu0 0.0
      %1158 = vmatpush1.xpose.msra.mxu0 0.0
      %1159 = vmatprep.subr.mxu0 0.0
      %1160 = vmatpush1.xpose.msra.mxu0 0.0
      %1161 = vmatprep.subr.mxu0 0.0
      %1162 = vmatpush1.xpose.msra.mxu0 0.0
      %1163 = vmatprep.subr.mxu0 0.0
      %1164 = vmatpush1.xpose.msra.mxu0 0.0
      %1165 = vmatprep.subr.mxu0 0.0
      %1166 = vmatpush1.xpose.msra.mxu0 0.0
      %1167 = vmatprep.subr.mxu0 0.0
      %1168 = vmatpush1.xpose.msra.mxu0 0.0
      %1169 = vmatprep.subr.mxu0 0.0
      %1170 = vmatpush1.xpose.msra.mxu0 0.0
      %1171 = vmatprep.subr.mxu0 0.0
      %1172 = vmatpush1.xpose.msra.mxu0 0.0
      %1173 = vmatprep.subr.mxu0 0.0
      %1174 = vmatpush1.xpose.msra.mxu0 0.0
      %1175 = vmatprep.subr.mxu0 0.0
      %1176 = vmatpush1.xpose.msra.mxu0 0.0
      %1177 = vmatprep.subr.mxu0 0.0
      %1178 = vmatpush1.xpose.msra.mxu0 0.0
      %1179 = vmatprep.subr.mxu0 0.0
      %1180 = vmatpush1.xpose.msra.mxu0 0.0
      %1181 = vmatprep.subr.mxu0 0.0
      %1182 = vmatpush1.xpose.msra.mxu0 0.0
      %1183 = vmatprep.subr.mxu0 0.0
      %1184 = vmatpush1.xpose.msra.mxu0 0.0
      %1185 = vmatprep.subr.mxu0 0.0
      %1186 = vmatpush1.xpose.msra.mxu0 0.0
      %1187 = vmatprep.subr.mxu0 0.0
      %1188 = vmatpush1.xpose.msra.mxu0 0.0
      %1189 = vmatprep.subr.mxu0 0.0
      %1190 = vmatpush1.xpose.msra.mxu0 0.0
      %1191 = vmatprep.subr.mxu0 0.0
      %1192 = vmatpush1.xpose.msra.mxu0 0.0
      %1193 = vmatprep.subr.mxu0 0.0
      %1194 = vmatpush1.xpose.msra.mxu0 0.0
      %1195 = vmatprep.subr.mxu0 0.0
      %1196 = vmatpush1.xpose.msra.mxu0 0.0
      %1197 = vmatprep.subr.mxu0 0.0
      %1198 = vmatpush1.xpose.msra.mxu0 0.0
      %1199 = vmatprep.subr.mxu0 0.0
      %1200 = vmatpush1.xpose.msra.mxu0 0.0
      %1201 = vmatprep.subr.mxu0 0.0
      %1202 = vmatpush1.xpose.msra.mxu0 0.0
      %1203 = vmatprep.subr.mxu0 0.0
      %1204 = vmatpush1.xpose.msra.mxu0 0.0
      %1205 = vmatprep.subr.mxu0 0.0
      %1206 = vmatpush1.xpose.msra.mxu0 0.0
      %1207 = vmatprep.mubr.f32.mxu0 0.0
      %1208 = vmatmul.mubr.f32.gmra.mrb[0].mxu0 %v1139
      %v1209 = vpop.f32.mrb[0].mxu0
      %v1210 = vadd.f32 0.0, %v1209
      %v1211 = vpop.f32.mrb[0].mxu0
      %1212 = vdwg.mxu0
      %v1213 = vsel %vm635, %v1210, -inf
      %1214 = vmax.xlane.f32.xlu0 %v1213
      %v1215 = vpop.xlane.xlu0 %1214
      %v1216 = vmax.f32 %v1215, -1e+30
      %v1217 = vsub.f32 %v1210, %v1216
      %v1218 = vmul.f32 %v1217, 1.442695
      %v1219 = vpow.pop %v1218
      %v1220 = vsel %vm635, %v1219, 0.0
      %1221 = vadd.xlane.f32.xlu0 %v1220
      %v1222 = vpop.xlane.xlu0 %1221
      %1223 = vrot.lane.b32.xlu0 %v632, 72
      %v1224 = vpop.permute.xlu0 %1223
      %v1227 = vsel %vm635, %v1219, 0
      %1229 = vmatprep.subr.mxu0 0.0
      %1230 = vmatpush1.msra.mxu0 %v1224
      %1231 = vmatprep.subr.mxu0 0.0
      %1232 = vmatpush1.msra.mxu0 0.0
      %1233 = vmatprep.subr.mxu0 0.0
      %1234 = vmatpush1.msra.mxu0 0.0
      %1235 = vmatprep.subr.mxu0 0.0
      %1236 = vmatpush1.msra.mxu0 0.0
      %1237 = vmatprep.subr.mxu0 0.0
      %1238 = vmatpush1.msra.mxu0 0.0
      %1239 = vmatprep.subr.mxu0 0.0
      %1240 = vmatpush1.msra.mxu0 0.0
      %1241 = vmatprep.subr.mxu0 0.0
      %1242 = vmatpush1.msra.mxu0 0.0
      %1243 = vmatprep.subr.mxu0 0.0
      %1244 = vmatpush1.msra.mxu0 0.0
      %1245 = vmatprep.subr.mxu0 0.0
      %1246 = vmatpush1.msra.mxu0 0.0
      %1247 = vmatprep.subr.mxu0 0.0
      %1248 = vmatpush1.msra.mxu0 0.0
      %1249 = vmatprep.subr.mxu0 0.0
      %1250 = vmatpush1.msra.mxu0 0.0
      %1251 = vmatprep.subr.mxu0 0.0
      %1252 = vmatpush1.msra.mxu0 0.0
      %1253 = vmatprep.subr.mxu0 0.0
      %1254 = vmatpush1.msra.mxu0 0.0
      %1255 = vmatprep.subr.mxu0 0.0
      %1256 = vmatpush1.msra.mxu0 0.0
      %1257 = vmatprep.subr.mxu0 0.0
      %1258 = vmatpush1.msra.mxu0 0.0
      %1259 = vmatprep.subr.mxu0 0.0
      %1260 = vmatpush1.msra.mxu0 0.0
      %1261 = vmatprep.subr.mxu0 0.0
      %1262 = vmatpush1.msra.mxu0 0.0
      %1263 = vmatprep.subr.mxu0 0.0
      %1264 = vmatpush1.msra.mxu0 0.0
      %1265 = vmatprep.subr.mxu0 0.0
      %1266 = vmatpush1.msra.mxu0 0.0
      %1267 = vmatprep.subr.mxu0 0.0
      %1268 = vmatpush1.msra.mxu0 0.0
      %1269 = vmatprep.subr.mxu0 0.0
      %1270 = vmatpush1.msra.mxu0 0.0
      %1271 = vmatprep.subr.mxu0 0.0
      %1272 = vmatpush1.msra.mxu0 0.0
      %1273 = vmatprep.subr.mxu0 0.0
      %1274 = vmatpush1.msra.mxu0 0.0
      %1275 = vmatprep.subr.mxu0 0.0
      %1276 = vmatpush1.msra.mxu0 0.0
      %1277 = vmatprep.subr.mxu0 0.0
      %1278 = vmatpush1.msra.mxu0 0.0
      %1279 = vmatprep.subr.mxu0 0.0
      %1280 = vmatpush1.msra.mxu0 0.0
      %1281 = vmatprep.subr.mxu0 0.0
      %1282 = vmatpush1.msra.mxu0 0.0
      %1283 = vmatprep.subr.mxu0 0.0
      %1284 = vmatpush1.msra.mxu0 0.0
      %1285 = vmatprep.subr.mxu0 0.0
      %1286 = vmatpush1.msra.mxu0 0.0
      %1287 = vmatprep.subr.mxu0 0.0
      %1288 = vmatpush1.msra.mxu0 0.0
      %1289 = vmatprep.subr.mxu0 0.0
      %1290 = vmatpush1.msra.mxu0 0.0
      %1291 = vmatprep.subr.mxu0 0.0
      %1292 = vmatpush1.msra.mxu0 0.0
      %1293 = vmatprep.mubr.f32.mxu0 0.0
      %1294 = vmatmul.mubr.f32.gmra.mrb[0].mxu0 %v1227
      %v1295 = vpop.f32.mrb[0].mxu0
      %v1296 = vadd.f32 0.0, %v1295
      %v1297 = vpop.f32.mrb[0].mxu0
      %1298 = vdwg.mxu0
      %v1299 = vmax.f32 %v1222, 1e-30
      %v1300 = vrcp.pop %v1299
      %v1301 = vmul.f32 %v1296, %v1300
      %1303 = vrot.lane.b32.xlu0 %v967, 8
      %v1304 = vpop.permute.xlu0 %1303
      %1307 = vrot.lane.b32.xlu0 %v1134, 16
      %v1308 = vpop.permute.xlu0 %1307
      %1311 = vrot.lane.b32.xlu0 %v1301, 24
      %v1312 = vpop.permute.xlu0 %1311
      %v1314 = vsel %vm635, %v800, %v1304
      %vm1315 = vcmask 130048
      %v1316 = vsel %vm1315, %v1314, %v1308
      %vm1317 = vcmask 195584
      %v1318 = vsel %vm1317, %v1316, %v1312
      %v1319 = vld [vmem:[%s8] sm:$0xff]
      %v1320 = vld [vmem:[%s8 + $0x8] sm:$0xff]
      %v1321 = vld [vmem:[%s8 + $0x10] sm:$0xff]
      %v1322 = vld [vmem:[%s8 + $0x18] sm:$0xff]
      %v1323 = vld [vmem:[%s9] sm:$0x1]
      %v1325 = vlaneseq
      %v1326 = vshrl.u32 %v1325, 7
      %v1327 = vsub.s32 0, %v1326
      %v1328 = vrot.slane %v1323, %v1327
      %v1331 = vsel %vm477, %v1318, 0
      %1333 = vmatprep.subr.mxu0 0.0
      %1334 = vmatpush1.msra.mxu0 %v1319
      %1335 = vmatprep.subr.mxu0 0.0
      %1336 = vmatpush1.msra.mxu0 %v1320
      %1337 = vmatprep.subr.mxu0 0.0
      %1338 = vmatpush1.msra.mxu0 %v1321
      %1339 = vmatprep.subr.mxu0 0.0
      %1340 = vmatpush1.msra.mxu0 %v1322
      %1341 = vmatprep.subr.mxu0 0.0
      %1342 = vmatpush1.msra.mxu0 0.0
      %1343 = vmatprep.subr.mxu0 0.0
      %1344 = vmatpush1.msra.mxu0 0.0
      %1345 = vmatprep.subr.mxu0 0.0
      %1346 = vmatpush1.msra.mxu0 0.0
      %1347 = vmatprep.subr.mxu0 0.0
      %1348 = vmatpush1.msra.mxu0 0.0
      %1349 = vmatprep.subr.mxu0 0.0
      %1350 = vmatpush1.msra.mxu0 0.0
      %1351 = vmatprep.subr.mxu0 0.0
      %1352 = vmatpush1.msra.mxu0 0.0
      %1353 = vmatprep.subr.mxu0 0.0
      %1354 = vmatpush1.msra.mxu0 0.0
      %1355 = vmatprep.subr.mxu0 0.0
      %1356 = vmatpush1.msra.mxu0 0.0
      %1357 = vmatprep.subr.mxu0 0.0
      %1358 = vmatpush1.msra.mxu0 0.0
      %1359 = vmatprep.subr.mxu0 0.0
      %1360 = vmatpush1.msra.mxu0 0.0
      %1361 = vmatprep.subr.mxu0 0.0
      %1362 = vmatpush1.msra.mxu0 0.0
      %1363 = vmatprep.subr.mxu0 0.0
      %1364 = vmatpush1.msra.mxu0 0.0
      %1365 = vmatprep.subr.mxu0 0.0
      %1366 = vmatpush1.msra.mxu0 0.0
      %1367 = vmatprep.subr.mxu0 0.0
      %1368 = vmatpush1.msra.mxu0 0.0
      %1369 = vmatprep.subr.mxu0 0.0
      %1370 = vmatpush1.msra.mxu0 0.0
      %1371 = vmatprep.subr.mxu0 0.0
      %1372 = vmatpush1.msra.mxu0 0.0
      %1373 = vmatprep.subr.mxu0 0.0
      %1374 = vmatpush1.msra.mxu0 0.0
      %1375 = vmatprep.subr.mxu0 0.0
      %1376 = vmatpush1.msra.mxu0 0.0
      %1377 = vmatprep.subr.mxu0 0.0
      %1378 = vmatpush1.msra.mxu0 0.0
      %1379 = vmatprep.subr.mxu0 0.0
      %1380 = vmatpush1.msra.mxu0 0.0
      %1381 = vmatprep.subr.mxu0 0.0
      %1382 = vmatpush1.msra.mxu0 0.0
      %1383 = vmatprep.subr.mxu0 0.0
      %1384 = vmatpush1.msra.mxu0 0.0
      %1385 = vmatprep.subr.mxu0 0.0
      %1386 = vmatpush1.msra.mxu0 0.0
      %1387 = vmatprep.subr.mxu0 0.0
      %1388 = vmatpush1.msra.mxu0 0.0
      %1389 = vmatprep.subr.mxu0 0.0
      %1390 = vmatpush1.msra.mxu0 0.0
      %1391 = vmatprep.subr.mxu0 0.0
      %1392 = vmatpush1.msra.mxu0 0.0
      %1393 = vmatprep.subr.mxu0 0.0
      %1394 = vmatpush1.msra.mxu0 0.0
      %1395 = vmatprep.subr.mxu0 0.0
      %1396 = vmatpush1.msra.mxu0 0.0
      %1397 = vmatprep.mubr.f32.mxu0 0.0
      %1398 = vmatmul.mubr.f32.gmra.mrb[0].mxu0 %v1331
      %v1399 = vpop.f32.mrb[0].mxu0
      %v1400 = vadd.f32 %v1328, %v1399
      %v1401 = vpop.f32.mrb[0].mxu0
      %1402 = vdwg.mxu0
      %v1403 = vadd.f32 %v460, %v1400
      %v1404 = vsel %vm477, %v1403, 0.0
      %1405 = vadd.xlane.f32.xlu0 %v1404
      %v1406 = vpop.xlane.xlu0 %1405
      %v1407 = vrcp.pop 32.0
      %v1408 = vmul.f32 %v1406, %v1407
      %v1409 = vsub.f32 %v1403, %v1408
      %v1410 = vmul.f32 %v1409, %v1409
      %v1411 = vsel %vm477, %v1410, 0.0
      %1412 = vadd.xlane.f32.xlu0 %v1411
      %v1413 = vpop.xlane.xlu0 %1412
      %v1414 = vmul.f32 %v1413, %v1407
      %v1415 = vadd.f32 %v1414, 1e-05
      %v1416 = vrsqrt.pop %v1415
      %v1417 = vmul.f32 %v1409, %v1416
      %v1418 = vld [vmem:[%s10] sm:$0x1]
      %v1420 = vlaneseq
      %v1421 = vshrl.u32 %v1420, 7
      %v1422 = vsub.s32 0, %v1421
      %v1423 = vrot.slane %v1418, %v1422
      %v1425 = vmul.f32 %v1417, %v1423
      %v1426 = vld [vmem:[%s11] sm:$0x1]
      %v1428 = vlaneseq
      %v1429 = vshrl.u32 %v1428, 7
      %v1430 = vsub.s32 0, %v1429
      %v1431 = vrot.slane %v1426, %v1430
      %v1433 = vadd.f32 %v1425, %v1431
      %1434 = vst.msk [vmem:[%s459] sm:$0xff] %vm477, %v1433
      %p1435 = scmp.lt.s32.totalorder %s23, 1
      %s1436 = scalar_select %p1435, %s23, 1
      %s1437 = smul.addr %s1436, 8
      %s1438 = scalar_lea.vmem %s12, %s1437
      // Predicated region
      $region69: #{transformer_decoder_layer.3} parent=67 // pred_check
        %p1439 = pneg %p313
      $region70: #{transformer_decoder_layer.3} parent=67 // pred_check_branch
        %1441 = sbr.rel (%p1439) target = $region72
      $region71: #{transformer_decoder_layer.3} parent=67 // pred_region
        _
      $region72: #{transformer_decoder_layer.3} parent=67 // pred_fallthru
        _
    $region68: #{transformer_decoder_layer.3} parent=5 // pred_fallthru
      _
    %p1442 = scmp.le.s32.totalorder 2, %s18
    // Predicated region
    $region73: #{transformer_decoder_layer.3} parent=5 // pred_check
      %p1443 = pneg %p1442
    $region74: #{transformer_decoder_layer.3} parent=5 // pred_check_branch
      %1445 = sbr.rel (%p1443) target = $region76
    $region75: #{transformer_decoder_layer.3} parent=5 // pred_region
      %s1446 = ssub.s32 %s18, 2
      // Predicated region
      $region77: #{transformer_decoder_layer.3} parent=75 // pred_check
        %p1447 = pneg %p319
      $region78: #{transformer_decoder_layer.3} parent=75 // pred_check_branch
        %1449 = sbr.rel (%p1447) target = $region80
      $region79: #{transformer_decoder_layer.3} parent=75 // pred_region
        %p1450 = scmp.lt.s32.totalorder %s24, 1
        %s1451 = scalar_select %p1450, %s24, 1
        %s1452 = smul.addr %s1451, 8
        %s1453 = scalar_lea.vmem %s12, %s1452
      $region80: #{transformer_decoder_layer.3} parent=75 // pred_fallthru
        _
    $region76: #{transformer_decoder_layer.3} parent=5 // pred_fallthru
      _
  $region6: #{transformer_decoder_layer.3} parent=0 // loop_footer
    %s22 = sadd.s32 1, %s18
  $region7: #{transformer_decoder_layer.3} parent=0 // loop_footer_branch
    %17 = sbr.rel target = $region3
  $region8: #{transformer_decoder_layer.3} parent=0 // loop_exit
    _

// kernel: transformer_decoder_layer.4
$region0: #{transformer_decoder_layer.4}
  #allocation0 [shape = 'u32[]', space=smem, size = 0x4, offset = 0x4, fixed_abs, tag = 'smem constant byte address 0x4 - core index']
  #allocation1 [shape = 'u32[144,128]{1,0:T(1,128)}', space=vmem, size = 0x12000, scoped, tag = 'internal scratch']
  %s0 = inlined_call_operand.vmem [shape: f32[2,8,32], index: 0, kind: input, shape index: {}]
  %s1 = inlined_call_operand.vmem [shape: f32[2,8,32], index: 1, kind: input, shape index: {}]
  %s2 = inlined_call_operand.vmem [shape: f32[2,16,32], index: 2, kind: input, shape index: {}]
  %s3 = inlined_call_operand.vmem [shape: f32[2,16,32], index: 3, kind: input, shape index: {}]
  %s4 = inlined_call_operand.vmem [shape: f32[32,32], index: 4, kind: input, shape index: {}]
  %s5 = inlined_call_operand.vmem [shape: f32[1,32], index: 5, kind: input, shape index: {}]
  %s6 = inlined_call_operand.vmem [shape: f32[32,64], index: 6, kind: input, shape index: {}]
  %s7 = inlined_call_operand.vmem [shape: f32[1,64], index: 7, kind: input, shape index: {}]
  %s8 = inlined_call_operand.vmem [shape: f32[32,32], index: 8, kind: input, shape index: {}]
  %s9 = inlined_call_operand.vmem [shape: f32[1,32], index: 9, kind: input, shape index: {}]
  %s10 = inlined_call_operand.vmem [shape: f32[1,32], index: 10, kind: input, shape index: {}]
  %s11 = inlined_call_operand.vmem [shape: f32[1,32], index: 11, kind: input, shape index: {}]
  %s12 = inlined_call_operand.vmem [shape: f32[2,8,32], index: 12, kind: output, shape index: {}]
  %s13 = sld [smem:[#allocation0]]
  $region81: #{transformer_decoder_layer.4} parent=0
    _
  %s15 = ssub.s32 1, %s13
  %s16 = scalar_select 0, %s15, %s13
  loop: start=0, step=1, limit=4
  $region2: #{transformer_decoder_layer.4} parent=0 // loop_pre_header
    _
  $region3: #{transformer_decoder_layer.4} parent=0 // loop_header
    %s18 = sphi 0, %s22
    %p19 = scmp.ge.s32.totalorder %s18, 4
    %s28 = sphi 0, %s30
    %s31 = sphi 0, %s28
    %s32 = sphi 0, %s31
    %s48 = sphi 0, %s32
    %s54 = sphi 0, %s56
    %s57 = sphi 0, %s54
    %s58 = sphi 0, %s57
    %s74 = sphi 0, %s58
    %s80 = sphi 0, %s82
    %s83 = sphi 0, %s80
    %s84 = sphi 0, %s83
    %s100 = sphi 0, %s84
    %s106 = sphi 0, %s108
    %s109 = sphi 0, %s106
    %s110 = sphi 0, %s109
    %s126 = sphi 0, %s110
    %s130 = sphi 0, %s130
    %s132 = sphi 0, %s130
    %s133 = sphi 0, %s132
    %s147 = sphi 0, %s133
    %s151 = sphi 0, %s151
    %s153 = sphi 0, %s151
    %s154 = sphi 0, %s153
    %s168 = sphi 0, %s154
    %s172 = sphi 0, %s172
    %s174 = sphi 0, %s172
    %s175 = sphi 0, %s174
    %s189 = sphi 0, %s175
    %s193 = sphi 0, %s193
    %s195 = sphi 0, %s193
    %s196 = sphi 0, %s195
    %s210 = sphi 0, %s196
    %s214 = sphi 0, %s214
    %s216 = sphi 0, %s214
    %s217 = sphi 0, %s216
    %s231 = sphi 0, %s217
    %s235 = sphi 0, %s235
    %s237 = sphi 0, %s235
    %s238 = sphi 0, %s237
    %s252 = sphi 0, %s238
    %s256 = sphi 0, %s256
    %s258 = sphi 0, %s256
    %s259 = sphi 0, %s258
    %s273 = sphi 0, %s259
    %s277 = sphi 0, %s277
    %s279 = sphi 0, %s277
    %s280 = sphi 0, %s279
    %s294 = sphi 0, %s280
    %s300 = sphi 0, %s302
    %s303 = sphi 0, %s300
    %s304 = sphi 0, %s303
    %s320 = sphi 0, %s304
  $region4: #{transformer_decoder_layer.4} parent=0 // loop_header_branch
    %21 = sbr.rel (%p19) target = $region8
  $region5: #{transformer_decoder_layer.4} parent=0 // loop_body
    %s23 = ssub.s32 %s18, 1
    %s24 = ssub.s32 %s18, 2
    %s25 = sadd.s32 %s18, 1
    %s26 = ssub.s32 %s18, %s25
    %p27 = scmp.eq.s32.totalorder %s26, 0
    %s29 = sadd.s32 %s28, 1
    %s30 = scalar_select %p27, %s28, %s29
    %p33 = pneg %p27
    %p34 = scmp.eq.s32.totalorder %s18, 1
    %p35 = por %p33, %p34
    %p36 = scmp.ne.s32.totalorder %s28, %s31
    %p37 = scmp.eq.s32.totalorder %s18, 0
    %p38 = por %p36, %p37
    %p39 = scmp.ne.s32.totalorder %s28, %s31
    %p40 = scmp.eq.s32.totalorder %s23, 1
    %p41 = por %p39, %p40
    %p42 = scmp.ne.s32.totalorder %s31, %s32
    %p43 = scmp.eq.s32.totalorder %s23, 0
    %p44 = por %p42, %p43
    %p45 = scmp.ne.s32.totalorder %s31, %s32
    %p46 = scmp.eq.s32.totalorder %s24, 1
    %p47 = por %p45, %p46
    %p49 = scmp.ne.s32.totalorder %s32, %s48
    %p50 = scmp.eq.s32.totalorder %s24, 0
    %p51 = por %p49, %p50
    %s52 = ssub.s32 %s18, %s25
    %p53 = scmp.eq.s32.totalorder %s52, 0
    %s55 = sadd.s32 %s54, 1
    %s56 = scalar_select %p53, %s54, %s55
    %p59 = pneg %p53
    %p60 = scmp.eq.s32.totalorder %s18, 1
    %p61 = por %p59, %p60
    %p62 = scmp.ne.s32.totalorder %s54, %s57
    %p63 = scmp.eq.s32.totalorder %s18, 0
    %p64 = por %p62, %p63
    %p65 = scmp.ne.s32.totalorder %s54, %s57
    %p66 = scmp.eq.s32.totalorder %s23, 1
    %p67 = por %p65, %p66
    %p68 = scmp.ne.s32.totalorder %s57, %s58
    %p69 = scmp.eq.s32.totalorder %s23, 0
    %p70 = por %p68, %p69
    %p71 = scmp.ne.s32.totalorder %s57, %s58
    %p72 = scmp.eq.s32.totalorder %s24, 1
    %p73 = por %p71, %p72
    %p75 = scmp.ne.s32.totalorder %s58, %s74
    %p76 = scmp.eq.s32.totalorder %s24, 0
    %p77 = por %p75, %p76
    %s78 = ssub.s32 %s18, %s25
    %p79 = scmp.eq.s32.totalorder %s78, 0
    %s81 = sadd.s32 %s80, 1
    %s82 = scalar_select %p79, %s80, %s81
    %p85 = pneg %p79
    %p86 = scmp.eq.s32.totalorder %s18, 1
    %p87 = por %p85, %p86
    %p88 = scmp.ne.s32.totalorder %s80, %s83
    %p89 = scmp.eq.s32.totalorder %s18, 0
    %p90 = por %p88, %p89
    %p91 = scmp.ne.s32.totalorder %s80, %s83
    %p92 = scmp.eq.s32.totalorder %s23, 1
    %p93 = por %p91, %p92
    %p94 = scmp.ne.s32.totalorder %s83, %s84
    %p95 = scmp.eq.s32.totalorder %s23, 0
    %p96 = por %p94, %p95
    %p97 = scmp.ne.s32.totalorder %s83, %s84
    %p98 = scmp.eq.s32.totalorder %s24, 1
    %p99 = por %p97, %p98
    %p101 = scmp.ne.s32.totalorder %s84, %s100
    %p102 = scmp.eq.s32.totalorder %s24, 0
    %p103 = por %p101, %p102
    %s104 = ssub.s32 %s18, %s25
    %p105 = scmp.eq.s32.totalorder %s104, 0
    %s107 = sadd.s32 %s106, 1
    %s108 = scalar_select %p105, %s106, %s107
    %p111 = pneg %p105
    %p112 = scmp.eq.s32.totalorder %s18, 1
    %p113 = por %p111, %p112
    %p114 = scmp.ne.s32.totalorder %s106, %s109
    %p115 = scmp.eq.s32.totalorder %s18, 0
    %p116 = por %p114, %p115
    %p117 = scmp.ne.s32.totalorder %s106, %s109
    %p118 = scmp.eq.s32.totalorder %s23, 1
    %p119 = por %p117, %p118
    %p120 = scmp.ne.s32.totalorder %s109, %s110
    %p121 = scmp.eq.s32.totalorder %s23, 0
    %p122 = por %p120, %p121
    %p123 = scmp.ne.s32.totalorder %s109, %s110
    %p124 = scmp.eq.s32.totalorder %s24, 1
    %p125 = por %p123, %p124
    %p127 = scmp.ne.s32.totalorder %s110, %s126
    %p128 = scmp.eq.s32.totalorder %s24, 0
    %p129 = por %p127, %p128
    %s131 = sadd.s32 %s130, 1
    %p134 = scmp.eq.s32.totalorder %s18, 1
    %p135 = scmp.ne.s32.totalorder %s130, %s132
    %p136 = scmp.eq.s32.totalorder %s18, 0
    %p137 = por %p135, %p136
    %p138 = scmp.ne.s32.totalorder %s130, %s132
    %p139 = scmp.eq.s32.totalorder %s23, 1
    %p140 = por %p138, %p139
    %p141 = scmp.ne.s32.totalorder %s132, %s133
    %p142 = scmp.eq.s32.totalorder %s23, 0
    %p143 = por %p141, %p142
    %p144 = scmp.ne.s32.totalorder %s132, %s133
    %p145 = scmp.eq.s32.totalorder %s24, 1
    %p146 = por %p144, %p145
    %p148 = scmp.ne.s32.totalorder %s133, %s147
    %p149 = scmp.eq.s32.totalorder %s24, 0
    %p150 = por %p148, %p149
    %s152 = sadd.s32 %s151, 1
    %p155 = scmp.eq.s32.totalorder %s18, 1
    %p156 = scmp.ne.s32.totalorder %s151, %s153
    %p157 = scmp.eq.s32.totalorder %s18, 0
    %p158 = por %p156, %p157
    %p159 = scmp.ne.s32.totalorder %s151, %s153
    %p160 = scmp.eq.s32.totalorder %s23, 1
    %p161 = por %p159, %p160
    %p162 = scmp.ne.s32.totalorder %s153, %s154
    %p163 = scmp.eq.s32.totalorder %s23, 0
    %p164 = por %p162, %p163
    %p165 = scmp.ne.s32.totalorder %s153, %s154
    %p166 = scmp.eq.s32.totalorder %s24, 1
    %p167 = por %p165, %p166
    %p169 = scmp.ne.s32.totalorder %s154, %s168
    %p170 = scmp.eq.s32.totalorder %s24, 0
    %p171 = por %p169, %p170
    %s173 = sadd.s32 %s172, 1
    %p176 = scmp.eq.s32.totalorder %s18, 1
    %p177 = scmp.ne.s32.totalorder %s172, %s174
    %p178 = scmp.eq.s32.totalorder %s18, 0
    %p179 = por %p177, %p178
    %p180 = scmp.ne.s32.totalorder %s172, %s174
    %p181 = scmp.eq.s32.totalorder %s23, 1
    %p182 = por %p180, %p181
    %p183 = scmp.ne.s32.totalorder %s174, %s175
    %p184 = scmp.eq.s32.totalorder %s23, 0
    %p185 = por %p183, %p184
    %p186 = scmp.ne.s32.totalorder %s174, %s175
    %p187 = scmp.eq.s32.totalorder %s24, 1
    %p188 = por %p186, %p187
    %p190 = scmp.ne.s32.totalorder %s175, %s189
    %p191 = scmp.eq.s32.totalorder %s24, 0
    %p192 = por %p190, %p191
    %s194 = sadd.s32 %s193, 1
    %p197 = scmp.eq.s32.totalorder %s18, 1
    %p198 = scmp.ne.s32.totalorder %s193, %s195
    %p199 = scmp.eq.s32.totalorder %s18, 0
    %p200 = por %p198, %p199
    %p201 = scmp.ne.s32.totalorder %s193, %s195
    %p202 = scmp.eq.s32.totalorder %s23, 1
    %p203 = por %p201, %p202
    %p204 = scmp.ne.s32.totalorder %s195, %s196
    %p205 = scmp.eq.s32.totalorder %s23, 0
    %p206 = por %p204, %p205
    %p207 = scmp.ne.s32.totalorder %s195, %s196
    %p208 = scmp.eq.s32.totalorder %s24, 1
    %p209 = por %p207, %p208
    %p211 = scmp.ne.s32.totalorder %s196, %s210
    %p212 = scmp.eq.s32.totalorder %s24, 0
    %p213 = por %p211, %p212
    %s215 = sadd.s32 %s214, 1
    %p218 = scmp.eq.s32.totalorder %s18, 1
    %p219 = scmp.ne.s32.totalorder %s214, %s216
    %p220 = scmp.eq.s32.totalorder %s18, 0
    %p221 = por %p219, %p220
    %p222 = scmp.ne.s32.totalorder %s214, %s216
    %p223 = scmp.eq.s32.totalorder %s23, 1
    %p224 = por %p222, %p223
    %p225 = scmp.ne.s32.totalorder %s216, %s217
    %p226 = scmp.eq.s32.totalorder %s23, 0
    %p227 = por %p225, %p226
    %p228 = scmp.ne.s32.totalorder %s216, %s217
    %p229 = scmp.eq.s32.totalorder %s24, 1
    %p230 = por %p228, %p229
    %p232 = scmp.ne.s32.totalorder %s217, %s231
    %p233 = scmp.eq.s32.totalorder %s24, 0
    %p234 = por %p232, %p233
    %s236 = sadd.s32 %s235, 1
    %p239 = scmp.eq.s32.totalorder %s18, 1
    %p240 = scmp.ne.s32.totalorder %s235, %s237
    %p241 = scmp.eq.s32.totalorder %s18, 0
    %p242 = por %p240, %p241
    %p243 = scmp.ne.s32.totalorder %s235, %s237
    %p244 = scmp.eq.s32.totalorder %s23, 1
    %p245 = por %p243, %p244
    %p246 = scmp.ne.s32.totalorder %s237, %s238
    %p247 = scmp.eq.s32.totalorder %s23, 0
    %p248 = por %p246, %p247
    %p249 = scmp.ne.s32.totalorder %s237, %s238
    %p250 = scmp.eq.s32.totalorder %s24, 1
    %p251 = por %p249, %p250
    %p253 = scmp.ne.s32.totalorder %s238, %s252
    %p254 = scmp.eq.s32.totalorder %s24, 0
    %p255 = por %p253, %p254
    %s257 = sadd.s32 %s256, 1
    %p260 = scmp.eq.s32.totalorder %s18, 1
    %p261 = scmp.ne.s32.totalorder %s256, %s258
    %p262 = scmp.eq.s32.totalorder %s18, 0
    %p263 = por %p261, %p262
    %p264 = scmp.ne.s32.totalorder %s256, %s258
    %p265 = scmp.eq.s32.totalorder %s23, 1
    %p266 = por %p264, %p265
    %p267 = scmp.ne.s32.totalorder %s258, %s259
    %p268 = scmp.eq.s32.totalorder %s23, 0
    %p269 = por %p267, %p268
    %p270 = scmp.ne.s32.totalorder %s258, %s259
    %p271 = scmp.eq.s32.totalorder %s24, 1
    %p272 = por %p270, %p271
    %p274 = scmp.ne.s32.totalorder %s259, %s273
    %p275 = scmp.eq.s32.totalorder %s24, 0
    %p276 = por %p274, %p275
    %s278 = sadd.s32 %s277, 1
    %p281 = scmp.eq.s32.totalorder %s18, 1
    %p282 = scmp.ne.s32.totalorder %s277, %s279
    %p283 = scmp.eq.s32.totalorder %s18, 0
    %p284 = por %p282, %p283
    %p285 = scmp.ne.s32.totalorder %s277, %s279
    %p286 = scmp.eq.s32.totalorder %s23, 1
    %p287 = por %p285, %p286
    %p288 = scmp.ne.s32.totalorder %s279, %s280
    %p289 = scmp.eq.s32.totalorder %s23, 0
    %p290 = por %p288, %p289
    %p291 = scmp.ne.s32.totalorder %s279, %s280
    %p292 = scmp.eq.s32.totalorder %s24, 1
    %p293 = por %p291, %p292
    %p295 = scmp.ne.s32.totalorder %s280, %s294
    %p296 = scmp.eq.s32.totalorder %s24, 0
    %p297 = por %p295, %p296
    %s298 = ssub.s32 %s18, %s25
    %p299 = scmp.eq.s32.totalorder %s298, 0
    %s301 = sadd.s32 %s300, 1
    %s302 = scalar_select %p299, %s300, %s301
    %p305 = pneg %p299
    %p306 = scmp.eq.s32.totalorder %s18, 1
    %p307 = por %p305, %p306
    %p308 = scmp.ne.s32.totalorder %s300, %s303
    %p309 = scmp.eq.s32.totalorder %s18, 0
    %p310 = por %p308, %p309
    %p311 = scmp.ne.s32.totalorder %s300, %s303
    %p312 = scmp.eq.s32.totalorder %s23, 1
    %p313 = por %p311, %p312
    %p314 = scmp.ne.s32.totalorder %s303, %s304
    %p315 = scmp.eq.s32.totalorder %s23, 0
    %p316 = por %p314, %p315
    %p317 = scmp.ne.s32.totalorder %s303, %s304
    %p318 = scmp.eq.s32.totalorder %s24, 1
    %p319 = por %p317, %p318
    %p321 = scmp.ne.s32.totalorder %s304, %s320
    %p322 = scmp.eq.s32.totalorder %s24, 0
    %p323 = por %p321, %p322
    %p324 = scmp.le.s32.totalorder 1, %s18
    %p325 = scmp.lt.s32.totalorder %s18, 3
    %p326 = pnand %p324, %p325
    %p327 = pneg %p326
    // Predicated region
    $region9: #{transformer_decoder_layer.4} parent=5 // pred_check
      _
    $region10: #{transformer_decoder_layer.4} parent=5 // pred_check_branch
      %329 = sbr.rel (%p326) target = $region12
    $region11: #{transformer_decoder_layer.4} parent=5 // pred_region
      %s330 = ssub.s32 %s18, 1
      // Predicated region
      $region13: #{transformer_decoder_layer.4} parent=11 // pred_check
        %p331 = pneg %p143
      $region14: #{transformer_decoder_layer.4} parent=11 // pred_check_branch
        %333 = sbr.rel (%p331) target = $region16
      $region15: #{transformer_decoder_layer.4} parent=11 // pred_region
        _
      $region16: #{transformer_decoder_layer.4} parent=11 // pred_fallthru
        _
      // Predicated region
      $region17: #{transformer_decoder_layer.4} parent=11 // pred_check
        %p334 = pneg %p164
      $region18: #{transformer_decoder_layer.4} parent=11 // pred_check_branch
        %336 = sbr.rel (%p334) target = $region20
      $region19: #{transformer_decoder_layer.4} parent=11 // pred_region
        _
      $region20: #{transformer_decoder_layer.4} parent=11 // pred_fallthru
        _
      // Predicated region
      $region21: #{transformer_decoder_layer.4} parent=11 // pred_check
        %p337 = pneg %p185
      $region22: #{transformer_decoder_layer.4} parent=11 // pred_check_branch
        %339 = sbr.rel (%p337) target = $region24
      $region23: #{transformer_decoder_layer.4} parent=11 // pred_region
        _
      $region24: #{transformer_decoder_layer.4} parent=11 // pred_fallthru
        _
      // Predicated region
      $region25: #{transformer_decoder_layer.4} parent=11 // pred_check
        %p340 = pneg %p206
      $region26: #{transformer_decoder_layer.4} parent=11 // pred_check_branch
        %342 = sbr.rel (%p340) target = $region28
      $region27: #{transformer_decoder_layer.4} parent=11 // pred_region
        _
      $region28: #{transformer_decoder_layer.4} parent=11 // pred_fallthru
        _
      // Predicated region
      $region29: #{transformer_decoder_layer.4} parent=11 // pred_check
        %p343 = pneg %p227
      $region30: #{transformer_decoder_layer.4} parent=11 // pred_check_branch
        %345 = sbr.rel (%p343) target = $region32
      $region31: #{transformer_decoder_layer.4} parent=11 // pred_region
        _
      $region32: #{transformer_decoder_layer.4} parent=11 // pred_fallthru
        _
      // Predicated region
      $region33: #{transformer_decoder_layer.4} parent=11 // pred_check
        %p346 = pneg %p248
      $region34: #{transformer_decoder_layer.4} parent=11 // pred_check_branch
        %348 = sbr.rel (%p346) target = $region36
      $region35: #{transformer_decoder_layer.4} parent=11 // pred_region
        _
      $region36: #{transformer_decoder_layer.4} parent=11 // pred_fallthru
        _
      // Predicated region
      $region37: #{transformer_decoder_layer.4} parent=11 // pred_check
        %p349 = pneg %p269
      $region38: #{transformer_decoder_layer.4} parent=11 // pred_check_branch
        %351 = sbr.rel (%p349) target = $region40
      $region39: #{transformer_decoder_layer.4} parent=11 // pred_region
        _
      $region40: #{transformer_decoder_layer.4} parent=11 // pred_fallthru
        _
      // Predicated region
      $region41: #{transformer_decoder_layer.4} parent=11 // pred_check
        %p352 = pneg %p290
      $region42: #{transformer_decoder_layer.4} parent=11 // pred_check_branch
        %354 = sbr.rel (%p352) target = $region44
      $region43: #{transformer_decoder_layer.4} parent=11 // pred_region
        _
      $region44: #{transformer_decoder_layer.4} parent=11 // pred_fallthru
        _
    $region12: #{transformer_decoder_layer.4} parent=5 // pred_fallthru
      _
    %p355 = scmp.lt.s32.totalorder %s18, 2
    // Predicated region
    $region45: #{transformer_decoder_layer.4} parent=5 // pred_check
      %p356 = pneg %p355
    $region46: #{transformer_decoder_layer.4} parent=5 // pred_check_branch
      %358 = sbr.rel (%p356) target = $region48
    $region47: #{transformer_decoder_layer.4} parent=5 // pred_region
      // Predicated region
      $region49: #{transformer_decoder_layer.4} parent=47 // pred_check
        %p359 = pneg %p38
      $region50: #{transformer_decoder_layer.4} parent=47 // pred_check_branch
        %361 = sbr.rel (%p359) target = $region52
      $region51: #{transformer_decoder_layer.4} parent=47 // pred_region
        %p362 = scmp.lt.s32.totalorder %s18, 1
        %s363 = scalar_select %p362, %s18, 1
        %s364 = smul.addr %s363, 8
        %s365 = scalar_lea.vmem %s0, %s364
      $region52: #{transformer_decoder_layer.4} parent=47 // pred_fallthru
        _
      // Predicated region
      $region53: #{transformer_decoder_layer.4} parent=47 // pred_check
        %p366 = pneg %p64
      $region54: #{transformer_decoder_layer.4} parent=47 // pred_check_branch
        %368 = sbr.rel (%p366) target = $region56
      $region55: #{transformer_decoder_layer.4} parent=47 // pred_region
        %p369 = scmp.lt.s32.totalorder %s18, 1
        %s370 = scalar_select %p369, %s18, 1
        %s371 = smul.addr %s370, 8
        %s372 = scalar_lea.vmem %s1, %s371
      $region56: #{transformer_decoder_layer.4} parent=47 // pred_fallthru
        _
      // Predicated region
      $region57: #{transformer_decoder_layer.4} parent=47 // pred_check
        %p373 = pneg %p90
      $region58: #{transformer_decoder_layer.4} parent=47 // pred_check_branch
        %375 = sbr.rel (%p373) target = $region60
      $region59: #{transformer_decoder_layer.4} parent=47 // pred_region
        %p376 = scmp.lt.s32.totalorder %s18, 1
        %s377 = scalar_select %p376, %s18, 1
        %s378 = smul.addr %s377, 2
        %s379 = smul.addr %s378, 8
        %s380 = scalar_lea.vmem %s2, %s379
      $region60: #{transformer_decoder_layer.4} parent=47 // pred_fallthru
        _
      // Predicated region
      $region61: #{transformer_decoder_layer.4} parent=47 // pred_check
        %p381 = pneg %p116
      $region62: #{transformer_decoder_layer.4} parent=47 // pred_check_branch
        %383 = sbr.rel (%p381) target = $region64
      $region63: #{transformer_decoder_layer.4} parent=47 // pred_region
        %p384 = scmp.lt.s32.totalorder %s18, 1
        %s385 = scalar_select %p384, %s18, 1
        %s386 = smul.addr %s385, 2
        %s387 = smul.addr %s386, 8
        %s388 = scalar_lea.vmem %s3, %s387
      $region64: #{transformer_decoder_layer.4} parent=47 // pred_fallthru
        _
    $region48: #{transformer_decoder_layer.4} parent=5 // pred_fallthru
      _
    %p389 = scmp.le.s32.totalorder 1, %s18
    %p390 = scmp.lt.s32.totalorder %s18, 3
    %p391 = pnand %p389, %p390
    %p392 = pneg %p391
    // Predicated region
    $region65: #{transformer_decoder_layer.4} parent=5 // pred_check
      _
    $region66: #{transformer_decoder_layer.4} parent=5 // pred_check_branch
      %394 = sbr.rel (%p391) target = $region68
    $region67: #{transformer_decoder_layer.4} parent=5 // pred_region
      %s395 = ssub.s32 %s18, 1
      %p396 = scmp.lt.s32.totalorder %s23, 1
      %s397 = scalar_select %p396, %s23, 1
      %s398 = smul.addr %s397, 8
      %s399 = scalar_lea.vmem %s0, %s398
      %p400 = pneg %p44
      %p401 = pneg %p41
      %p402 = scmp.lt.s32.totalorder %s23, 1
      %s403 = scalar_select %p402, %s23, 1
      %s404 = smul.addr %s403, 8
      %s405 = scalar_lea.vmem %s1, %s404
      %p406 = pneg %p70
      %p407 = pneg %p67
      %p408 = scmp.lt.s32.totalorder %s23, 1
      %s409 = scalar_select %p408, %s23, 1
      %s410 = smul.addr %s409, 2
      %s411 = smul.addr %s410, 8
      %s412 = scalar_lea.vmem %s2, %s411
      %p413 = pneg %p96
      %p414 = pneg %p93
      %p415 = scmp.lt.s32.totalorder %s23, 1
      %s416 = scalar_select %p415, %s23, 1
      %s417 = smul.addr %s416, 2
      %s418 = smul.addr %s417, 8
      %s419 = scalar_lea.vmem %s3, %s418
      %p420 = pneg %p122
      %p421 = pneg %p119
      %p422 = pneg %p143
      %p423 = pneg %p140
      %p424 = pneg %p164
      %p425 = pneg %p161
      %p426 = pneg %p185
      %p427 = pneg %p182
      %p428 = pneg %p206
      %p429 = pneg %p203
      %p430 = pneg %p227
      %p431 = pneg %p224
      %p432 = pneg %p248
      %p433 = pneg %p245
      %p434 = pneg %p269
      %p435 = pneg %p266
      %p436 = pneg %p290
      %p437 = pneg %p287
      %p438 = pneg %p316
      %p439 = pneg %p313
      %p440 = scmp.lt.s32.totalorder %s23, 1
      %s441 = scalar_select %p440, %s23, 1
      %s442 = smul.addr %s441, 8
      %s443 = scalar_lea.vmem %s12, %s442
      %p444 = scmp.lt.s32.totalorder %s23, 1
      %s445 = scalar_select %p444, %s23, 1
      %s446 = smul.addr %s445, 8
      %s447 = scalar_lea.vmem %s0, %s446
      %p448 = scmp.lt.s32.totalorder %s23, 1
      %s449 = scalar_select %p448, %s23, 1
      %s450 = smul.addr %s449, 8
      %s451 = scalar_lea.vmem %s1, %s450
      %p452 = scmp.lt.s32.totalorder %s23, 1
      %s453 = scalar_select %p452, %s23, 1
      %s454 = smul.addr %s453, 2
      %s455 = smul.addr %s454, 8
      %s456 = scalar_lea.vmem %s2, %s455
      %p457 = scmp.lt.s32.totalorder %s23, 1
      %s458 = scalar_select %p457, %s23, 1
      %s459 = smul.addr %s458, 2
      %s460 = smul.addr %s459, 8
      %s461 = scalar_lea.vmem %s3, %s460
      %p462 = scmp.lt.s32.totalorder %s23, 1
      %s463 = scalar_select %p462, %s23, 1
      %s464 = smul.addr %s463, 8
      %s465 = scalar_lea.vmem %s12, %s464
      %v466 = vld [vmem:[%s447] sm:$0xff]
      %v467 = vld [vmem:[%s451] sm:$0xff]
      %v468 = vadd.f32 %v466, %v467
      %v469 = vld [vmem:[%s456] sm:$0xff]
      %v470 = vld [vmem:[%s456 + $0x8] sm:$0xff]
      %v471 = vld [vmem:[%s461] sm:$0xff]
      %v472 = vld [vmem:[%s461 + $0x8] sm:$0xff]
      %v473 = vadd.f32 %v469, %v471
      %v474 = vadd.f32 %v470, %v472
      %v475 = vld [vmem:[%s4] sm:$0xff]
      %v476 = vld [vmem:[%s4 + $0x8] sm:$0xff]
      %v477 = vld [vmem:[%s4 + $0x10] sm:$0xff]
      %v478 = vld [vmem:[%s4 + $0x18] sm:$0xff]
      %v479 = vld [vmem:[%s5] sm:$0x1]
      %v481 = vlaneseq
      %v482 = vshrl.u32 %v481, 7
      %v483 = vsub.s32 0, %v482
      %v484 = vrot.slane %v479, %v483
      %vm486 = vcmask 261120
      %v488 = vsel %vm486, %v468, 0
      %490 = vmatprep.subr.mxu0 0.0
      %491 = vmatpush1.msra.mxu0 %v475
      %492 = vmatprep.subr.mxu0 0.0
      %493 = vmatpush1.msra.mxu0 %v476
      %494 = vmatprep.subr.mxu0 0.0
      %495 = vmatpush1.msra.mxu0 %v477
      %496 = vmatprep.subr.mxu0 0.0
      %497 = vmatpush1.msra.mxu0 %v478
      %498 = vmatprep.subr.mxu0 0.0
      %499 = vmatpush1.msra.mxu0 0.0
      %500 = vmatprep.subr.mxu0 0.0
      %501 = vmatpush1.msra.mxu0 0.0
      %502 = vmatprep.subr.mxu0 0.0
      %503 = vmatpush1.msra.mxu0 0.0
      %504 = vmatprep.subr.mxu0 0.0
      %505 = vmatpush1.msra.mxu0 0.0
      %506 = vmatprep.subr.mxu0 0.0
      %507 = vmatpush1.msra.mxu0 0.0
      %508 = vmatprep.subr.mxu0 0.0
      %509 = vmatpush1.msra.mxu0 0.0
      %510 = vmatprep.subr.mxu0 0.0
      %511 = vmatpush1.msra.mxu0 0.0
      %512 = vmatprep.subr.mxu0 0.0
      %513 = vmatpush1.msra.mxu0 0.0
      %514 = vmatprep.subr.mxu0 0.0
      %515 = vmatpush1.msra.mxu0 0.0
      %516 = vmatprep.subr.mxu0 0.0
      %517 = vmatpush1.msra.mxu0 0.0
      %518 = vmatprep.subr.mxu0 0.0
      %519 = vmatpush1.msra.mxu0 0.0
      %520 = vmatprep.subr.mxu0 0.0
      %521 = vmatpush1.msra.mxu0 0.0
      %522 = vmatprep.subr.mxu0 0.0
      %523 = vmatpush1.msra.mxu0 0.0
      %524 = vmatprep.subr.mxu0 0.0
      %525 = vmatpush1.msra.mxu0 0.0
      %526 = vmatprep.subr.mxu0 0.0
      %527 = vmatpush1.msra.mxu0 0.0
      %528 = vmatprep.subr.mxu0 0.0
      %529 = vmatpush1.msra.mxu0 0.0
      %530 = vmatprep.subr.mxu0 0.0
      %531 = vmatpush1.msra.mxu0 0.0
      %532 = vmatprep.subr.mxu0 0.0
      %533 = vmatpush1.msra.mxu0 0.0
      %534 = vmatprep.subr.mxu0 0.0
      %535 = vmatpush1.msra.mxu0 0.0
      %536 = vmatprep.subr.mxu0 0.0
      %537 = vmatpush1.msra.mxu0 0.0
      %538 = vmatprep.subr.mxu0 0.0
      %539 = vmatpush1.msra.mxu0 0.0
      %540 = vmatprep.subr.mxu0 0.0
      %541 = vmatpush1.msra.mxu0 0.0
      %542 = vmatprep.subr.mxu0 0.0
      %543 = vmatpush1.msra.mxu0 0.0
      %544 = vmatprep.subr.mxu0 0.0
      %545 = vmatpush1.msra.mxu0 0.0
      %546 = vmatprep.subr.mxu0 0.0
      %547 = vmatpush1.msra.mxu0 0.0
      %548 = vmatprep.subr.mxu0 0.0
      %549 = vmatpush1.msra.mxu0 0.0
      %550 = vmatprep.subr.mxu0 0.0
      %551 = vmatpush1.msra.mxu0 0.0
      %552 = vmatprep.subr.mxu0 0.0
      %553 = vmatpush1.msra.mxu0 0.0
      %554 = vmatprep.mubr.f32.mxu0 0.0
      %555 = vmatmul.mubr.f32.gmra.mrb[0].mxu0 %v488
      %v556 = vpop.f32.mrb[0].mxu0
      %v557 = vadd.f32 %v484, %v556
      %v558 = vpop.f32.mrb[0].mxu0
      %559 = vdwg.mxu0
      %v560 = vld [vmem:[%s6] sm:$0xff]
      %v561 = vld [vmem:[%s6 + $0x8] sm:$0xff]
      %v562 = vld [vmem:[%s6 + $0x10] sm:$0xff]
      %v563 = vld [vmem:[%s6 + $0x18] sm:$0xff]
      %v564 = vld [vmem:[%s7] sm:$0x1]
      %v566 = vlaneseq
      %v567 = vshrl.u32 %v566, 7
      %v568 = vsub.s32 0, %v567
      %v569 = vrot.slane %v564, %v568
      %v572 = vsel %vm486, %v473, 0
      %v575 = vsel %vm486, %v474, 0
      %577 = vmatprep.subr.mxu0 0.0
      %578 = vmatpush1.msra.mxu0 %v560
      %579 = vmatprep.subr.mxu0 0.0
      %580 = vmatpush1.msra.mxu0 %v561
      %581 = vmatprep.subr.mxu0 0.0
      %582 = vmatpush1.msra.mxu0 %v562
      %583 = vmatprep.subr.mxu0 0.0
      %584 = vmatpush1.msra.mxu0 %v563
      %585 = vmatprep.subr.mxu0 0.0
      %586 = vmatpush1.msra.mxu0 0.0
      %587 = vmatprep.subr.mxu0 0.0
      %588 = vmatpush1.msra.mxu0 0.0
      %589 = vmatprep.subr.mxu0 0.0
      %590 = vmatpush1.msra.mxu0 0.0
      %591 = vmatprep.subr.mxu0 0.0
      %592 = vmatpush1.msra.mxu0 0.0
      %593 = vmatprep.subr.mxu0 0.0
      %594 = vmatpush1.msra.mxu0 0.0
      %595 = vmatprep.subr.mxu0 0.0
      %596 = vmatpush1.msra.mxu0 0.0
      %597 = vmatprep.subr.mxu0 0.0
      %598 = vmatpush1.msra.mxu0 0.0
      %599 = vmatprep.subr.mxu0 0.0
      %600 = vmatpush1.msra.mxu0 0.0
      %601 = vmatprep.subr.mxu0 0.0
      %602 = vmatpush1.msra.mxu0 0.0
      %603 = vmatprep.subr.mxu0 0.0
      %604 = vmatpush1.msra.mxu0 0.0
      %605 = vmatprep.subr.mxu0 0.0
      %606 = vmatpush1.msra.mxu0 0.0
      %607 = vmatprep.subr.mxu0 0.0
      %608 = vmatpush1.msra.mxu0 0.0
      %609 = vmatprep.subr.mxu0 0.0
      %610 = vmatpush1.msra.mxu0 0.0
      %611 = vmatprep.subr.mxu0 0.0
      %612 = vmatpush1.msra.mxu0 0.0
      %613 = vmatprep.subr.mxu0 0.0
      %614 = vmatpush1.msra.mxu0 0.0
      %615 = vmatprep.subr.mxu0 0.0
      %616 = vmatpush1.msra.mxu0 0.0
      %617 = vmatprep.subr.mxu0 0.0
      %618 = vmatpush1.msra.mxu0 0.0
      %619 = vmatprep.subr.mxu0 0.0
      %620 = vmatpush1.msra.mxu0 0.0
      %621 = vmatprep.subr.mxu0 0.0
      %622 = vmatpush1.msra.mxu0 0.0
      %623 = vmatprep.subr.mxu0 0.0
      %624 = vmatpush1.msra.mxu0 0.0
      %625 = vmatprep.subr.mxu0 0.0
      %626 = vmatpush1.msra.mxu0 0.0
      %627 = vmatprep.subr.mxu0 0.0
      %628 = vmatpush1.msra.mxu0 0.0
      %629 = vmatprep.subr.mxu0 0.0
      %630 = vmatpush1.msra.mxu0 0.0
      %631 = vmatprep.subr.mxu0 0.0
      %632 = vmatpush1.msra.mxu0 0.0
      %633 = vmatprep.subr.mxu0 0.0
      %634 = vmatpush1.msra.mxu0 0.0
      %635 = vmatprep.subr.mxu0 0.0
      %636 = vmatpush1.msra.mxu0 0.0
      %637 = vmatprep.subr.mxu0 0.0
      %638 = vmatpush1.msra.mxu0 0.0
      %639 = vmatprep.subr.mxu0 0.0
      %640 = vmatpush1.msra.mxu0 0.0
      %641 = vmatprep.mubr.f32.mxu0 0.0
      %642 = vmatmul.mubr.f32.gmra.mrb[0].mxu0 %v572
      %v643 = vpop.f32.mrb[0].mxu0
      %v644 = vadd.f32 %v569, %v643
      %v645 = vpop.f32.mrb[0].mxu0
      %646 = vmatprep.mubr.f32.mxu0 0.0
      %647 = vmatmul.mubr.f32.gmra.mrb[0].mxu0 %v575
      %v648 = vpop.f32.mrb[0].mxu0
      %v649 = vadd.f32 %v569, %v648
      %v650 = vpop.f32.mrb[0].mxu0
      %651 = vdwg.mxu0
      %vm652 = vcmask 64512
      %v654 = vsel %vm652, %v557, 0
      %v657 = vsel %vm652, %v644, 0
      %v660 = vsel %vm652, %v649, 0
      %662 = vmatprep.subr.mxu0 0.0
      %663 = vmatpush1.xpose.msra.mxu0 %v657
      %664 = vmatprep.subr.mxu0 0.0
      %665 = vmatpush1.xpose.msra.mxu0 %v660
      %666 = vmatprep.subr.mxu0 0.0
      %667 = vmatpush1.xpose.msra.mxu0 0.0
      %668 = vmatprep.subr.mxu0 0.0
      %669 = vmatpush1.xpose.msra.mxu0 0.0
      %670 = vmatprep.subr.mxu0 0.0
      %671 = vmatpush1.xpose.msra.mxu0 0.0
      %672 = vmatprep.subr.mxu0 0.0
      %673 = vmatpush1.xpose.msra.mxu0 0.0
      %674 = vmatprep.subr.mxu0 0.0
      %675 = vmatpush1.xpose.msra.mxu0 0.0
      %676 = vmatprep.subr.mxu0 0.0
      %677 = vmatpush1.xpose.msra.mxu0 0.0
      %678 = vmatprep.subr.mxu0 0.0
      %679 = vmatpush1.xpose.msra.mxu0 0.0
      %680 = vmatprep.subr.mxu0 0.0
      %681 = vmatpush1.xpose.msra.mxu0 0.0
      %682 = vmatprep.subr.mxu0 0.0
      %683 = vmatpush1.xpose.msra.mxu0 0.0
      %684 = vmatprep.subr.mxu0 0.0
      %685 = vmatpush1.xpose.msra.mxu0 0.0
      %686 = vmatprep.subr.mxu0 0.0
      %687 = vmatpush1.xpose.msra.mxu0 0.0
      %688 = vmatprep.subr.mxu0 0.0
      %689 = vmatpush1.xpose.msra.mxu0 0.0
      %690 = vmatprep.subr.mxu0 0.0
      %691 = vmatpush1.xpose.msra.mxu0 0.0
      %692 = vmatprep.subr.mxu0 0.0
      %693 = vmatpush1.xpose.msra.mxu0 0.0
      %694 = vmatprep.subr.mxu0 0.0
      %695 = vmatpush1.xpose.msra.mxu0 0.0
      %696 = vmatprep.subr.mxu0 0.0
      %697 = vmatpush1.xpose.msra.mxu0 0.0
      %698 = vmatprep.subr.mxu0 0.0
      %699 = vmatpush1.xpose.msra.mxu0 0.0
      %700 = vmatprep.subr.mxu0 0.0
      %701 = vmatpush1.xpose.msra.mxu0 0.0
      %702 = vmatprep.subr.mxu0 0.0
      %703 = vmatpush1.xpose.msra.mxu0 0.0
      %704 = vmatprep.subr.mxu0 0.0
      %705 = vmatpush1.xpose.msra.mxu0 0.0
      %706 = vmatprep.subr.mxu0 0.0
      %707 = vmatpush1.xpose.msra.mxu0 0.0
      %708 = vmatprep.subr.mxu0 0.0
      %709 = vmatpush1.xpose.msra.mxu0 0.0
      %710 = vmatprep.subr.mxu0 0.0
      %711 = vmatpush1.xpose.msra.mxu0 0.0
      %712 = vmatprep.subr.mxu0 0.0
      %713 = vmatpush1.xpose.msra.mxu0 0.0
      %714 = vmatprep.subr.mxu0 0.0
      %715 = vmatpush1.xpose.msra.mxu0 0.0
      %716 = vmatprep.subr.mxu0 0.0
      %717 = vmatpush1.xpose.msra.mxu0 0.0
      %718 = vmatprep.subr.mxu0 0.0
      %719 = vmatpush1.xpose.msra.mxu0 0.0
      %720 = vmatprep.subr.mxu0 0.0
      %721 = vmatpush1.xpose.msra.mxu0 0.0
      %722 = vmatprep.subr.mxu0 0.0
      %723 = vmatpush1.xpose.msra.mxu0 0.0
      %724 = vmatprep.subr.mxu0 0.0
      %725 = vmatpush1.xpose.msra.mxu0 0.0
      %726 = vmatprep.mubr.f32.mxu0 0.0
      %727 = vmatmul.mubr.f32.gmra.mrb[0].mxu0 %v654
      %v728 = vpop.f32.mrb[0].mxu0
      %v729 = vadd.f32 0.0, %v728
      %v730 = vpop.f32.mrb[0].mxu0
      %731 = vdwg.mxu0
      %vm732 = vcmask 130048
      %v733 = vsel %vm732, %v729, -inf
      %734 = vmax.xlane.f32.xlu0 %v733
      %v735 = vpop.xlane.xlu0 %734
      %v736 = vmax.f32 %v735, -1e+30
      %v737 = vsub.f32 %v729, %v736
      %v738 = vmul.f32 %v737, 1.442695
      %v739 = vpow.pop %v738
      %v740 = vsel %vm732, %v739, 0.0
      %741 = vadd.xlane.f32.xlu0 %v740
      %v742 = vpop.xlane.xlu0 %741
      %743 = vrot.lane.b32.xlu0 %v644, 96
      %v744 = vpop.permute.xlu0 %743
      %745 = vrot.lane.b32.xlu0 %v649, 96
      %v746 = vpop.permute.xlu0 %745
      %v750 = vsel %vm732, %v739, 0
      %752 = vmatprep.subr.mxu0 0.0
      %753 = vmatpush1.msra.mxu0 %v744
      %754 = vmatprep.subr.mxu0 0.0
      %755 = vmatpush1.msra.mxu0 %v746
      %756 = vmatprep.subr.mxu0 0.0
      %757 = vmatpush1.msra.mxu0 0.0
      %758 = vmatprep.subr.mxu0 0.0
      %759 = vmatpush1.msra.mxu0 0.0
      %760 = vmatprep.subr.mxu0 0.0
      %761 = vmatpush1.msra.mxu0 0.0
      %762 = vmatprep.subr.mxu0 0.0
      %763 = vmatpush1.msra.mxu0 0.0
      %764 = vmatprep.subr.mxu0 0.0
      %765 = vmatpush1.msra.mxu0 0.0
      %766 = vmatprep.subr.mxu0 0.0
      %767 = vmatpush1.msra.mxu0 0.0
      %768 = vmatprep.subr.mxu0 0.0
      %769 = vmatpush1.msra.mxu0 0.0
      %770 = vmatprep.subr.mxu0 0.0
      %771 = vmatpush1.msra.mxu0 0.0
      %772 = vmatprep.subr.mxu0 0.0
      %773 = vmatpush1.msra.mxu0 0.0
      %774 = vmatprep.subr.mxu0 0.0
      %775 = vmatpush1.msra.mxu0 0.0
      %776 = vmatprep.subr.mxu0 0.0
      %777 = vmatpush1.msra.mxu0 0.0
      %778 = vmatprep.subr.mxu0 0.0
      %779 = vmatpush1.msra.mxu0 0.0
      %780 = vmatprep.subr.mxu0 0.0
      %781 = vmatpush1.msra.mxu0 0.0
      %782 = vmatprep.subr.mxu0 0.0
      %783 = vmatpush1.msra.mxu0 0.0
      %784 = vmatprep.subr.mxu0 0.0
      %785 = vmatpush1.msra.mxu0 0.0
      %786 = vmatprep.subr.mxu0 0.0
      %787 = vmatpush1.msra.mxu0 0.0
      %788 = vmatprep.subr.mxu0 0.0
      %789 = vmatpush1.msra.mxu0 0.0
      %790 = vmatprep.subr.mxu0 0.0
      %791 = vmatpush1.msra.mxu0 0.0
      %792 = vmatprep.subr.mxu0 0.0
      %793 = vmatpush1.msra.mxu0 0.0
      %794 = vmatprep.subr.mxu0 0.0
      %795 = vmatpush1.msra.mxu0 0.0
      %796 = vmatprep.subr.mxu0 0.0
      %797 = vmatpush1.msra.mxu0 0.0
      %798 = vmatprep.subr.mxu0 0.0
      %799 = vmatpush1.msra.mxu0 0.0
      %800 = vmatprep.subr.mxu0 0.0
      %801 = vmatpush1.msra.mxu0 0.0
      %802 = vmatprep.subr.mxu0 0.0
      %803 = vmatpush1.msra.mxu0 0.0
      %804 = vmatprep.subr.mxu0 0.0
      %805 = vmatpush1.msra.mxu0 0.0
      %806 = vmatprep.subr.mxu0 0.0
      %807 = vmatpush1.msra.mxu0 0.0
      %808 = vmatprep.subr.mxu0 0.0
      %809 = vmatpush1.msra.mxu0 0.0
      %810 = vmatprep.subr.mxu0 0.0
      %811 = vmatpush1.msra.mxu0 0.0
      %812 = vmatprep.subr.mxu0 0.0
      %813 = vmatpush1.msra.mxu0 0.0
      %814 = vmatprep.subr.mxu0 0.0
      %815 = vmatpush1.msra.mxu0 0.0
      %816 = vmatprep.mubr.f32.mxu0 0.0
      %817 = vmatmul.mubr.f32.gmra.mrb[0].mxu0 %v750
      %v818 = vpop.f32.mrb[0].mxu0
      %v819 = vadd.f32 0.0, %v818
      %v820 = vpop.f32.mrb[0].mxu0
      %821 = vdwg.mxu0
      %v822 = vmax.f32 %v742, 1e-30
      %v823 = vrcp.pop %v822
      %v824 = vmul.f32 %v819, %v823
      %825 = vrot.lane.b32.xlu0 %v557, 120
      %v826 = vpop.permute.xlu0 %825
      %827 = vrot.lane.b32.xlu0 %v644, 120
      %v828 = vpop.permute.xlu0 %827
      %829 = vrot.lane.b32.xlu0 %v649, 120
      %v830 = vpop.permute.xlu0 %829
      %v831 = vsel %vm652, %v826, 0
      %v833 = vsel %vm652, %v828, 0
      %v835 = vsel %vm652, %v830, 0
      %837 = vmatprep.subr.mxu0 0.0
      %838 = vmatpush1.xpose.msra.mxu0 %v833
      %839 = vmatprep.subr.mxu0 0.0
      %840 = vmatpush1.xpose.msra.mxu0 %v835
      %841 = vmatprep.subr.mxu0 0.0
      %842 = vmatpush1.xpose.msra.mxu0 0.0
      %843 = vmatprep.subr.mxu0 0.0
      %844 = vmatpush1.xpose.msra.mxu0 0.0
      %845 = vmatprep.subr.mxu0 0.0
      %846 = vmatpush1.xpose.msra.mxu0 0.0
      %847 = vmatprep.subr.mxu0 0.0
      %848 = vmatpush1.xpose.msra.mxu0 0.0
      %849 = vmatprep.subr.mxu0 0.0
      %850 = vmatpush1.xpose.msra.mxu0 0.0
      %851 = vmatprep.subr.mxu0 0.0
      %852 = vmatpush1.xpose.msra.mxu0 0.0
      %853 = vmatprep.subr.mxu0 0.0
      %854 = vmatpush1.xpose.msra.mxu0 0.0
      %855 = vmatprep.subr.mxu0 0.0
      %856 = vmatpush1.xpose.msra.mxu0 0.0
      %857 = vmatprep.subr.mxu0 0.0
      %858 = vmatpush1.xpose.msra.mxu0 0.0
      %859 = vmatprep.subr.mxu0 0.0
      %860 = vmatpush1.xpose.msra.mxu0 0.0
      %861 = vmatprep.subr.mxu0 0.0
      %862 = vmatpush1.xpose.msra.mxu0 0.0
      %863 = vmatprep.subr.mxu0 0.0
      %864 = vmatpush1.xpose.msra.mxu0 0.0
      %865 = vmatprep.subr.mxu0 0.0
      %866 = vmatpush1.xpose.msra.mxu0 0.0
      %867 = vmatprep.subr.mxu0 0.0
      %868 = vmatpush1.xpose.msra.mxu0 0.0
      %869 = vmatprep.subr.mxu0 0.0
      %870 = vmatpush1.xpose.msra.mxu0 0.0
      %871 = vmatprep.subr.mxu0 0.0
      %872 = vmatpush1.xpose.msra.mxu0 0.0
      %873 = vmatprep.subr.mxu0 0.0
      %874 = vmatpush1.xpose.msra.mxu0 0.0
      %875 = vmatprep.subr.mxu0 0.0
      %876 = vmatpush1.xpose.msra.mxu0 0.0
      %877 = vmatprep.subr.mxu0 0.0
      %878 = vmatpush1.xpose.msra.mxu0 0.0
      %879 = vmatprep.subr.mxu0 0.0
      %880 = vmatpush1.xpose.msra.mxu0 0.0
      %881 = vmatprep.subr.mxu0 0.0
      %882 = vmatpush1.xpose.msra.mxu0 0.0
      %883 = vmatprep.subr.mxu0 0.0
      %884 = vmatpush1.xpose.msra.mxu0 0.0
      %885 = vmatprep.subr.mxu0 0.0
      %886 = vmatpush1.xpose.msra.mxu0 0.0
      %887 = vmatprep.subr.mxu0 0.0
      %888 = vmatpush1.xpose.msra.mxu0 0.0
      %889 = vmatprep.subr.mxu0 0.0
      %890 = vmatpush1.xpose.msra.mxu0 0.0
      %891 = vmatprep.subr.mxu0 0.0
      %892 = vmatpush1.xpose.msra.mxu0 0.0
      %893 = vmatprep.subr.mxu0 0.0
      %894 = vmatpush1.xpose.msra.mxu0 0.0
      %895 = vmatprep.subr.mxu0 0.0
      %896 = vmatpush1.xpose.msra.mxu0 0.0
      %897 = vmatprep.subr.mxu0 0.0
      %898 = vmatpush1.xpose.msra.mxu0 0.0
      %899 = vmatprep.subr.mxu0 0.0
      %900 = vmatpush1.xpose.msra.mxu0 0.0
      %901 = vmatprep.mubr.f32.mxu0 0.0
      %902 = vmatmul.mubr.f32.gmra.mrb[0].mxu0 %v831
      %v903 = vpop.f32.mrb[0].mxu0
      %v904 = vadd.f32 0.0, %v903
      %v905 = vpop.f32.mrb[0].mxu0
      %906 = vdwg.mxu0
      %v907 = vsel %vm732, %v904, -inf
      %908 = vmax.xlane.f32.xlu0 %v907
      %v909 = vpop.xlane.xlu0 %908
      %v910 = vmax.f32 %v909, -1e+30
      %v911 = vsub.f32 %v904, %v910
      %v912 = vmul.f32 %v911, 1.442695
      %v913 = vpow.pop %v912
      %v914 = vsel %vm732, %v913, 0.0
      %915 = vadd.xlane.f32.xlu0 %v914
      %v916 = vpop.xlane.xlu0 %915
      %917 = vrot.lane.b32.xlu0 %v644, 88
      %v918 = vpop.permute.xlu0 %917
      %919 = vrot.lane.b32.xlu0 %v649, 88
      %v920 = vpop.permute.xlu0 %919
      %v924 = vsel %vm732, %v913, 0
      %926 = vmatprep.subr.mxu0 0.0
      %927 = vmatpush1.msra.mxu0 %v918
      %928 = vmatprep.subr.mxu0 0.0
      %929 = vmatpush1.msra.mxu0 %v920
      %930 = vmatprep.subr.mxu0 0.0
      %931 = vmatpush1.msra.mxu0 0.0
      %932 = vmatprep.subr.mxu0 0.0
      %933 = vmatpush1.msra.mxu0 0.0
      %934 = vmatprep.subr.mxu0 0.0
      %935 = vmatpush1.msra.mxu0 0.0
      %936 = vmatprep.subr.mxu0 0.0
      %937 = vmatpush1.msra.mxu0 0.0
      %938 = vmatprep.subr.mxu0 0.0
      %939 = vmatpush1.msra.mxu0 0.0
      %940 = vmatprep.subr.mxu0 0.0
      %941 = vmatpush1.msra.mxu0 0.0
      %942 = vmatprep.subr.mxu0 0.0
      %943 = vmatpush1.msra.mxu0 0.0
      %944 = vmatprep.subr.mxu0 0.0
      %945 = vmatpush1.msra.mxu0 0.0
      %946 = vmatprep.subr.mxu0 0.0
      %947 = vmatpush1.msra.mxu0 0.0
      %948 = vmatprep.subr.mxu0 0.0
      %949 = vmatpush1.msra.mxu0 0.0
      %950 = vmatprep.subr.mxu0 0.0
      %951 = vmatpush1.msra.mxu0 0.0
      %952 = vmatprep.subr.mxu0 0.0
      %953 = vmatpush1.msra.mxu0 0.0
      %954 = vmatprep.subr.mxu0 0.0
      %955 = vmatpush1.msra.mxu0 0.0
      %956 = vmatprep.subr.mxu0 0.0
      %957 = vmatpush1.msra.mxu0 0.0
      %958 = vmatprep.subr.mxu0 0.0
      %959 = vmatpush1.msra.mxu0 0.0
      %960 = vmatprep.subr.mxu0 0.0
      %961 = vmatpush1.msra.mxu0 0.0
      %962 = vmatprep.subr.mxu0 0.0
      %963 = vmatpush1.msra.mxu0 0.0
      %964 = vmatprep.subr.mxu0 0.0
      %965 = vmatpush1.msra.mxu0 0.0
      %966 = vmatprep.subr.mxu0 0.0
      %967 = vmatpush1.msra.mxu0 0.0
      %968 = vmatprep.subr.mxu0 0.0
      %969 = vmatpush1.msra.mxu0 0.0
      %970 = vmatprep.subr.mxu0 0.0
      %971 = vmatpush1.msra.mxu0 0.0
      %972 = vmatprep.subr.mxu0 0.0
      %973 = vmatpush1.msra.mxu0 0.0
      %974 = vmatprep.subr.mxu0 0.0
      %975 = vmatpush1.msra.mxu0 0.0
      %976 = vmatprep.subr.mxu0 0.0
      %977 = vmatpush1.msra.mxu0 0.0
      %978 = vmatprep.subr.mxu0 0.0
      %979 = vmatpush1.msra.mxu0 0.0
      %980 = vmatprep.subr.mxu0 0.0
      %981 = vmatpush1.msra.mxu0 0.0
      %982 = vmatprep.subr.mxu0 0.0
      %983 = vmatpush1.msra.mxu0 0.0
      %984 = vmatprep.subr.mxu0 0.0
      %985 = vmatpush1.msra.mxu0 0.0
      %986 = vmatprep.subr.mxu0 0.0
      %987 = vmatpush1.msra.mxu0 0.0
      %988 = vmatprep.subr.mxu0 0.0
      %989 = vmatpush1.msra.mxu0 0.0
      %990 = vmatprep.mubr.f32.mxu0 0.0
      %991 = vmatmul.mubr.f32.gmra.mrb[0].mxu0 %v924
      %v992 = vpop.f32.mrb[0].mxu0
      %v993 = vadd.f32 0.0, %v992
      %v994 = vpop.f32.mrb[0].mxu0
      %995 = vdwg.mxu0
      %v996 = vmax.f32 %v916, 1e-30
      %v997 = vrcp.pop %v996
      %v998 = vmul.f32 %v993, %v997
      %999 = vrot.lane.b32.xlu0 %v557, 112
      %v1000 = vpop.permute.xlu0 %999
      %1001 = vrot.lane.b32.xlu0 %v644, 112
      %v1002 = vpop.permute.xlu0 %1001
      %1003 = vrot.lane.b32.xlu0 %v649, 112
      %v1004 = vpop.permute.xlu0 %1003
      %v1005 = vsel %vm652, %v1000, 0
      %v1007 = vsel %vm652, %v1002, 0
      %v1009 = vsel %vm652, %v1004, 0
      %1011 = vmatprep.subr.mxu0 0.0
      %1012 = vmatpush1.xpose.msra.mxu0 %v1007
      %1013 = vmatprep.subr.mxu0 0.0
      %1014 = vmatpush1.xpose.msra.mxu0 %v1009
      %1015 = vmatprep.subr.mxu0 0.0
      %1016 = vmatpush1.xpose.msra.mxu0 0.0
      %1017 = vmatprep.subr.mxu0 0.0
      %1018 = vmatpush1.xpose.msra.mxu0 0.0
      %1019 = vmatprep.subr.mxu0 0.0
      %1020 = vmatpush1.xpose.msra.mxu0 0.0
      %1021 = vmatprep.subr.mxu0 0.0
      %1022 = vmatpush1.xpose.msra.mxu0 0.0
      %1023 = vmatprep.subr.mxu0 0.0
      %1024 = vmatpush1.xpose.msra.mxu0 0.0
      %1025 = vmatprep.subr.mxu0 0.0
      %1026 = vmatpush1.xpose.msra.mxu0 0.0
      %1027 = vmatprep.subr.mxu0 0.0
      %1028 = vmatpush1.xpose.msra.mxu0 0.0
      %1029 = vmatprep.subr.mxu0 0.0
      %1030 = vmatpush1.xpose.msra.mxu0 0.0
      %1031 = vmatprep.subr.mxu0 0.0
      %1032 = vmatpush1.xpose.msra.mxu0 0.0
      %1033 = vmatprep.subr.mxu0 0.0
      %1034 = vmatpush1.xpose.msra.mxu0 0.0
      %1035 = vmatprep.subr.mxu0 0.0
      %1036 = vmatpush1.xpose.msra.mxu0 0.0
      %1037 = vmatprep.subr.mxu0 0.0
      %1038 = vmatpush1.xpose.msra.mxu0 0.0
      %1039 = vmatprep.subr.mxu0 0.0
      %1040 = vmatpush1.xpose.msra.mxu0 0.0
      %1041 = vmatprep.subr.mxu0 0.0
      %1042 = vmatpush1.xpose.msra.mxu0 0.0
      %1043 = vmatprep.subr.mxu0 0.0
      %1044 = vmatpush1.xpose.msra.mxu0 0.0
      %1045 = vmatprep.subr.mxu0 0.0
      %1046 = vmatpush1.xpose.msra.mxu0 0.0
      %1047 = vmatprep.subr.mxu0 0.0
      %1048 = vmatpush1.xpose.msra.mxu0 0.0
      %1049 = vmatprep.subr.mxu0 0.0
      %1050 = vmatpush1.xpose.msra.mxu0 0.0
      %1051 = vmatprep.subr.mxu0 0.0
      %1052 = vmatpush1.xpose.msra.mxu0 0.0
      %1053 = vmatprep.subr.mxu0 0.0
      %1054 = vmatpush1.xpose.msra.mxu0 0.0
      %1055 = vmatprep.subr.mxu0 0.0
      %1056 = vmatpush1.xpose.msra.mxu0 0.0
      %1057 = vmatprep.subr.mxu0 0.0
      %1058 = vmatpush1.xpose.msra.mxu0 0.0
      %1059 = vmatprep.subr.mxu0 0.0
      %1060 = vmatpush1.xpose.msra.mxu0 0.0
      %1061 = vmatprep.subr.mxu0 0.0
      %1062 = vmatpush1.xpose.msra.mxu0 0.0
      %1063 = vmatprep.subr.mxu0 0.0
      %1064 = vmatpush1.xpose.msra.mxu0 0.0
      %1065 = vmatprep.subr.mxu0 0.0
      %1066 = vmatpush1.xpose.msra.mxu0 0.0
      %1067 = vmatprep.subr.mxu0 0.0
      %1068 = vmatpush1.xpose.msra.mxu0 0.0
      %1069 = vmatprep.subr.mxu0 0.0
      %1070 = vmatpush1.xpose.msra.mxu0 0.0
      %1071 = vmatprep.subr.mxu0 0.0
      %1072 = vmatpush1.xpose.msra.mxu0 0.0
      %1073 = vmatprep.subr.mxu0 0.0
      %1074 = vmatpush1.xpose.msra.mxu0 0.0
      %1075 = vmatprep.mubr.f32.mxu0 0.0
      %1076 = vmatmul.mubr.f32.gmra.mrb[0].mxu0 %v1005
      %v1077 = vpop.f32.mrb[0].mxu0
      %v1078 = vadd.f32 0.0, %v1077
      %v1079 = vpop.f32.mrb[0].mxu0
      %1080 = vdwg.mxu0
      %v1081 = vsel %vm732, %v1078, -inf
      %1082 = vmax.xlane.f32.xlu0 %v1081
      %v1083 = vpop.xlane.xlu0 %1082
      %v1084 = vmax.f32 %v1083, -1e+30
      %v1085 = vsub.f32 %v1078, %v1084
      %v1086 = vmul.f32 %v1085, 1.442695
      %v1087 = vpow.pop %v1086
      %v1088 = vsel %vm732, %v1087, 0.0
      %1089 = vadd.xlane.f32.xlu0 %v1088
      %v1090 = vpop.xlane.xlu0 %1089
      %1091 = vrot.lane.b32.xlu0 %v644, 80
      %v1092 = vpop.permute.xlu0 %1091
      %1093 = vrot.lane.b32.xlu0 %v649, 80
      %v1094 = vpop.permute.xlu0 %1093
      %v1098 = vsel %vm732, %v1087, 0
      %1100 = vmatprep.subr.mxu0 0.0
      %1101 = vmatpush1.msra.mxu0 %v1092
      %1102 = vmatprep.subr.mxu0 0.0
      %1103 = vmatpush1.msra.mxu0 %v1094
      %1104 = vmatprep.subr.mxu0 0.0
      %1105 = vmatpush1.msra.mxu0 0.0
      %1106 = vmatprep.subr.mxu0 0.0
      %1107 = vmatpush1.msra.mxu0 0.0
      %1108 = vmatprep.subr.mxu0 0.0
      %1109 = vmatpush1.msra.mxu0 0.0
      %1110 = vmatprep.subr.mxu0 0.0
      %1111 = vmatpush1.msra.mxu0 0.0
      %1112 = vmatprep.subr.mxu0 0.0
      %1113 = vmatpush1.msra.mxu0 0.0
      %1114 = vmatprep.subr.mxu0 0.0
      %1115 = vmatpush1.msra.mxu0 0.0
      %1116 = vmatprep.subr.mxu0 0.0
      %1117 = vmatpush1.msra.mxu0 0.0
      %1118 = vmatprep.subr.mxu0 0.0
      %1119 = vmatpush1.msra.mxu0 0.0
      %1120 = vmatprep.subr.mxu0 0.0
      %1121 = vmatpush1.msra.mxu0 0.0
      %1122 = vmatprep.subr.mxu0 0.0
      %1123 = vmatpush1.msra.mxu0 0.0
      %1124 = vmatprep.subr.mxu0 0.0
      %1125 = vmatpush1.msra.mxu0 0.0
      %1126 = vmatprep.subr.mxu0 0.0
      %1127 = vmatpush1.msra.mxu0 0.0
      %1128 = vmatprep.subr.mxu0 0.0
      %1129 = vmatpush1.msra.mxu0 0.0
      %1130 = vmatprep.subr.mxu0 0.0
      %1131 = vmatpush1.msra.mxu0 0.0
      %1132 = vmatprep.subr.mxu0 0.0
      %1133 = vmatpush1.msra.mxu0 0.0
      %1134 = vmatprep.subr.mxu0 0.0
      %1135 = vmatpush1.msra.mxu0 0.0
      %1136 = vmatprep.subr.mxu0 0.0
      %1137 = vmatpush1.msra.mxu0 0.0
      %1138 = vmatprep.subr.mxu0 0.0
      %1139 = vmatpush1.msra.mxu0 0.0
      %1140 = vmatprep.subr.mxu0 0.0
      %1141 = vmatpush1.msra.mxu0 0.0
      %1142 = vmatprep.subr.mxu0 0.0
      %1143 = vmatpush1.msra.mxu0 0.0
      %1144 = vmatprep.subr.mxu0 0.0
      %1145 = vmatpush1.msra.mxu0 0.0
      %1146 = vmatprep.subr.mxu0 0.0
      %1147 = vmatpush1.msra.mxu0 0.0
      %1148 = vmatprep.subr.mxu0 0.0
      %1149 = vmatpush1.msra.mxu0 0.0
      %1150 = vmatprep.subr.mxu0 0.0
      %1151 = vmatpush1.msra.mxu0 0.0
      %1152 = vmatprep.subr.mxu0 0.0
      %1153 = vmatpush1.msra.mxu0 0.0
      %1154 = vmatprep.subr.mxu0 0.0
      %1155 = vmatpush1.msra.mxu0 0.0
      %1156 = vmatprep.subr.mxu0 0.0
      %1157 = vmatpush1.msra.mxu0 0.0
      %1158 = vmatprep.subr.mxu0 0.0
      %1159 = vmatpush1.msra.mxu0 0.0
      %1160 = vmatprep.subr.mxu0 0.0
      %1161 = vmatpush1.msra.mxu0 0.0
      %1162 = vmatprep.subr.mxu0 0.0
      %1163 = vmatpush1.msra.mxu0 0.0
      %1164 = vmatprep.mubr.f32.mxu0 0.0
      %1165 = vmatmul.mubr.f32.gmra.mrb[0].mxu0 %v1098
      %v1166 = vpop.f32.mrb[0].mxu0
      %v1167 = vadd.f32 0.0, %v1166
      %v1168 = vpop.f32.mrb[0].mxu0
      %1169 = vdwg.mxu0
      %v1170 = vmax.f32 %v1090, 1e-30
      %v1171 = vrcp.pop %v1170
      %v1172 = vmul.f32 %v1167, %v1171
      %1173 = vrot.lane.b32.xlu0 %v557, 104
      %v1174 = vpop.permute.xlu0 %1173
      %1175 = vrot.lane.b32.xlu0 %v644, 104
      %v1176 = vpop.permute.xlu0 %1175
      %1177 = vrot.lane.b32.xlu0 %v649, 104
      %v1178 = vpop.permute.xlu0 %1177
      %v1179 = vsel %vm652, %v1174, 0
      %v1181 = vsel %vm652, %v1176, 0
      %v1183 = vsel %vm652, %v1178, 0
      %1185 = vmatprep.subr.mxu0 0.0
      %1186 = vmatpush1.xpose.msra.mxu0 %v1181
      %1187 = vmatprep.subr.mxu0 0.0
      %1188 = vmatpush1.xpose.msra.mxu0 %v1183
      %1189 = vmatprep.subr.mxu0 0.0
      %1190 = vmatpush1.xpose.msra.mxu0 0.0
      %1191 = vmatprep.subr.mxu0 0.0
      %1192 = vmatpush1.xpose.msra.mxu0 0.0
      %1193 = vmatprep.subr.mxu0 0.0
      %1194 = vmatpush1.xpose.msra.mxu0 0.0
      %1195 = vmatprep.subr.mxu0 0.0
      %1196 = vmatpush1.xpose.msra.mxu0 0.0
      %1197 = vmatprep.subr.mxu0 0.0
      %1198 = vmatpush1.xpose.msra.mxu0 0.0
      %1199 = vmatprep.subr.mxu0 0.0
      %1200 = vmatpush1.xpose.msra.mxu0 0.0
      %1201 = vmatprep.subr.mxu0 0.0
      %1202 = vmatpush1.xpose.msra.mxu0 0.0
      %1203 = vmatprep.subr.mxu0 0.0
      %1204 = vmatpush1.xpose.msra.mxu0 0.0
      %1205 = vmatprep.subr.mxu0 0.0
      %1206 = vmatpush1.xpose.msra.mxu0 0.0
      %1207 = vmatprep.subr.mxu0 0.0
      %1208 = vmatpush1.xpose.msra.mxu0 0.0
      %1209 = vmatprep.subr.mxu0 0.0
      %1210 = vmatpush1.xpose.msra.mxu0 0.0
      %1211 = vmatprep.subr.mxu0 0.0
      %1212 = vmatpush1.xpose.msra.mxu0 0.0
      %1213 = vmatprep.subr.mxu0 0.0
      %1214 = vmatpush1.xpose.msra.mxu0 0.0
      %1215 = vmatprep.subr.mxu0 0.0
      %1216 = vmatpush1.xpose.msra.mxu0 0.0
      %1217 = vmatprep.subr.mxu0 0.0
      %1218 = vmatpush1.xpose.msra.mxu0 0.0
      %1219 = vmatprep.subr.mxu0 0.0
      %1220 = vmatpush1.xpose.msra.mxu0 0.0
      %1221 = vmatprep.subr.mxu0 0.0
      %1222 = vmatpush1.xpose.msra.mxu0 0.0
      %1223 = vmatprep.subr.mxu0 0.0
      %1224 = vmatpush1.xpose.msra.mxu0 0.0
      %1225 = vmatprep.subr.mxu0 0.0
      %1226 = vmatpush1.xpose.msra.mxu0 0.0
      %1227 = vmatprep.subr.mxu0 0.0
      %1228 = vmatpush1.xpose.msra.mxu0 0.0
      %1229 = vmatprep.subr.mxu0 0.0
      %1230 = vmatpush1.xpose.msra.mxu0 0.0
      %1231 = vmatprep.subr.mxu0 0.0
      %1232 = vmatpush1.xpose.msra.mxu0 0.0
      %1233 = vmatprep.subr.mxu0 0.0
      %1234 = vmatpush1.xpose.msra.mxu0 0.0
      %1235 = vmatprep.subr.mxu0 0.0
      %1236 = vmatpush1.xpose.msra.mxu0 0.0
      %1237 = vmatprep.subr.mxu0 0.0
      %1238 = vmatpush1.xpose.msra.mxu0 0.0
      %1239 = vmatprep.subr.mxu0 0.0
      %1240 = vmatpush1.xpose.msra.mxu0 0.0
      %1241 = vmatprep.subr.mxu0 0.0
      %1242 = vmatpush1.xpose.msra.mxu0 0.0
      %1243 = vmatprep.subr.mxu0 0.0
      %1244 = vmatpush1.xpose.msra.mxu0 0.0
      %1245 = vmatprep.subr.mxu0 0.0
      %1246 = vmatpush1.xpose.msra.mxu0 0.0
      %1247 = vmatprep.subr.mxu0 0.0
      %1248 = vmatpush1.xpose.msra.mxu0 0.0
      %1249 = vmatprep.mubr.f32.mxu0 0.0
      %1250 = vmatmul.mubr.f32.gmra.mrb[0].mxu0 %v1179
      %v1251 = vpop.f32.mrb[0].mxu0
      %v1252 = vadd.f32 0.0, %v1251
      %v1253 = vpop.f32.mrb[0].mxu0
      %1254 = vdwg.mxu0
      %v1255 = vsel %vm732, %v1252, -inf
      %1256 = vmax.xlane.f32.xlu0 %v1255
      %v1257 = vpop.xlane.xlu0 %1256
      %v1258 = vmax.f32 %v1257, -1e+30
      %v1259 = vsub.f32 %v1252, %v1258
      %v1260 = vmul.f32 %v1259, 1.442695
      %v1261 = vpow.pop %v1260
      %v1262 = vsel %vm732, %v1261, 0.0
      %1263 = vadd.xlane.f32.xlu0 %v1262
      %v1264 = vpop.xlane.xlu0 %1263
      %1265 = vrot.lane.b32.xlu0 %v644, 72
      %v1266 = vpop.permute.xlu0 %1265
      %1267 = vrot.lane.b32.xlu0 %v649, 72
      %v1268 = vpop.permute.xlu0 %1267
      %v1272 = vsel %vm732, %v1261, 0
      %1274 = vmatprep.subr.mxu0 0.0
      %1275 = vmatpush1.msra.mxu0 %v1266
      %1276 = vmatprep.subr.mxu0 0.0
      %1277 = vmatpush1.msra.mxu0 %v1268
      %1278 = vmatprep.subr.mxu0 0.0
      %1279 = vmatpush1.msra.mxu0 0.0
      %1280 = vmatprep.subr.mxu0 0.0
      %1281 = vmatpush1.msra.mxu0 0.0
      %1282 = vmatprep.subr.mxu0 0.0
      %1283 = vmatpush1.msra.mxu0 0.0
      %1284 = vmatprep.subr.mxu0 0.0
      %1285 = vmatpush1.msra.mxu0 0.0
      %1286 = vmatprep.subr.mxu0 0.0
      %1287 = vmatpush1.msra.mxu0 0.0
      %1288 = vmatprep.subr.mxu0 0.0
      %1289 = vmatpush1.msra.mxu0 0.0
      %1290 = vmatprep.subr.mxu0 0.0
      %1291 = vmatpush1.msra.mxu0 0.0
      %1292 = vmatprep.subr.mxu0 0.0
      %1293 = vmatpush1.msra.mxu0 0.0
      %1294 = vmatprep.subr.mxu0 0.0
      %1295 = vmatpush1.msra.mxu0 0.0
      %1296 = vmatprep.subr.mxu0 0.0
      %1297 = vmatpush1.msra.mxu0 0.0
      %1298 = vmatprep.subr.mxu0 0.0
      %1299 = vmatpush1.msra.mxu0 0.0
      %1300 = vmatprep.subr.mxu0 0.0
      %1301 = vmatpush1.msra.mxu0 0.0
      %1302 = vmatprep.subr.mxu0 0.0
      %1303 = vmatpush1.msra.mxu0 0.0
      %1304 = vmatprep.subr.mxu0 0.0
      %1305 = vmatpush1.msra.mxu0 0.0
      %1306 = vmatprep.subr.mxu0 0.0
      %1307 = vmatpush1.msra.mxu0 0.0
      %1308 = vmatprep.subr.mxu0 0.0
      %1309 = vmatpush1.msra.mxu0 0.0
      %1310 = vmatprep.subr.mxu0 0.0
      %1311 = vmatpush1.msra.mxu0 0.0
      %1312 = vmatprep.subr.mxu0 0.0
      %1313 = vmatpush1.msra.mxu0 0.0
      %1314 = vmatprep.subr.mxu0 0.0
      %1315 = vmatpush1.msra.mxu0 0.0
      %1316 = vmatprep.subr.mxu0 0.0
      %1317 = vmatpush1.msra.mxu0 0.0
      %1318 = vmatprep.subr.mxu0 0.0
      %1319 = vmatpush1.msra.mxu0 0.0
      %1320 = vmatprep.subr.mxu0 0.0
      %1321 = vmatpush1.msra.mxu0 0.0
      %1322 = vmatprep.subr.mxu0 0.0
      %1323 = vmatpush1.msra.mxu0 0.0
      %1324 = vmatprep.subr.mxu0 0.0
      %1325 = vmatpush1.msra.mxu0 0.0
      %1326 = vmatprep.subr.mxu0 0.0
      %1327 = vmatpush1.msra.mxu0 0.0
      %1328 = vmatprep.subr.mxu0 0.0
      %1329 = vmatpush1.msra.mxu0 0.0
      %1330 = vmatprep.subr.mxu0 0.0
      %1331 = vmatpush1.msra.mxu0 0.0
      %1332 = vmatprep.subr.mxu0 0.0
      %1333 = vmatpush1.msra.mxu0 0.0
      %1334 = vmatprep.subr.mxu0 0.0
      %1335 = vmatpush1.msra.mxu0 0.0
      %1336 = vmatprep.subr.mxu0 0.0
      %1337 = vmatpush1.msra.mxu0 0.0
      %1338 = vmatprep.mubr.f32.mxu0 0.0
      %1339 = vmatmul.mubr.f32.gmra.mrb[0].mxu0 %v1272
      %v1340 = vpop.f32.mrb[0].mxu0
      %v1341 = vadd.f32 0.0, %v1340
      %v1342 = vpop.f32.mrb[0].mxu0
      %1343 = vdwg.mxu0
      %v1344 = vmax.f32 %v1264, 1e-30
      %v1345 = vrcp.pop %v1344
      %v1346 = vmul.f32 %v1341, %v1345
      %1348 = vrot.lane.b32.xlu0 %v998, 8
      %v1349 = vpop.permute.xlu0 %1348
      %1352 = vrot.lane.b32.xlu0 %v1172, 16
      %v1353 = vpop.permute.xlu0 %1352
      %1356 = vrot.lane.b32.xlu0 %v1346, 24
      %v1357 = vpop.permute.xlu0 %1356
      %v1359 = vsel %vm652, %v824, %v1349
      %v1360 = vsel %vm732, %v1359, %v1353
      %vm1361 = vcmask 195584
      %v1362 = vsel %vm1361, %v1360, %v1357
      %v1363 = vld [vmem:[%s8] sm:$0xff]
      %v1364 = vld [vmem:[%s8 + $0x8] sm:$0xff]
      %v1365 = vld [vmem:[%s8 + $0x10] sm:$0xff]
      %v1366 = vld [vmem:[%s8 + $0x18] sm:$0xff]
      %v1367 = vld [vmem:[%s9] sm:$0x1]
      %v1369 = vlaneseq
      %v1370 = vshrl.u32 %v1369, 7
      %v1371 = vsub.s32 0, %v1370
      %v1372 = vrot.slane %v1367, %v1371
      %v1375 = vsel %vm486, %v1362, 0
      %1377 = vmatprep.subr.mxu0 0.0
      %1378 = vmatpush1.msra.mxu0 %v1363
      %1379 = vmatprep.subr.mxu0 0.0
      %1380 = vmatpush1.msra.mxu0 %v1364
      %1381 = vmatprep.subr.mxu0 0.0
      %1382 = vmatpush1.msra.mxu0 %v1365
      %1383 = vmatprep.subr.mxu0 0.0
      %1384 = vmatpush1.msra.mxu0 %v1366
      %1385 = vmatprep.subr.mxu0 0.0
      %1386 = vmatpush1.msra.mxu0 0.0
      %1387 = vmatprep.subr.mxu0 0.0
      %1388 = vmatpush1.msra.mxu0 0.0
      %1389 = vmatprep.subr.mxu0 0.0
      %1390 = vmatpush1.msra.mxu0 0.0
      %1391 = vmatprep.subr.mxu0 0.0
      %1392 = vmatpush1.msra.mxu0 0.0
      %1393 = vmatprep.subr.mxu0 0.0
      %1394 = vmatpush1.msra.mxu0 0.0
      %1395 = vmatprep.subr.mxu0 0.0
      %1396 = vmatpush1.msra.mxu0 0.0
      %1397 = vmatprep.subr.mxu0 0.0
      %1398 = vmatpush1.msra.mxu0 0.0
      %1399 = vmatprep.subr.mxu0 0.0
      %1400 = vmatpush1.msra.mxu0 0.0
      %1401 = vmatprep.subr.mxu0 0.0
      %1402 = vmatpush1.msra.mxu0 0.0
      %1403 = vmatprep.subr.mxu0 0.0
      %1404 = vmatpush1.msra.mxu0 0.0
      %1405 = vmatprep.subr.mxu0 0.0
      %1406 = vmatpush1.msra.mxu0 0.0
      %1407 = vmatprep.subr.mxu0 0.0
      %1408 = vmatpush1.msra.mxu0 0.0
      %1409 = vmatprep.subr.mxu0 0.0
      %1410 = vmatpush1.msra.mxu0 0.0
      %1411 = vmatprep.subr.mxu0 0.0
      %1412 = vmatpush1.msra.mxu0 0.0
      %1413 = vmatprep.subr.mxu0 0.0
      %1414 = vmatpush1.msra.mxu0 0.0
      %1415 = vmatprep.subr.mxu0 0.0
      %1416 = vmatpush1.msra.mxu0 0.0
      %1417 = vmatprep.subr.mxu0 0.0
      %1418 = vmatpush1.msra.mxu0 0.0
      %1419 = vmatprep.subr.mxu0 0.0
      %1420 = vmatpush1.msra.mxu0 0.0
      %1421 = vmatprep.subr.mxu0 0.0
      %1422 = vmatpush1.msra.mxu0 0.0
      %1423 = vmatprep.subr.mxu0 0.0
      %1424 = vmatpush1.msra.mxu0 0.0
      %1425 = vmatprep.subr.mxu0 0.0
      %1426 = vmatpush1.msra.mxu0 0.0
      %1427 = vmatprep.subr.mxu0 0.0
      %1428 = vmatpush1.msra.mxu0 0.0
      %1429 = vmatprep.subr.mxu0 0.0
      %1430 = vmatpush1.msra.mxu0 0.0
      %1431 = vmatprep.subr.mxu0 0.0
      %1432 = vmatpush1.msra.mxu0 0.0
      %1433 = vmatprep.subr.mxu0 0.0
      %1434 = vmatpush1.msra.mxu0 0.0
      %1435 = vmatprep.subr.mxu0 0.0
      %1436 = vmatpush1.msra.mxu0 0.0
      %1437 = vmatprep.subr.mxu0 0.0
      %1438 = vmatpush1.msra.mxu0 0.0
      %1439 = vmatprep.subr.mxu0 0.0
      %1440 = vmatpush1.msra.mxu0 0.0
      %1441 = vmatprep.mubr.f32.mxu0 0.0
      %1442 = vmatmul.mubr.f32.gmra.mrb[0].mxu0 %v1375
      %v1443 = vpop.f32.mrb[0].mxu0
      %v1444 = vadd.f32 %v1372, %v1443
      %v1445 = vpop.f32.mrb[0].mxu0
      %1446 = vdwg.mxu0
      %v1447 = vadd.f32 %v466, %v1444
      %v1448 = vsel %vm486, %v1447, 0.0
      %1449 = vadd.xlane.f32.xlu0 %v1448
      %v1450 = vpop.xlane.xlu0 %1449
      %v1451 = vrcp.pop 32.0
      %v1452 = vmul.f32 %v1450, %v1451
      %v1453 = vsub.f32 %v1447, %v1452
      %v1454 = vmul.f32 %v1453, %v1453
      %v1455 = vsel %vm486, %v1454, 0.0
      %1456 = vadd.xlane.f32.xlu0 %v1455
      %v1457 = vpop.xlane.xlu0 %1456
      %v1458 = vmul.f32 %v1457, %v1451
      %v1459 = vadd.f32 %v1458, 1e-05
      %v1460 = vrsqrt.pop %v1459
      %v1461 = vmul.f32 %v1453, %v1460
      %v1462 = vld [vmem:[%s10] sm:$0x1]
      %v1464 = vlaneseq
      %v1465 = vshrl.u32 %v1464, 7
      %v1466 = vsub.s32 0, %v1465
      %v1467 = vrot.slane %v1462, %v1466
      %v1469 = vmul.f32 %v1461, %v1467
      %v1470 = vld [vmem:[%s11] sm:$0x1]
      %v1472 = vlaneseq
      %v1473 = vshrl.u32 %v1472, 7
      %v1474 = vsub.s32 0, %v1473
      %v1475 = vrot.slane %v1470, %v1474
      %v1477 = vadd.f32 %v1469, %v1475
      %1478 = vst.msk [vmem:[%s465] sm:$0xff] %vm486, %v1477
      %p1479 = scmp.lt.s32.totalorder %s23, 1
      %s1480 = scalar_select %p1479, %s23, 1
      %s1481 = smul.addr %s1480, 8
      %s1482 = scalar_lea.vmem %s12, %s1481
      // Predicated region
      $region69: #{transformer_decoder_layer.4} parent=67 // pred_check
        %p1483 = pneg %p313
      $region70: #{transformer_decoder_layer.4} parent=67 // pred_check_branch
        %1485 = sbr.rel (%p1483) target = $region72
      $region71: #{transformer_decoder_layer.4} parent=67 // pred_region
        _
      $region72: #{transformer_decoder_layer.4} parent=67 // pred_fallthru
        _
    $region68: #{transformer_decoder_layer.4} parent=5 // pred_fallthru
      _
    %p1486 = scmp.le.s32.totalorder 2, %s18
    // Predicated region
    $region73: #{transformer_decoder_layer.4} parent=5 // pred_check
      %p1487 = pneg %p1486
    $region74: #{transformer_decoder_layer.4} parent=5 // pred_check_branch
      %1489 = sbr.rel (%p1487) target = $region76
    $region75: #{transformer_decoder_layer.4} parent=5 // pred_region
      %s1490 = ssub.s32 %s18, 2
      // Predicated region
      $region77: #{transformer_decoder_layer.4} parent=75 // pred_check
        %p1491 = pneg %p319
      $region78: #{transformer_decoder_layer.4} parent=75 // pred_check_branch
        %1493 = sbr.rel (%p1491) target = $region80
      $region79: #{transformer_decoder_layer.4} parent=75 // pred_region
        %p1494 = scmp.lt.s32.totalorder %s24, 1
        %s1495 = scalar_select %p1494, %s24, 1
        %s1496 = smul.addr %s1495, 8
        %s1497 = scalar_lea.vmem %s12, %s1496
      $region80: #{transformer_decoder_layer.4} parent=75 // pred_fallthru
        _
    $region76: #{transformer_decoder_layer.4} parent=5 // pred_fallthru
      _
  $region6: #{transformer_decoder_layer.4} parent=0 // loop_footer
    %s22 = sadd.s32 1, %s18
  $region7: #{transformer_decoder_layer.4} parent=0 // loop_footer_branch
    %17 = sbr.rel target = $region3
  $region8: #{transformer_decoder_layer.4} parent=0 // loop_exit
    _

</llo_original>
